<compile_context>
chip_gen: v6e
topology: v6e:2x2x1
jax: 0.10.0
libtpu: 0.0.40
codegen_flags: <defaults>
</compile_context>

<pallas_src>
import functools

import jax
import jax.numpy as jnp
from jax.experimental import pallas as pl
from jax.experimental.pallas import tpu as pltpu

BN_EPS = 1e-5


def _round_up(x, m):
    return (x + m - 1) // m * m


# ----------------------------------------------------------------------------
# Pallas kernel, pass 1: per row-tile
#   y = x_tile (TM, KC) @ w (KC, Cout)   (bf16 in, f32 acc)
#   also emit per-tile column sums and sums-of-squares for BatchNorm stats.
# ----------------------------------------------------------------------------
def _matmul_stats_kernel(x_ref, w_ref, y_ref, sum_ref, sq_ref):
    y = jnp.dot(x_ref[...], w_ref[...], preferred_element_type=jnp.float32)
    y_ref[...] = y
    s = jnp.sum(y, axis=0, keepdims=True)          # (1, Cout_pad)
    q = jnp.sum(y * y, axis=0, keepdims=True)      # (1, Cout_pad)
    sum_ref[0] = jnp.broadcast_to(s, sum_ref.shape[1:])
    sq_ref[0] = jnp.broadcast_to(q, sq_ref.shape[1:])


# ----------------------------------------------------------------------------
# Pallas kernel, pass 2: out = relu(y * scale + bias)   (per row-tile)
# ----------------------------------------------------------------------------
def _scale_bias_relu_kernel(y_ref, scale_ref, bias_ref, o_ref):
    o_ref[...] = jnp.maximum(y_ref[...] * scale_ref[...] + bias_ref[...], 0.0)


def matmul_bn_relu(x, w, gamma, beta, *, tile_rows=512):
    """ReLU(BN_batchstats(x @ w)).

    x: (N, KC) float; w: (KC, Cout); gamma/beta: (Cout,).  Returns (N, Cout) f32.
    """
    N, KC = x.shape
    Cout = w.shape[-1]

    KC_pad = _round_up(KC, 128)
    Cout_pad = _round_up(Cout, 128)
    TM = min(tile_rows, _round_up(N, 8))
    N_pad = _round_up(N, TM)
    nt = N_pad // TM

    x_p = jnp.pad(x.astype(jnp.bfloat16), ((0, N_pad - N), (0, KC_pad - KC)))
    w_p = jnp.pad(w.astype(jnp.bfloat16), ((0, KC_pad - KC), (0, Cout_pad - Cout)))

    flops = 2 * N_pad * KC_pad * Cout_pad
    bytes_acc = x_p.size * 2 + w_p.size * 2 + N_pad * Cout_pad * 4

    y, sums, sqs = pl.pallas_call(
        _matmul_stats_kernel,
        out_shape=(
            jax.ShapeDtypeStruct((N_pad, Cout_pad), jnp.float32),
            jax.ShapeDtypeStruct((nt, 8, Cout_pad), jnp.float32),
            jax.ShapeDtypeStruct((nt, 8, Cout_pad), jnp.float32),
        ),
        grid_spec=pltpu.PrefetchScalarGridSpec(
            num_scalar_prefetch=0,
            grid=(nt,),
            in_specs=[
                pl.BlockSpec((TM, KC_pad), lambda i: (i, 0)),
                pl.BlockSpec((KC_pad, Cout_pad), lambda i: (0, 0)),
            ],
            out_specs=[
                pl.BlockSpec((TM, Cout_pad), lambda i: (i, 0)),
                pl.BlockSpec((1, 8, Cout_pad), lambda i: (i, 0, 0)),
                pl.BlockSpec((1, 8, Cout_pad), lambda i: (i, 0, 0)),
            ],
        ),
        compiler_params=pltpu.CompilerParams(
            dimension_semantics=("parallel",)
        ),
        cost_estimate=pl.CostEstimate(
            flops=flops, transcendentals=0, bytes_accessed=bytes_acc
        ),
    )(x_p, w_p)

    # Tiny cross-tile reduction for BatchNorm batch statistics (biased var),
    # done in plain JAX (Cout_pad-sized vectors).  Padded rows contribute
    # zeros so dividing by the true N is exact.
    col_sum = jnp.sum(sums[:, 0, :], axis=0)
    col_sq = jnp.sum(sqs[:, 0, :], axis=0)
    mean = col_sum / N
    var = jnp.maximum(col_sq / N - mean * mean, 0.0)

    g_pad = jnp.pad(gamma.astype(jnp.float32), (0, Cout_pad - Cout))
    b_pad = jnp.pad(beta.astype(jnp.float32), (0, Cout_pad - Cout))
    scale = g_pad * jax.lax.rsqrt(var + BN_EPS)
    bias = b_pad - mean * scale

    out = pl.pallas_call(
        _scale_bias_relu_kernel,
        out_shape=jax.ShapeDtypeStruct((N_pad, Cout_pad), jnp.float32),
        grid_spec=pltpu.PrefetchScalarGridSpec(
            num_scalar_prefetch=0,
            grid=(nt,),
            in_specs=[
                pl.BlockSpec((TM, Cout_pad), lambda i: (i, 0)),
                pl.BlockSpec((1, Cout_pad), lambda i: (0, 0)),
                pl.BlockSpec((1, Cout_pad), lambda i: (0, 0)),
            ],
            out_specs=pl.BlockSpec((TM, Cout_pad), lambda i: (i, 0)),
        ),
        compiler_params=pltpu.CompilerParams(
            dimension_semantics=("parallel",)
        ),
    )(y, scale.reshape(1, Cout_pad), bias.reshape(1, Cout_pad))

    return out[:N, :Cout]


# ----------------------------------------------------------------------------
# Sparse (Minkowski-style) 3x3x3 conv glue: O(N log N) neighbor index table
# via sorted coordinate keys + searchsorted; row-gather builds (N, 27*Cin).
# ----------------------------------------------------------------------------
_OFFSETS_3D = jnp.asarray(
    [[dx, dy, dz] for dx in (-1, 0, 1) for dy in (-1, 0, 1) for dz in (-1, 0, 1)],
    dtype=jnp.int32,
)  # (27, 3)


def build_neighbor_table(coords):
    """coords: (N, 4) int32 unique (batch, x, y, z) -> (idx (27,N), found (27,N))."""
    c = coords.astype(jnp.int32)
    # stride = max+2 so that offset +/-1 never aliases another real coordinate.
    # TODO(synk): int32 keys assume coordinate extents small enough not to overflow.
    strides = jnp.max(c, axis=0) + 2  # (4,)

    def key_of(q):
        return ((q[..., 0] * strides[1] + q[..., 1]) * strides[2]
                + q[..., 2]) * strides[3] + q[..., 3]

    key = key_of(c)                     # (N,)
    order = jnp.argsort(key)
    skey = key[order]

    off4 = jnp.concatenate([jnp.zeros((27, 1), jnp.int32), _OFFSETS_3D], axis=1)
    tgt = c[None, :, :] + off4[:, None, :]          # (27, N, 4)
    tkey = key_of(tgt)                              # (27, N)
    pos = jnp.clip(jnp.searchsorted(skey, tkey), 0, key.shape[0] - 1)
    found = skey[pos] == tkey
    idx = order[pos]                                # valid index even when not found
    return idx, found


def mink_conv_bn_relu(feats, nbr_idx, nbr_valid_f, w_stack, gamma, beta):
    """feats: (N, Cin); nbr_idx/nbr_valid_f: (27, N); w_stack: (27, Cin, Cout)."""
    K, Cin, Cout = w_stack.shape
    N = feats.shape[0]
    gathered = feats.astype(jnp.float32)[nbr_idx] * nbr_valid_f[..., None]  # (K,N,Cin)
    x = jnp.transpose(gathered, (1, 0, 2)).reshape(N, K * Cin)              # (N, K*Cin)
    return matmul_bn_relu(x, w_stack.reshape(K * Cin, Cout), gamma, beta)


# ----------------------------------------------------------------------------
# Dense Conv2d 3x3 pad=1 (no bias) + BN2d + ReLU glue: channels-last im2col
# built in one pass, feeding the same fused Pallas kernel.
# ----------------------------------------------------------------------------
def conv2d_bn_relu(x_nchw, w_oihw, gamma, beta):
    B, Cin, H, W = x_nchw.shape
    Cout = w_oihw.shape[0]
    xc = jnp.transpose(x_nchw, (0, 2, 3, 1))                    # (B, H, W, Cin)
    xp = jnp.pad(xc, ((0, 0), (1, 1), (1, 1), (0, 0)))
    cols = [xp[:, dh:dh + H, dw:dw + W, :] for dh in range(3) for dw in range(3)]
    x_im2col = jnp.concatenate(cols, axis=-1).reshape(B * H * W, 9 * Cin)
    w_flat = jnp.transpose(w_oihw, (2, 3, 1, 0)).reshape(9 * Cin, Cout)
    out = matmul_bn_relu(x_im2col, w_flat, gamma, beta)          # (B*H*W, Cout)
    return jnp.transpose(out.reshape(B, H, W, Cout), (0, 3, 1, 2))


# ----------------------------------------------------------------------------
# Linking.forward
# ----------------------------------------------------------------------------
def linking_forward(params, feat_2d_all, feat_3d_F, feat_3d_C, links,
                    *, view_num, fea2d_dim):
    nbr_idx, nbr_found = build_neighbor_table(feat_3d_C)
    nbr_valid_f = nbr_found.astype(jnp.float32)

    # feat_3d_for_2d = view_sep(feat_3d).F
    feat_3d_for_2d = mink_conv_bn_relu(
        feat_3d_F, nbr_idx, nbr_valid_f,
        params["view_sep"]["w"], params["view_sep"]["g"], params["view_sep"]["b"],
    )  # (N, fea2d_dim)

    V_B, C, H, W = feat_2d_all.shape
    B = V_B // view_num
    feat_2d_views = feat_2d_all.reshape(view_num, B, C, H, W).transpose(0, 1, 3, 4, 2)

    # TODO(synk): get_coords_map(init_3d_data, feat_3d) assumed identity
    # (init_3d_data shares feat_3d's coordinate order), so current_links == links.
    current_links = links  # (N, 4, V) int32

    f_parts, scat_views = [], []
    for v in range(view_num):
        b_idx = current_links[:, 0, v]
        h_idx = current_links[:, 1, v]
        w_idx = current_links[:, 2, v]
        valid = current_links[:, 3, v].astype(jnp.float32)

        f = feat_2d_views[v][b_idx, h_idx, w_idx] * valid[:, None]   # (N, C)
        f_parts.append(f)

        # Matches PyTorch: valid flag is NOT applied to the 3D->2D scatter;
        # .set is last-write-wins on duplicate pixels (like index_put).
        scat = jnp.zeros((B, H, W, C), jnp.float32).at[b_idx, h_idx, w_idx].set(
            feat_3d_for_2d)
        scat_views.append(scat)

    feat_2d_to_3d = jnp.concatenate(f_parts, axis=1)                 # (N, V*fea2d_dim)
    feat_3d_to_2d = (
        jnp.stack(scat_views, axis=0)                                # (V, B, H, W, C)
        .transpose(0, 1, 4, 2, 3)                                    # (V, B, C, H, W)
        .reshape(V_B, C, H, W)
    )

    # fused_2d = fuseTo2d(cat([feat_2d_all, feat_3d_to_2d], dim=1))
    fused_2d = conv2d_bn_relu(
        jnp.concatenate([feat_2d_all, feat_3d_to_2d], axis=1),
        params["fuseTo2d"]["w"], params["fuseTo2d"]["g"], params["fuseTo2d"]["b"],
    )

    # feat_2d_to_3d = view_fusion(SparseTensor(feat_2d_to_3d, feat_3d.C))
    t = mink_conv_bn_relu(
        feat_2d_to_3d, nbr_idx, nbr_valid_f,
        params["view_fusion0"]["w"], params["view_fusion0"]["g"], params["view_fusion0"]["b"],
    )
    t = mink_conv_bn_relu(
        t, nbr_idx, nbr_valid_f,
        params["view_fusion1"]["w"], params["view_fusion1"]["g"], params["view_fusion1"]["b"],
    )

    # feat_3d._F = cat([feat_3d._F, feat_2d_to_3d._F], -1); fused_3d = fuseTo3d(feat_3d)
    feat_3d_cat = jnp.concatenate([feat_3d_F, t], axis=-1)
    fused_3d = mink_conv_bn_relu(
        feat_3d_cat, nbr_idx, nbr_valid_f,
        params["fuseTo3d"]["w"], params["fuseTo3d"]["g"], params["fuseTo3d"]["b"],
    )
    return fused_3d, fused_2d


# ----------------------------------------------------------------------------
# Deterministic parameter initialization (synthetic; shapes follow __init__).
# ----------------------------------------------------------------------------
def init_params(key, fea2d_dim, fea3d_dim, view_num):
    ks = iter(jax.random.split(key, 32))

    def conv3d_w(cin, cout):
        return 0.1 * jax.random.normal(next(ks), (27, cin, cout), jnp.float32)

    def bn(c):
        g = 1.0 + 0.1 * jax.random.normal(next(ks), (c,), jnp.float32)
        b = 0.1 * jax.random.normal(next(ks), (c,), jnp.float32)
        return g, b

    params = {}
    g, b = bn(fea2d_dim)
    params["view_sep"] = {"w": conv3d_w(fea3d_dim, fea2d_dim), "g": g, "b": b}
    g, b = bn(fea2d_dim)
    params["view_fusion0"] = {"w": conv3d_w(fea2d_dim * view_num, fea2d_dim), "g": g, "b": b}
    g, b = bn(fea3d_dim)
    params["view_fusion1"] = {"w": conv3d_w(fea2d_dim, fea3d_dim), "g": g, "b": b}
    g, b = bn(fea3d_dim)
    params["fuseTo3d"] = {"w": conv3d_w(fea3d_dim * 2, fea3d_dim), "g": g, "b": b}
    g, b = bn(fea2d_dim)
    params["fuseTo2d"] = {
        "w": 0.1 * jax.random.normal(next(ks), (fea2d_dim, fea2d_dim * 2, 3, 3), jnp.float32),
        "g": g,
        "b": b,
    }
    return params


if __name__ == "__main__":
    view_num, fea2d_dim, fea3d_dim = 3, 16, 32
    B, H, W = 2, 8, 8
    V_B = view_num * B
    N = 40

    key = jax.random.PRNGKey(0)
    k_par, k_feat2d, k_feat3d, k_coord, k_links, k_valid = jax.random.split(key, 6)

    params = init_params(k_par, fea2d_dim, fea3d_dim, view_num)

    # feat_2d_all: (V*B, C2d, H, W)
    feat_2d_all = jax.random.normal(k_feat2d, (V_B, fea2d_dim, H, W), jnp.float32)

    # sparse 3D tensor: unique coordinates (batch, x, y, z), features (N, C3d)
    grid = jnp.stack(
        jnp.meshgrid(jnp.arange(2), jnp.arange(4), jnp.arange(4), jnp.arange(4),
                     indexing="ij"),
        axis=-1,
    ).reshape(-1, 4)  # (128, 4)
    perm = jax.random.permutation(k_coord, grid.shape[0])
    feat_3d_C = grid[perm[:N]].astype(jnp.int32)          # (N, 4)
    feat_3d_F = jax.random.normal(k_feat3d, (N, fea3d_dim), jnp.float32)

    # links: (N, 4, V) = (batch-in-view, h, w, valid); unique (b,h,w) per view.
    link_cols = []
    for v in range(view_num):
        kp, kv = jax.random.split(jax.random.fold_in(k_links, v))
        pos = jax.random.permutation(kp, B * H * W)[:N]
        b_idx = pos // (H * W)
        h_idx = (pos // W) % H
        w_idx = pos % W
        valid = jax.random.bernoulli(kv, 0.8, (N,)).astype(jnp.int32)
        link_cols.append(jnp.stack([b_idx, h_idx, w_idx, valid], axis=1))
    links = jnp.stack(link_cols, axis=-1).astype(jnp.int32)  # (N, 4, V)

    fwd = jax.jit(
        functools.partial(linking_forward, view_num=view_num, fea2d_dim=fea2d_dim)
    )
    fused_3d, fused_2d = fwd(params, feat_2d_all, feat_3d_F, feat_3d_C, links)
    jax.block_until_ready((fused_3d, fused_2d))

    assert fused_3d.shape == (N, fea3d_dim), fused_3d.shape
    assert fused_2d.shape == (V_B, fea2d_dim, H, W), fused_2d.shape
    assert bool(jnp.all(jnp.isfinite(fused_3d))) and bool(jnp.all(jnp.isfinite(fused_2d)))
    print("KERNEL_OK")
</pallas_src>

<mosaic_0001>
module attributes {stable_mosaic.version = 11 : i64} {
  func.func @_matmul_stats_kernel(%arg0: i32, %arg1: memref<40x1408xbf16, #tpu.memory_space<vmem>>, %arg2: memref<1408x128xbf16, #tpu.memory_space<vmem>>, %arg3: memref<40x128xf32, #tpu.memory_space<vmem>>, %arg4: memref<1x8x128xf32, #tpu.memory_space<vmem>>, %arg5: memref<1x8x128xf32, #tpu.memory_space<vmem>>) attributes {dimension_semantics = [#tpu.dimension_semantics<parallel>], iteration_bounds = array<i64: 1>, scalar_prefetch = 0 : i64, scratch_operands = 0 : i64, tpu.core_type = #tpu.core_type<tc>, window_params = [{transform_indices = @transform_0, window_bounds = array<i64: 40, 1408>}, {pipeline_mode = #tpu.pipeline_mode<synchronous>, transform_indices = @transform_1, window_bounds = array<i64: 1408, 128>}, {transform_indices = @transform_2, window_bounds = array<i64: 40, 128>}, {transform_indices = @transform_3, window_bounds = array<i64: 1, 8, 128>}, {transform_indices = @transform_4, window_bounds = array<i64: 1, 8, 128>}]} {
    %c0 = arith.constant 0 : index
    %c0_0 = arith.constant 0 : index
    %0 = vector.load %arg1[%c0, %c0_0] : memref<40x1408xbf16, #tpu.memory_space<vmem>>, vector<40x1408xbf16>
    %c0_1 = arith.constant 0 : index
    %c0_2 = arith.constant 0 : index
    %1 = vector.load %arg2[%c0_1, %c0_2] : memref<1408x128xbf16, #tpu.memory_space<vmem>>, vector<1408x128xbf16>
    %cst = arith.constant dense<0.000000e+00> : vector<40x128xf32>
    %2 = tpu.matmul %0, %1, %cst {dimension_numbers = #tpu.dot_dimension_numbers<[1], [0], [0], [1], [0, 0, 1, 1], [], []>} : vector<40x1408xbf16>, vector<1408x128xbf16>, vector<40x128xf32> -> vector<40x128xf32>
    %c0_3 = arith.constant 0 : index
    %c0_4 = arith.constant 0 : index
    %3 = vector.load %arg3[%c0_3, %c0_4] : memref<40x128xf32, #tpu.memory_space<vmem>>, vector<40x128xf32>
    tpu.vector_store %arg3[%c0_3, %c0_4], %2 {strides = array<i32>} : memref<40x128xf32, #tpu.memory_space<vmem>>, vector<40x128xf32>,
    %cst_5 = arith.constant dense<0.000000e+00> : vector<128xf32>
    %4 = vector.multi_reduction <add>, %2, %cst_5 [0] : vector<40x128xf32> to vector<128xf32>
    %5 = vector.shape_cast %4 : vector<128xf32> to vector<1x128xf32>
    %6 = arith.mulf %2, %2 : vector<40x128xf32>
    %cst_6 = arith.constant dense<0.000000e+00> : vector<128xf32>
    %7 = vector.multi_reduction <add>, %6, %cst_6 [0] : vector<40x128xf32> to vector<128xf32>
    %8 = vector.shape_cast %7 : vector<128xf32> to vector<1x128xf32>
    %9 = vector.shape_cast %5 : vector<1x128xf32> to vector<1x128xf32>
    %10 = vector.broadcast %9 : vector<1x128xf32> to vector<8x128xf32>
    %c0_7 = arith.constant 0 : index
    %c0_8 = arith.constant 0 : index
    %c0_9 = arith.constant 0 : index
    %11 = vector.load %arg4[%c0_7, %c0_8, %c0_9] : memref<1x8x128xf32, #tpu.memory_space<vmem>>, vector<1x8x128xf32>
    %12 = vector.shape_cast %11 : vector<1x8x128xf32> to vector<8x128xf32>
    %13 = vector.shape_cast %10 : vector<8x128xf32> to vector<1x8x128xf32>
    tpu.vector_store %arg4[%c0_7, %c0_8, %c0_9], %13 {strides = array<i32>} : memref<1x8x128xf32, #tpu.memory_space<vmem>>, vector<1x8x128xf32>,
    %14 = vector.shape_cast %8 : vector<1x128xf32> to vector<1x128xf32>
    %15 = vector.broadcast %14 : vector<1x128xf32> to vector<8x128xf32>
    %c0_10 = arith.constant 0 : index
    %c0_11 = arith.constant 0 : index
    %c0_12 = arith.constant 0 : index
    %16 = vector.load %arg5[%c0_10, %c0_11, %c0_12] : memref<1x8x128xf32, #tpu.memory_space<vmem>>, vector<1x8x128xf32>
    %17 = vector.shape_cast %16 : vector<1x8x128xf32> to vector<8x128xf32>
    %18 = vector.shape_cast %15 : vector<8x128xf32> to vector<1x8x128xf32>
    tpu.vector_store %arg5[%c0_10, %c0_11, %c0_12], %18 {strides = array<i32>} : memref<1x8x128xf32, #tpu.memory_space<vmem>>, vector<1x8x128xf32>,
    return
  }
  func.func @transform_0(%arg0: i32) -> (i32, i32) {
    %c0_i32 = arith.constant 0 : i32
    %c0_i32_0 = arith.constant 0 : i32
    return %arg0, %c0_i32 : i32, i32
  }
  func.func @transform_1(%arg0: i32) -> (i32, i32) {
    %c0_i32 = arith.constant 0 : i32
    %c0_i32_0 = arith.constant 0 : i32
    %c0_i32_1 = arith.constant 0 : i32
    return %c0_i32, %c0_i32_0 : i32, i32
  }
  func.func @transform_2(%arg0: i32) -> (i32, i32) {
    %c0_i32 = arith.constant 0 : i32
    %c0_i32_0 = arith.constant 0 : i32
    return %arg0, %c0_i32 : i32, i32
  }
  func.func @transform_3(%arg0: i32) -> (i32, i32, i32) {
    %c0_i32 = arith.constant 0 : i32
    %c0_i32_0 = arith.constant 0 : i32
    %c0_i32_1 = arith.constant 0 : i32
    return %arg0, %c0_i32, %c0_i32_0 : i32, i32, i32
  }
  func.func @transform_4(%arg0: i32) -> (i32, i32, i32) {
    %c0_i32 = arith.constant 0 : i32
    %c0_i32_0 = arith.constant 0 : i32
    %c0_i32_1 = arith.constant 0 : i32
    return %arg0, %c0_i32, %c0_i32_0 : i32, i32, i32
  }
}

module attributes {stable_mosaic.version = 11 : i64} {
  func.func @_scale_bias_relu_kernel(%arg0: i32, %arg1: memref<40x128xf32, #tpu.memory_space<vmem>>, %arg2: memref<1x128xf32, #tpu.memory_space<vmem>>, %arg3: memref<1x128xf32, #tpu.memory_space<vmem>>, %arg4: memref<40x128xf32, #tpu.memory_space<vmem>>) attributes {dimension_semantics = [#tpu.dimension_semantics<parallel>], iteration_bounds = array<i64: 1>, scalar_prefetch = 0 : i64, scratch_operands = 0 : i64, tpu.core_type = #tpu.core_type<tc>, window_params = [{transform_indices = @transform_0, window_bounds = array<i64: 40, 128>}, {pipeline_mode = #tpu.pipeline_mode<synchronous>, transform_indices = @transform_1, window_bounds = array<i64: 1, 128>}, {pipeline_mode = #tpu.pipeline_mode<synchronous>, transform_indices = @transform_2, window_bounds = array<i64: 1, 128>}, {transform_indices = @transform_3, window_bounds = array<i64: 40, 128>}]} {
    %c0 = arith.constant 0 : index
    %c0_0 = arith.constant 0 : index
    %0 = vector.load %arg1[%c0, %c0_0] : memref<40x128xf32, #tpu.memory_space<vmem>>, vector<40x128xf32>
    %c0_1 = arith.constant 0 : index
    %c0_2 = arith.constant 0 : index
    %1 = vector.load %arg2[%c0_1, %c0_2] : memref<1x128xf32, #tpu.memory_space<vmem>>, vector<1x128xf32>
    %2 = vector.broadcast %1 : vector<1x128xf32> to vector<40x128xf32>
    %3 = arith.mulf %0, %2 : vector<40x128xf32>
    %c0_3 = arith.constant 0 : index
    %c0_4 = arith.constant 0 : index
    %4 = vector.load %arg3[%c0_3, %c0_4] : memref<1x128xf32, #tpu.memory_space<vmem>>, vector<1x128xf32>
    %5 = vector.broadcast %4 : vector<1x128xf32> to vector<40x128xf32>
    %6 = arith.addf %3, %5 : vector<40x128xf32>
    %cst = arith.constant 0.000000e+00 : f32
    %7 = vector.broadcast %cst : f32 to vector<40x128xf32>
    %8 = arith.maximumf %6, %7 : vector<40x128xf32>
    %c0_5 = arith.constant 0 : index
    %c0_6 = arith.constant 0 : index
    %9 = vector.load %arg4[%c0_5, %c0_6] : memref<40x128xf32, #tpu.memory_space<vmem>>, vector<40x128xf32>
    tpu.vector_store %arg4[%c0_5, %c0_6], %8 {strides = array<i32>} : memref<40x128xf32, #tpu.memory_space<vmem>>, vector<40x128xf32>,
    return
  }
  func.func @transform_0(%arg0: i32) -> (i32, i32) {
    %c0_i32 = arith.constant 0 : i32
    %c0_i32_0 = arith.constant 0 : i32
    return %arg0, %c0_i32 : i32, i32
  }
  func.func @transform_1(%arg0: i32) -> (i32, i32) {
    %c0_i32 = arith.constant 0 : i32
    %c0_i32_0 = arith.constant 0 : i32
    %c0_i32_1 = arith.constant 0 : i32
    return %c0_i32, %c0_i32_0 : i32, i32
  }
  func.func @transform_2(%arg0: i32) -> (i32, i32) {
    %c0_i32 = arith.constant 0 : i32
    %c0_i32_0 = arith.constant 0 : i32
    %c0_i32_1 = arith.constant 0 : i32
    return %c0_i32, %c0_i32_0 : i32, i32
  }
  func.func @transform_3(%arg0: i32) -> (i32, i32) {
    %c0_i32 = arith.constant 0 : i32
    %c0_i32_0 = arith.constant 0 : i32
    return %arg0, %c0_i32 : i32, i32
  }
}

module attributes {stable_mosaic.version = 11 : i64} {
  func.func @_matmul_stats_kernel(%arg0: i32, %arg1: memref<40x512xbf16, #tpu.memory_space<vmem>>, %arg2: memref<512x128xbf16, #tpu.memory_space<vmem>>, %arg3: memref<40x128xf32, #tpu.memory_space<vmem>>, %arg4: memref<1x8x128xf32, #tpu.memory_space<vmem>>, %arg5: memref<1x8x128xf32, #tpu.memory_space<vmem>>) attributes {dimension_semantics = [#tpu.dimension_semantics<parallel>], iteration_bounds = array<i64: 1>, scalar_prefetch = 0 : i64, scratch_operands = 0 : i64, tpu.core_type = #tpu.core_type<tc>, window_params = [{transform_indices = @transform_0, window_bounds = array<i64: 40, 512>}, {pipeline_mode = #tpu.pipeline_mode<synchronous>, transform_indices = @transform_1, window_bounds = array<i64: 512, 128>}, {transform_indices = @transform_2, window_bounds = array<i64: 40, 128>}, {transform_indices = @transform_3, window_bounds = array<i64: 1, 8, 128>}, {transform_indices = @transform_4, window_bounds = array<i64: 1, 8, 128>}]} {
    %c0 = arith.constant 0 : index
    %c0_0 = arith.constant 0 : index
    %0 = vector.load %arg1[%c0, %c0_0] : memref<40x512xbf16, #tpu.memory_space<vmem>>, vector<40x512xbf16>
    %c0_1 = arith.constant 0 : index
    %c0_2 = arith.constant 0 : index
    %1 = vector.load %arg2[%c0_1, %c0_2] : memref<512x128xbf16, #tpu.memory_space<vmem>>, vector<512x128xbf16>
    %cst = arith.constant dense<0.000000e+00> : vector<40x128xf32>
    %2 = tpu.matmul %0, %1, %cst {dimension_numbers = #tpu.dot_dimension_numbers<[1], [0], [0], [1], [0, 0, 1, 1], [], []>} : vector<40x512xbf16>, vector<512x128xbf16>, vector<40x128xf32> -> vector<40x128xf32>
    %c0_3 = arith.constant 0 : index
    %c0_4 = arith.constant 0 : index
    %3 = vector.load %arg3[%c0_3, %c0_4] : memref<40x128xf32, #tpu.memory_space<vmem>>, vector<40x128xf32>
    tpu.vector_store %arg3[%c0_3, %c0_4], %2 {strides = array<i32>} : memref<40x128xf32, #tpu.memory_space<vmem>>, vector<40x128xf32>,
    %cst_5 = arith.constant dense<0.000000e+00> : vector<128xf32>
    %4 = vector.multi_reduction <add>, %2, %cst_5 [0] : vector<40x128xf32> to vector<128xf32>
    %5 = vector.shape_cast %4 : vector<128xf32> to vector<1x128xf32>
    %6 = arith.mulf %2, %2 : vector<40x128xf32>
    %cst_6 = arith.constant dense<0.000000e+00> : vector<128xf32>
    %7 = vector.multi_reduction <add>, %6, %cst_6 [0] : vector<40x128xf32> to vector<128xf32>
    %8 = vector.shape_cast %7 : vector<128xf32> to vector<1x128xf32>
    %9 = vector.shape_cast %5 : vector<1x128xf32> to vector<1x128xf32>
    %10 = vector.broadcast %9 : vector<1x128xf32> to vector<8x128xf32>
    %c0_7 = arith.constant 0 : index
    %c0_8 = arith.constant 0 : index
    %c0_9 = arith.constant 0 : index
    %11 = vector.load %arg4[%c0_7, %c0_8, %c0_9] : memref<1x8x128xf32, #tpu.memory_space<vmem>>, vector<1x8x128xf32>
    %12 = vector.shape_cast %11 : vector<1x8x128xf32> to vector<8x128xf32>
    %13 = vector.shape_cast %10 : vector<8x128xf32> to vector<1x8x128xf32>
    tpu.vector_store %arg4[%c0_7, %c0_8, %c0_9], %13 {strides = array<i32>} : memref<1x8x128xf32, #tpu.memory_space<vmem>>, vector<1x8x128xf32>,
    %14 = vector.shape_cast %8 : vector<1x128xf32> to vector<1x128xf32>
    %15 = vector.broadcast %14 : vector<1x128xf32> to vector<8x128xf32>
    %c0_10 = arith.constant 0 : index
    %c0_11 = arith.constant 0 : index
    %c0_12 = arith.constant 0 : index
    %16 = vector.load %arg5[%c0_10, %c0_11, %c0_12] : memref<1x8x128xf32, #tpu.memory_space<vmem>>, vector<1x8x128xf32>
    %17 = vector.shape_cast %16 : vector<1x8x128xf32> to vector<8x128xf32>
    %18 = vector.shape_cast %15 : vector<8x128xf32> to vector<1x8x128xf32>
    tpu.vector_store %arg5[%c0_10, %c0_11, %c0_12], %18 {strides = array<i32>} : memref<1x8x128xf32, #tpu.memory_space<vmem>>, vector<1x8x128xf32>,
    return
  }
  func.func @transform_0(%arg0: i32) -> (i32, i32) {
    %c0_i32 = arith.constant 0 : i32
    %c0_i32_0 = arith.constant 0 : i32
    return %arg0, %c0_i32 : i32, i32
  }
  func.func @transform_1(%arg0: i32) -> (i32, i32) {
    %c0_i32 = arith.constant 0 : i32
    %c0_i32_0 = arith.constant 0 : i32
    %c0_i32_1 = arith.constant 0 : i32
    return %c0_i32, %c0_i32_0 : i32, i32
  }
  func.func @transform_2(%arg0: i32) -> (i32, i32) {
    %c0_i32 = arith.constant 0 : i32
    %c0_i32_0 = arith.constant 0 : i32
    return %arg0, %c0_i32 : i32, i32
  }
  func.func @transform_3(%arg0: i32) -> (i32, i32, i32) {
    %c0_i32 = arith.constant 0 : i32
    %c0_i32_0 = arith.constant 0 : i32
    %c0_i32_1 = arith.constant 0 : i32
    return %arg0, %c0_i32, %c0_i32_0 : i32, i32, i32
  }
  func.func @transform_4(%arg0: i32) -> (i32, i32, i32) {
    %c0_i32 = arith.constant 0 : i32
    %c0_i32_0 = arith.constant 0 : i32
    %c0_i32_1 = arith.constant 0 : i32
    return %arg0, %c0_i32, %c0_i32_0 : i32, i32, i32
  }
}

module attributes {stable_mosaic.version = 11 : i64} {
  func.func @_matmul_stats_kernel(%arg0: i32, %arg1: memref<40x1792xbf16, #tpu.memory_space<vmem>>, %arg2: memref<1792x128xbf16, #tpu.memory_space<vmem>>, %arg3: memref<40x128xf32, #tpu.memory_space<vmem>>, %arg4: memref<1x8x128xf32, #tpu.memory_space<vmem>>, %arg5: memref<1x8x128xf32, #tpu.memory_space<vmem>>) attributes {dimension_semantics = [#tpu.dimension_semantics<parallel>], iteration_bounds = array<i64: 1>, scalar_prefetch = 0 : i64, scratch_operands = 0 : i64, tpu.core_type = #tpu.core_type<tc>, window_params = [{transform_indices = @transform_0, window_bounds = array<i64: 40, 1792>}, {pipeline_mode = #tpu.pipeline_mode<synchronous>, transform_indices = @transform_1, window_bounds = array<i64: 1792, 128>}, {transform_indices = @transform_2, window_bounds = array<i64: 40, 128>}, {transform_indices = @transform_3, window_bounds = array<i64: 1, 8, 128>}, {transform_indices = @transform_4, window_bounds = array<i64: 1, 8, 128>}]} {
    %c0 = arith.constant 0 : index
    %c0_0 = arith.constant 0 : index
    %0 = vector.load %arg1[%c0, %c0_0] : memref<40x1792xbf16, #tpu.memory_space<vmem>>, vector<40x1792xbf16>
    %c0_1 = arith.constant 0 : index
    %c0_2 = arith.constant 0 : index
    %1 = vector.load %arg2[%c0_1, %c0_2] : memref<1792x128xbf16, #tpu.memory_space<vmem>>, vector<1792x128xbf16>
    %cst = arith.constant dense<0.000000e+00> : vector<40x128xf32>
    %2 = tpu.matmul %0, %1, %cst {dimension_numbers = #tpu.dot_dimension_numbers<[1], [0], [0], [1], [0, 0, 1, 1], [], []>} : vector<40x1792xbf16>, vector<1792x128xbf16>, vector<40x128xf32> -> vector<40x128xf32>
    %c0_3 = arith.constant 0 : index
    %c0_4 = arith.constant 0 : index
    %3 = vector.load %arg3[%c0_3, %c0_4] : memref<40x128xf32, #tpu.memory_space<vmem>>, vector<40x128xf32>
    tpu.vector_store %arg3[%c0_3, %c0_4], %2 {strides = array<i32>} : memref<40x128xf32, #tpu.memory_space<vmem>>, vector<40x128xf32>,
    %cst_5 = arith.constant dense<0.000000e+00> : vector<128xf32>
    %4 = vector.multi_reduction <add>, %2, %cst_5 [0] : vector<40x128xf32> to vector<128xf32>
    %5 = vector.shape_cast %4 : vector<128xf32> to vector<1x128xf32>
    %6 = arith.mulf %2, %2 : vector<40x128xf32>
    %cst_6 = arith.constant dense<0.000000e+00> : vector<128xf32>
    %7 = vector.multi_reduction <add>, %6, %cst_6 [0] : vector<40x128xf32> to vector<128xf32>
    %8 = vector.shape_cast %7 : vector<128xf32> to vector<1x128xf32>
    %9 = vector.shape_cast %5 : vector<1x128xf32> to vector<1x128xf32>
    %10 = vector.broadcast %9 : vector<1x128xf32> to vector<8x128xf32>
    %c0_7 = arith.constant 0 : index
    %c0_8 = arith.constant 0 : index
    %c0_9 = arith.constant 0 : index
    %11 = vector.load %arg4[%c0_7, %c0_8, %c0_9] : memref<1x8x128xf32, #tpu.memory_space<vmem>>, vector<1x8x128xf32>
    %12 = vector.shape_cast %11 : vector<1x8x128xf32> to vector<8x128xf32>
    %13 = vector.shape_cast %10 : vector<8x128xf32> to vector<1x8x128xf32>
    tpu.vector_store %arg4[%c0_7, %c0_8, %c0_9], %13 {strides = array<i32>} : memref<1x8x128xf32, #tpu.memory_space<vmem>>, vector<1x8x128xf32>,
    %14 = vector.shape_cast %8 : vector<1x128xf32> to vector<1x128xf32>
    %15 = vector.broadcast %14 : vector<1x128xf32> to vector<8x128xf32>
    %c0_10 = arith.constant 0 : index
    %c0_11 = arith.constant 0 : index
    %c0_12 = arith.constant 0 : index
    %16 = vector.load %arg5[%c0_10, %c0_11, %c0_12] : memref<1x8x128xf32, #tpu.memory_space<vmem>>, vector<1x8x128xf32>
    %17 = vector.shape_cast %16 : vector<1x8x128xf32> to vector<8x128xf32>
    %18 = vector.shape_cast %15 : vector<8x128xf32> to vector<1x8x128xf32>
    tpu.vector_store %arg5[%c0_10, %c0_11, %c0_12], %18 {strides = array<i32>} : memref<1x8x128xf32, #tpu.memory_space<vmem>>, vector<1x8x128xf32>,
    return
  }
  func.func @transform_0(%arg0: i32) -> (i32, i32) {
    %c0_i32 = arith.constant 0 : i32
    %c0_i32_0 = arith.constant 0 : i32
    return %arg0, %c0_i32 : i32, i32
  }
  func.func @transform_1(%arg0: i32) -> (i32, i32) {
    %c0_i32 = arith.constant 0 : i32
    %c0_i32_0 = arith.constant 0 : i32
    %c0_i32_1 = arith.constant 0 : i32
    return %c0_i32, %c0_i32_0 : i32, i32
  }
  func.func @transform_2(%arg0: i32) -> (i32, i32) {
    %c0_i32 = arith.constant 0 : i32
    %c0_i32_0 = arith.constant 0 : i32
    return %arg0, %c0_i32 : i32, i32
  }
  func.func @transform_3(%arg0: i32) -> (i32, i32, i32) {
    %c0_i32 = arith.constant 0 : i32
    %c0_i32_0 = arith.constant 0 : i32
    %c0_i32_1 = arith.constant 0 : i32
    return %arg0, %c0_i32, %c0_i32_0 : i32, i32, i32
  }
  func.func @transform_4(%arg0: i32) -> (i32, i32, i32) {
    %c0_i32 = arith.constant 0 : i32
    %c0_i32_0 = arith.constant 0 : i32
    %c0_i32_1 = arith.constant 0 : i32
    return %arg0, %c0_i32, %c0_i32_0 : i32, i32, i32
  }
}

module attributes {stable_mosaic.version = 11 : i64} {
  func.func @_matmul_stats_kernel(%arg0: i32, %arg1: memref<40x896xbf16, #tpu.memory_space<vmem>>, %arg2: memref<896x128xbf16, #tpu.memory_space<vmem>>, %arg3: memref<40x128xf32, #tpu.memory_space<vmem>>, %arg4: memref<1x8x128xf32, #tpu.memory_space<vmem>>, %arg5: memref<1x8x128xf32, #tpu.memory_space<vmem>>) attributes {dimension_semantics = [#tpu.dimension_semantics<parallel>], iteration_bounds = array<i64: 1>, scalar_prefetch = 0 : i64, scratch_operands = 0 : i64, tpu.core_type = #tpu.core_type<tc>, window_params = [{transform_indices = @transform_0, window_bounds = array<i64: 40, 896>}, {pipeline_mode = #tpu.pipeline_mode<synchronous>, transform_indices = @transform_1, window_bounds = array<i64: 896, 128>}, {transform_indices = @transform_2, window_bounds = array<i64: 40, 128>}, {transform_indices = @transform_3, window_bounds = array<i64: 1, 8, 128>}, {transform_indices = @transform_4, window_bounds = array<i64: 1, 8, 128>}]} {
    %c0 = arith.constant 0 : index
    %c0_0 = arith.constant 0 : index
    %0 = vector.load %arg1[%c0, %c0_0] : memref<40x896xbf16, #tpu.memory_space<vmem>>, vector<40x896xbf16>
    %c0_1 = arith.constant 0 : index
    %c0_2 = arith.constant 0 : index
    %1 = vector.load %arg2[%c0_1, %c0_2] : memref<896x128xbf16, #tpu.memory_space<vmem>>, vector<896x128xbf16>
    %cst = arith.constant dense<0.000000e+00> : vector<40x128xf32>
    %2 = tpu.matmul %0, %1, %cst {dimension_numbers = #tpu.dot_dimension_numbers<[1], [0], [0], [1], [0, 0, 1, 1], [], []>} : vector<40x896xbf16>, vector<896x128xbf16>, vector<40x128xf32> -> vector<40x128xf32>
    %c0_3 = arith.constant 0 : index
    %c0_4 = arith.constant 0 : index
    %3 = vector.load %arg3[%c0_3, %c0_4] : memref<40x128xf32, #tpu.memory_space<vmem>>, vector<40x128xf32>
    tpu.vector_store %arg3[%c0_3, %c0_4], %2 {strides = array<i32>} : memref<40x128xf32, #tpu.memory_space<vmem>>, vector<40x128xf32>,
    %cst_5 = arith.constant dense<0.000000e+00> : vector<128xf32>
    %4 = vector.multi_reduction <add>, %2, %cst_5 [0] : vector<40x128xf32> to vector<128xf32>
    %5 = vector.shape_cast %4 : vector<128xf32> to vector<1x128xf32>
    %6 = arith.mulf %2, %2 : vector<40x128xf32>
    %cst_6 = arith.constant dense<0.000000e+00> : vector<128xf32>
    %7 = vector.multi_reduction <add>, %6, %cst_6 [0] : vector<40x128xf32> to vector<128xf32>
    %8 = vector.shape_cast %7 : vector<128xf32> to vector<1x128xf32>
    %9 = vector.shape_cast %5 : vector<1x128xf32> to vector<1x128xf32>
    %10 = vector.broadcast %9 : vector<1x128xf32> to vector<8x128xf32>
    %c0_7 = arith.constant 0 : index
    %c0_8 = arith.constant 0 : index
    %c0_9 = arith.constant 0 : index
    %11 = vector.load %arg4[%c0_7, %c0_8, %c0_9] : memref<1x8x128xf32, #tpu.memory_space<vmem>>, vector<1x8x128xf32>
    %12 = vector.shape_cast %11 : vector<1x8x128xf32> to vector<8x128xf32>
    %13 = vector.shape_cast %10 : vector<8x128xf32> to vector<1x8x128xf32>
    tpu.vector_store %arg4[%c0_7, %c0_8, %c0_9], %13 {strides = array<i32>} : memref<1x8x128xf32, #tpu.memory_space<vmem>>, vector<1x8x128xf32>,
    %14 = vector.shape_cast %8 : vector<1x128xf32> to vector<1x128xf32>
    %15 = vector.broadcast %14 : vector<1x128xf32> to vector<8x128xf32>
    %c0_10 = arith.constant 0 : index
    %c0_11 = arith.constant 0 : index
    %c0_12 = arith.constant 0 : index
    %16 = vector.load %arg5[%c0_10, %c0_11, %c0_12] : memref<1x8x128xf32, #tpu.memory_space<vmem>>, vector<1x8x128xf32>
    %17 = vector.shape_cast %16 : vector<1x8x128xf32> to vector<8x128xf32>
    %18 = vector.shape_cast %15 : vector<8x128xf32> to vector<1x8x128xf32>
    tpu.vector_store %arg5[%c0_10, %c0_11, %c0_12], %18 {strides = array<i32>} : memref<1x8x128xf32, #tpu.memory_space<vmem>>, vector<1x8x128xf32>,
    return
  }
  func.func @transform_0(%arg0: i32) -> (i32, i32) {
    %c0_i32 = arith.constant 0 : i32
    %c0_i32_0 = arith.constant 0 : i32
    return %arg0, %c0_i32 : i32, i32
  }
  func.func @transform_1(%arg0: i32) -> (i32, i32) {
    %c0_i32 = arith.constant 0 : i32
    %c0_i32_0 = arith.constant 0 : i32
    %c0_i32_1 = arith.constant 0 : i32
    return %c0_i32, %c0_i32_0 : i32, i32
  }
  func.func @transform_2(%arg0: i32) -> (i32, i32) {
    %c0_i32 = arith.constant 0 : i32
    %c0_i32_0 = arith.constant 0 : i32
    return %arg0, %c0_i32 : i32, i32
  }
  func.func @transform_3(%arg0: i32) -> (i32, i32, i32) {
    %c0_i32 = arith.constant 0 : i32
    %c0_i32_0 = arith.constant 0 : i32
    %c0_i32_1 = arith.constant 0 : i32
    return %arg0, %c0_i32, %c0_i32_0 : i32, i32, i32
  }
  func.func @transform_4(%arg0: i32) -> (i32, i32, i32) {
    %c0_i32 = arith.constant 0 : i32
    %c0_i32_0 = arith.constant 0 : i32
    %c0_i32_1 = arith.constant 0 : i32
    return %arg0, %c0_i32, %c0_i32_0 : i32, i32, i32
  }
}

module attributes {stable_mosaic.version = 11 : i64} {
  func.func @_matmul_stats_kernel(%arg0: i32, %arg1: memref<384x384xbf16, #tpu.memory_space<vmem>>, %arg2: memref<384x128xbf16, #tpu.memory_space<vmem>>, %arg3: memref<384x128xf32, #tpu.memory_space<vmem>>, %arg4: memref<1x8x128xf32, #tpu.memory_space<vmem>>, %arg5: memref<1x8x128xf32, #tpu.memory_space<vmem>>) attributes {dimension_semantics = [#tpu.dimension_semantics<parallel>], iteration_bounds = array<i64: 1>, scalar_prefetch = 0 : i64, scratch_operands = 0 : i64, tpu.core_type = #tpu.core_type<tc>, window_params = [{transform_indices = @transform_0, window_bounds = array<i64: 384, 384>}, {pipeline_mode = #tpu.pipeline_mode<synchronous>, transform_indices = @transform_1, window_bounds = array<i64: 384, 128>}, {transform_indices = @transform_2, window_bounds = array<i64: 384, 128>}, {transform_indices = @transform_3, window_bounds = array<i64: 1, 8, 128>}, {transform_indices = @transform_4, window_bounds = array<i64: 1, 8, 128>}]} {
    %c0 = arith.constant 0 : index
    %c0_0 = arith.constant 0 : index
    %0 = vector.load %arg1[%c0, %c0_0] : memref<384x384xbf16, #tpu.memory_space<vmem>>, vector<384x384xbf16>
    %c0_1 = arith.constant 0 : index
    %c0_2 = arith.constant 0 : index
    %1 = vector.load %arg2[%c0_1, %c0_2] : memref<384x128xbf16, #tpu.memory_space<vmem>>, vector<384x128xbf16>
    %cst = arith.constant dense<0.000000e+00> : vector<384x128xf32>
    %2 = tpu.matmul %0, %1, %cst {dimension_numbers = #tpu.dot_dimension_numbers<[1], [0], [0], [1], [0, 0, 1, 1], [], []>} : vector<384x384xbf16>, vector<384x128xbf16>, vector<384x128xf32> -> vector<384x128xf32>
    %c0_3 = arith.constant 0 : index
    %c0_4 = arith.constant 0 : index
    %3 = vector.load %arg3[%c0_3, %c0_4] : memref<384x128xf32, #tpu.memory_space<vmem>>, vector<384x128xf32>
    tpu.vector_store %arg3[%c0_3, %c0_4], %2 {strides = array<i32>} : memref<384x128xf32, #tpu.memory_space<vmem>>, vector<384x128xf32>,
    %cst_5 = arith.constant dense<0.000000e+00> : vector<128xf32>
    %4 = vector.multi_reduction <add>, %2, %cst_5 [0] : vector<384x128xf32> to vector<128xf32>
    %5 = vector.shape_cast %4 : vector<128xf32> to vector<1x128xf32>
    %6 = arith.mulf %2, %2 : vector<384x128xf32>
    %cst_6 = arith.constant dense<0.000000e+00> : vector<128xf32>
    %7 = vector.multi_reduction <add>, %6, %cst_6 [0] : vector<384x128xf32> to vector<128xf32>
    %8 = vector.shape_cast %7 : vector<128xf32> to vector<1x128xf32>
    %9 = vector.shape_cast %5 : vector<1x128xf32> to vector<1x128xf32>
    %10 = vector.broadcast %9 : vector<1x128xf32> to vector<8x128xf32>
    %c0_7 = arith.constant 0 : index
    %c0_8 = arith.constant 0 : index
    %c0_9 = arith.constant 0 : index
    %11 = vector.load %arg4[%c0_7, %c0_8, %c0_9] : memref<1x8x128xf32, #tpu.memory_space<vmem>>, vector<1x8x128xf32>
    %12 = vector.shape_cast %11 : vector<1x8x128xf32> to vector<8x128xf32>
    %13 = vector.shape_cast %10 : vector<8x128xf32> to vector<1x8x128xf32>
    tpu.vector_store %arg4[%c0_7, %c0_8, %c0_9], %13 {strides = array<i32>} : memref<1x8x128xf32, #tpu.memory_space<vmem>>, vector<1x8x128xf32>,
    %14 = vector.shape_cast %8 : vector<1x128xf32> to vector<1x128xf32>
    %15 = vector.broadcast %14 : vector<1x128xf32> to vector<8x128xf32>
    %c0_10 = arith.constant 0 : index
    %c0_11 = arith.constant 0 : index
    %c0_12 = arith.constant 0 : index
    %16 = vector.load %arg5[%c0_10, %c0_11, %c0_12] : memref<1x8x128xf32, #tpu.memory_space<vmem>>, vector<1x8x128xf32>
    %17 = vector.shape_cast %16 : vector<1x8x128xf32> to vector<8x128xf32>
    %18 = vector.shape_cast %15 : vector<8x128xf32> to vector<1x8x128xf32>
    tpu.vector_store %arg5[%c0_10, %c0_11, %c0_12], %18 {strides = array<i32>} : memref<1x8x128xf32, #tpu.memory_space<vmem>>, vector<1x8x128xf32>,
    return
  }
  func.func @transform_0(%arg0: i32) -> (i32, i32) {
    %c0_i32 = arith.constant 0 : i32
    %c0_i32_0 = arith.constant 0 : i32
    return %arg0, %c0_i32 : i32, i32
  }
  func.func @transform_1(%arg0: i32) -> (i32, i32) {
    %c0_i32 = arith.constant 0 : i32
    %c0_i32_0 = arith.constant 0 : i32
    %c0_i32_1 = arith.constant 0 : i32
    return %c0_i32, %c0_i32_0 : i32, i32
  }
  func.func @transform_2(%arg0: i32) -> (i32, i32) {
    %c0_i32 = arith.constant 0 : i32
    %c0_i32_0 = arith.constant 0 : i32
    return %arg0, %c0_i32 : i32, i32
  }
  func.func @transform_3(%arg0: i32) -> (i32, i32, i32) {
    %c0_i32 = arith.constant 0 : i32
    %c0_i32_0 = arith.constant 0 : i32
    %c0_i32_1 = arith.constant 0 : i32
    return %arg0, %c0_i32, %c0_i32_0 : i32, i32, i32
  }
  func.func @transform_4(%arg0: i32) -> (i32, i32, i32) {
    %c0_i32 = arith.constant 0 : i32
    %c0_i32_0 = arith.constant 0 : i32
    %c0_i32_1 = arith.constant 0 : i32
    return %arg0, %c0_i32, %c0_i32_0 : i32, i32, i32
  }
}

module attributes {stable_mosaic.version = 11 : i64} {
  func.func @_scale_bias_relu_kernel(%arg0: i32, %arg1: memref<384x128xf32, #tpu.memory_space<vmem>>, %arg2: memref<1x128xf32, #tpu.memory_space<vmem>>, %arg3: memref<1x128xf32, #tpu.memory_space<vmem>>, %arg4: memref<384x128xf32, #tpu.memory_space<vmem>>) attributes {dimension_semantics = [#tpu.dimension_semantics<parallel>], iteration_bounds = array<i64: 1>, scalar_prefetch = 0 : i64, scratch_operands = 0 : i64, tpu.core_type = #tpu.core_type<tc>, window_params = [{transform_indices = @transform_0, window_bounds = array<i64: 384, 128>}, {pipeline_mode = #tpu.pipeline_mode<synchronous>, transform_indices = @transform_1, window_bounds = array<i64: 1, 128>}, {pipeline_mode = #tpu.pipeline_mode<synchronous>, transform_indices = @transform_2, window_bounds = array<i64: 1, 128>}, {transform_indices = @transform_3, window_bounds = array<i64: 384, 128>}]} {
    %c0 = arith.constant 0 : index
    %c0_0 = arith.constant 0 : index
    %0 = vector.load %arg1[%c0, %c0_0] : memref<384x128xf32, #tpu.memory_space<vmem>>, vector<384x128xf32>
    %c0_1 = arith.constant 0 : index
    %c0_2 = arith.constant 0 : index
    %1 = vector.load %arg2[%c0_1, %c0_2] : memref<1x128xf32, #tpu.memory_space<vmem>>, vector<1x128xf32>
    %2 = vector.broadcast %1 : vector<1x128xf32> to vector<384x128xf32>
    %3 = arith.mulf %0, %2 : vector<384x128xf32>
    %c0_3 = arith.constant 0 : index
    %c0_4 = arith.constant 0 : index
    %4 = vector.load %arg3[%c0_3, %c0_4] : memref<1x128xf32, #tpu.memory_space<vmem>>, vector<1x128xf32>
    %5 = vector.broadcast %4 : vector<1x128xf32> to vector<384x128xf32>
    %6 = arith.addf %3, %5 : vector<384x128xf32>
    %cst = arith.constant 0.000000e+00 : f32
    %7 = vector.broadcast %cst : f32 to vector<384x128xf32>
    %8 = arith.maximumf %6, %7 : vector<384x128xf32>
    %c0_5 = arith.constant 0 : index
    %c0_6 = arith.constant 0 : index
    %9 = vector.load %arg4[%c0_5, %c0_6] : memref<384x128xf32, #tpu.memory_space<vmem>>, vector<384x128xf32>
    tpu.vector_store %arg4[%c0_5, %c0_6], %8 {strides = array<i32>} : memref<384x128xf32, #tpu.memory_space<vmem>>, vector<384x128xf32>,
    return
  }
  func.func @transform_0(%arg0: i32) -> (i32, i32) {
    %c0_i32 = arith.constant 0 : i32
    %c0_i32_0 = arith.constant 0 : i32
    return %arg0, %c0_i32 : i32, i32
  }
  func.func @transform_1(%arg0: i32) -> (i32, i32) {
    %c0_i32 = arith.constant 0 : i32
    %c0_i32_0 = arith.constant 0 : i32
    %c0_i32_1 = arith.constant 0 : i32
    return %c0_i32, %c0_i32_0 : i32, i32
  }
  func.func @transform_2(%arg0: i32) -> (i32, i32) {
    %c0_i32 = arith.constant 0 : i32
    %c0_i32_0 = arith.constant 0 : i32
    %c0_i32_1 = arith.constant 0 : i32
    return %c0_i32, %c0_i32_0 : i32, i32
  }
  func.func @transform_3(%arg0: i32) -> (i32, i32) {
    %c0_i32 = arith.constant 0 : i32
    %c0_i32_0 = arith.constant 0 : i32
    return %arg0, %c0_i32 : i32, i32
  }
}

</mosaic_0001>

<llo_original>
// kernel: custom-call.12
$region0: #{custom-call.12}
  %s0 = inlined_call_operand.vmem [shape: u32[27,40], index: 0, kind: output, shape index: {}]

// kernel: squeeze.6
$region0: #{squeeze.6}
  %s0 = inlined_call_operand.vmem [shape: s32[1080], index: 0, kind: input, shape index: {}]
  %s1 = inlined_call_operand.vmem [shape: s32[27,40], index: 1, kind: output, shape index: {}]
  %s2 = smov 3
  %v3 = vld [vmem:[%s0] ss:$5 sm:%s2]
  %vm4 = vcmask 326656
  %5 = vst.msk [vmem:[%s1] ss:$16 sm:$0x3] %vm4, %v3
  %s6 = scalar_lea.vmem %s0, 4
  %v7 = vld [vmem:[%s6] sm:$0x1]
  %8 = vrot.lane.b32.xlu0 %v7, 120
  %v9 = vpop.permute.xlu0 %8
  %vm10 = vcmask 326656
  %s11 = scalar_lea.vmem %s1, 13
  %12 = vst.msk [vmem:[%s11] sm:$0x1] %vm10, %v9
  %s13 = scalar_lea.vmem %s0, 3
  %s14 = smov 3
  %v15 = vld [vmem:[%s13] ss:$5 sm:%s14]
  %16 = vrot.lane.b32.xlu0 %v15, 112
  %v17 = vpop.permute.xlu0 %16
  %vm18 = vcmask 326656
  %s19 = scalar_lea.vmem %s1, 10
  %20 = vst.msk [vmem:[%s19] ss:$16 sm:$0x3] %vm18, %v17
  %s21 = scalar_lea.vmem %s0, 2
  %s22 = smov 3
  %v23 = vld [vmem:[%s21] ss:$5 sm:%s22]
  %24 = vrot.lane.b32.xlu0 %v23, 104
  %v25 = vpop.permute.xlu0 %24
  %vm26 = vcmask 326656
  %s27 = scalar_lea.vmem %s1, 7
  %28 = vst.msk [vmem:[%s27] ss:$16 sm:$0x3] %vm26, %v25
  %s29 = scalar_lea.vmem %s0, 1
  %s30 = smov 3
  %v31 = vld [vmem:[%s29] ss:$5 sm:%s30]
  %32 = vrot.lane.b32.xlu0 %v31, 96
  %v33 = vpop.permute.xlu0 %32
  %vm34 = vcmask 326656
  %s35 = scalar_lea.vmem %s1, 4
  %36 = vst.msk [vmem:[%s35] ss:$16 sm:$0x3] %vm34, %v33
  %s37 = smov 3
  %v38 = vld [vmem:[%s0] ss:$5 sm:%s37]
  %39 = vrot.lane.b32.xlu0 %v38, 88
  %v40 = vpop.permute.xlu0 %39
  %vm41 = vcmask 326656
  %s42 = scalar_lea.vmem %s1, 1
  %43 = vst.msk [vmem:[%s42] ss:$16 sm:$0x3] %vm41, %v40
  %s44 = scalar_lea.vmem %s0, 4
  %v45 = vld [vmem:[%s44] sm:$0x1]
  %46 = vrot.lane.b32.xlu0 %v45, 80
  %v47 = vpop.permute.xlu0 %46
  %vm48 = vcmask 326656
  %s49 = scalar_lea.vmem %s1, 14
  %50 = vst.msk [vmem:[%s49] sm:$0x1] %vm48, %v47
  %s51 = scalar_lea.vmem %s0, 3
  %v52 = vld [vmem:[%s51] sm:$0x1]
  %53 = vrot.lane.b32.xlu0 %v52, 72
  %v54 = vpop.permute.xlu0 %53
  %vm55 = vcmask 326656
  %s56 = scalar_lea.vmem %s1, 11
  %57 = vst.msk [vmem:[%s56] sm:$0x1] %vm55, %v54
  %s58 = scalar_lea.vmem %s0, 2
  %s59 = smov 3
  %v60 = vld [vmem:[%s58] ss:$5 sm:%s59]
  %61 = vrot.lane.b32.xlu0 %v60, 64
  %v62 = vpop.permute.xlu0 %61
  %vm63 = vcmask 326656
  %s64 = scalar_lea.vmem %s1, 8
  %65 = vst.msk [vmem:[%s64] ss:$16 sm:$0x3] %vm63, %v62
  %s66 = scalar_lea.vmem %s0, 1
  %s67 = smov 3
  %v68 = vld [vmem:[%s66] ss:$5 sm:%s67]
  %69 = vrot.lane.b32.xlu0 %v68, 56
  %v70 = vpop.permute.xlu0 %69
  %vm71 = vcmask 326656
  %s72 = scalar_lea.vmem %s1, 5
  %73 = vst.msk [vmem:[%s72] ss:$16 sm:$0x3] %vm71, %v70
  %s74 = smov 3
  %v75 = vld [vmem:[%s0] ss:$5 sm:%s74]
  %76 = vrot.lane.b32.xlu0 %v75, 48
  %v77 = vpop.permute.xlu0 %76
  %vm78 = vcmask 326656
  %s79 = scalar_lea.vmem %s1, 2
  %80 = vst.msk [vmem:[%s79] ss:$16 sm:$0x3] %vm78, %v77
  %s81 = scalar_lea.vmem %s0, 4
  %v82 = vld [vmem:[%s81] sm:$0x1]
  %83 = vrot.lane.b32.xlu0 %v82, 40
  %v84 = vpop.permute.xlu0 %83
  %vm85 = vcmask 326656
  %s86 = scalar_lea.vmem %s1, 15
  %87 = vst.msk [vmem:[%s86] sm:$0x1] %vm85, %v84
  %s88 = scalar_lea.vmem %s0, 3
  %v89 = vld [vmem:[%s88] sm:$0x1]
  %s90 = scalar_lea.vmem %s0, 4
  %v91 = vld [vmem:[%s90] sm:$0x1]
  %vm92 = vcmask 785408
  %v93 = vsel %vm92, %v91, %v89
  %94 = vrot.lane.b32.xlu0 %v93, 32
  %v95 = vpop.permute.xlu0 %94
  %vm96 = vcmask 261120
  %s97 = scalar_lea.vmem %s1, 12
  %98 = vst.msk [vmem:[%s97] sm:$0x1] %vm96, %v95
  %vm99 = vcmask 326912
  %s100 = scalar_lea.vmem %s1, 12
  %101 = vst.msk [vmem:[%s100] sm:$0x1] %vm99, %v95
  %s102 = scalar_lea.vmem %s0, 2
  %s103 = smov 3
  %v104 = vld [vmem:[%s102] ss:$5 sm:%s103]
  %s105 = scalar_lea.vmem %s0, 3
  %s106 = smov 3
  %v107 = vld [vmem:[%s105] ss:$5 sm:%s106]
  %vm108 = vcmask 850944
  %v109 = vsel %vm108, %v107, %v104
  %110 = vrot.lane.b32.xlu0 %v109, 24
  %v111 = vpop.permute.xlu0 %110
  %vm112 = vcmask 195584
  %s113 = scalar_lea.vmem %s1, 9
  %114 = vst.msk [vmem:[%s113] ss:$16 sm:$0x3] %vm112, %v111
  %vm115 = vcmask 326848
  %s116 = scalar_lea.vmem %s1, 9
  %117 = vst.msk [vmem:[%s116] ss:$16 sm:$0x3] %vm115, %v111
  %s118 = scalar_lea.vmem %s0, 1
  %s119 = smov 3
  %v120 = vld [vmem:[%s118] ss:$5 sm:%s119]
  %s121 = scalar_lea.vmem %s0, 2
  %s122 = smov 3
  %v123 = vld [vmem:[%s121] ss:$5 sm:%s122]
  %vm124 = vcmask 916480
  %v125 = vsel %vm124, %v123, %v120
  %126 = vrot.lane.b32.xlu0 %v125, 16
  %v127 = vpop.permute.xlu0 %126
  %vm128 = vcmask 130048
  %s129 = scalar_lea.vmem %s1, 6
  %130 = vst.msk [vmem:[%s129] ss:$16 sm:$0x3] %vm128, %v127
  %vm131 = vcmask 326784
  %s132 = scalar_lea.vmem %s1, 6
  %133 = vst.msk [vmem:[%s132] ss:$16 sm:$0x3] %vm131, %v127
  %s134 = smov 3
  %v135 = vld [vmem:[%s0] ss:$5 sm:%s134]
  %s136 = scalar_lea.vmem %s0, 1
  %s137 = smov 3
  %v138 = vld [vmem:[%s136] ss:$5 sm:%s137]
  %vm139 = vcmask 982016
  %v140 = vsel %vm139, %v138, %v135
  %141 = vrot.lane.b32.xlu0 %v140, 8
  %v142 = vpop.permute.xlu0 %141
  %vm143 = vcmask 64512
  %s144 = scalar_lea.vmem %s1, 3
  %145 = vst.msk [vmem:[%s144] ss:$16 sm:$0x3] %vm143, %v142
  %vm146 = vcmask 326720
  %s147 = scalar_lea.vmem %s1, 3
  %148 = vst.msk [vmem:[%s147] ss:$16 sm:$0x3] %vm146, %v142

// kernel: linking_forward.15
$region0: #{linking_forward.15}
  #allocation0 [shape = 'u32[]', space=smem, size = 0x4, offset = 0x4, fixed_abs, tag = 'smem constant byte address 0x4 - core index']
  #allocation1 [shape = 'u32[144,128]{1,0:T(1,128)}', space=vmem, size = 0x12000, scoped, tag = 'internal scratch']
  %s0 = inlined_call_operand.vmem [shape: f32[40,128], index: 0, kind: input, shape index: {}]
  %s1 = inlined_call_operand.vmem [shape: f32[1,128], index: 1, kind: input, shape index: {}]
  %s2 = inlined_call_operand.vmem [shape: f32[1,128], index: 2, kind: input, shape index: {}]
  %s3 = inlined_call_operand.vmem [shape: f32[40,128], index: 3, kind: output, shape index: {}]
  %s4 = sld [smem:[#allocation0]]
  $region22: #{linking_forward.15} parent=0
    _
  %s6 = ssub.s32 1, %s4
  %s7 = scalar_select 0, %s6, %s4
  // Predicated region
  $region2: #{linking_forward.15} parent=0 // pred_check
    _
  $region3: #{linking_forward.15} parent=0 // pred_check_branch
    %9 = sbr.rel (0) target = $region5
  $region4: #{linking_forward.15} parent=0 // pred_region
    _
  $region5: #{linking_forward.15} parent=0 // pred_fallthru
    _
  // Predicated region
  $region6: #{linking_forward.15} parent=0 // pred_check
    _
  $region7: #{linking_forward.15} parent=0 // pred_check_branch
    %11 = sbr.rel (0) target = $region9
  $region8: #{linking_forward.15} parent=0 // pred_region
    _
  $region9: #{linking_forward.15} parent=0 // pred_fallthru
    _
  // Predicated region
  $region10: #{linking_forward.15} parent=0 // pred_check
    _
  $region11: #{linking_forward.15} parent=0 // pred_check_branch
    %13 = sbr.rel (0) target = $region13
  $region12: #{linking_forward.15} parent=0 // pred_region
    _
  $region13: #{linking_forward.15} parent=0 // pred_fallthru
    _
  %v14 = vld [vmem:[%s0] sm:$0xff]
  %v15 = vld [vmem:[%s0 + $0x8] sm:$0xff]
  %v16 = vld [vmem:[%s0 + $0x10] sm:$0xff]
  %v17 = vld [vmem:[%s0 + $0x18] sm:$0xff]
  %v18 = vld [vmem:[%s0 + $0x20] sm:$0xff]
  %v19 = vld [vmem:[%s1] sm:$0x1]
  %v21 = vlaneseq
  %v22 = vshrl.u32 %v21, 7
  %v23 = vsub.s32 0, %v22
  %v24 = vrot.slane %v19, %v23
  %v26 = vmul.f32 %v14, %v24
  %v27 = vmul.f32 %v15, %v24
  %v28 = vmul.f32 %v16, %v24
  %v29 = vmul.f32 %v17, %v24
  %v30 = vmul.f32 %v18, %v24
  %v31 = vld [vmem:[%s2] sm:$0x1]
  %v33 = vlaneseq
  %v34 = vshrl.u32 %v33, 7
  %v35 = vsub.s32 0, %v34
  %v36 = vrot.slane %v31, %v35
  %v38 = vadd.f32 %v26, %v36
  %v39 = vadd.f32 %v27, %v36
  %v40 = vadd.f32 %v28, %v36
  %v41 = vadd.f32 %v29, %v36
  %v42 = vadd.f32 %v30, %v36
  %v43 = vmax.f32 %v38, 0.0
  %v44 = vmax.f32 %v39, 0.0
  %v45 = vmax.f32 %v40, 0.0
  %v46 = vmax.f32 %v41, 0.0
  %v47 = vmax.f32 %v42, 0.0
  %48 = vst [vmem:[%s3] sm:$0xff] %v43
  %49 = vst [vmem:[%s3 + $0x8] sm:$0xff] %v44
  %50 = vst [vmem:[%s3 + $0x10] sm:$0xff] %v45
  %51 = vst [vmem:[%s3 + $0x18] sm:$0xff] %v46
  %52 = vst [vmem:[%s3 + $0x20] sm:$0xff] %v47
  // Predicated region
  $region14: #{linking_forward.15} parent=0 // pred_check
    _
  $region15: #{linking_forward.15} parent=0 // pred_check_branch
    %54 = sbr.rel (0) target = $region17
  $region16: #{linking_forward.15} parent=0 // pred_region
    _
  $region17: #{linking_forward.15} parent=0 // pred_fallthru
    _
  // Predicated region
  $region18: #{linking_forward.15} parent=0 // pred_check
    _
  $region19: #{linking_forward.15} parent=0 // pred_check_branch
    %56 = sbr.rel (0) target = $region21
  $region20: #{linking_forward.15} parent=0 // pred_region
    _
  $region21: #{linking_forward.15} parent=0 // pred_fallthru
    _

// kernel: linking_forward.14
$region0: #{linking_forward.14}
  #allocation0 [shape = 'u32[]', space=smem, size = 0x4, offset = 0x4, fixed_abs, tag = 'smem constant byte address 0x4 - core index']
  #allocation1 [shape = 'u32[144,128]{1,0:T(1,128)}', space=vmem, size = 0x12000, scoped, tag = 'internal scratch']
  %s0 = inlined_call_operand.vmem [shape: bf16[40,1408], index: 0, kind: input, shape index: {}]
  %s1 = inlined_call_operand.vmem [shape: bf16[1408,128], index: 1, kind: input, shape index: {}]
  %s2 = inlined_call_operand.vmem [shape: f32[40,128], index: 2, kind: output, shape index: {0}]
  %s3 = inlined_call_operand.vmem [shape: f32[1,8,128], index: 3, kind: output, shape index: {1}]
  %s4 = inlined_call_operand.vmem [shape: f32[1,8,128], index: 4, kind: output, shape index: {2}]
  %5 = xla_tuple %s2, %s3, %s4
  %s6 = sld [smem:[#allocation0]]
  $region34: #{linking_forward.14} parent=0
    _
  %s8 = ssub.s32 1, %s6
  %s9 = scalar_select 0, %s8, %s6
  // Predicated region
  $region2: #{linking_forward.14} parent=0 // pred_check
    _
  $region3: #{linking_forward.14} parent=0 // pred_check_branch
    %11 = sbr.rel (0) target = $region5
  $region4: #{linking_forward.14} parent=0 // pred_region
    _
  $region5: #{linking_forward.14} parent=0 // pred_fallthru
    _
  // Predicated region
  $region6: #{linking_forward.14} parent=0 // pred_check
    _
  $region7: #{linking_forward.14} parent=0 // pred_check_branch
    %13 = sbr.rel (0) target = $region9
  $region8: #{linking_forward.14} parent=0 // pred_region
    _
  $region9: #{linking_forward.14} parent=0 // pred_fallthru
    _
  %v15 = vld [vmem:[%s0] sm:$0xff]
  %v16 = vld [vmem:[%s0 + $0x8] sm:$0xff]
  %v17 = vld [vmem:[%s0 + $0x10] sm:$0xff]
  %v18 = vld [vmem:[%s0 + $0x18] sm:$0xff]
  %v19 = vld [vmem:[%s0 + $0x20] sm:$0xff]
  %v20 = vld [vmem:[%s0 + $0x28] sm:$0xf]
  %v21 = vld [vmem:[%s0 + $0x2c] sm:$0xff]
  %v22 = vld [vmem:[%s0 + $0x34] sm:$0xff]
  %v23 = vld [vmem:[%s0 + $0x3c] sm:$0xff]
  %v24 = vld [vmem:[%s0 + $0x44] sm:$0xff]
  %v25 = vld [vmem:[%s0 + $0x4c] sm:$0xff]
  %v26 = vld [vmem:[%s0 + $0x54] sm:$0xf]
  %v27 = vld [vmem:[%s0 + $0x58] sm:$0xff]
  %v28 = vld [vmem:[%s0 + $0x60] sm:$0xff]
  %v29 = vld [vmem:[%s0 + $0x68] sm:$0xff]
  %v30 = vld [vmem:[%s0 + $0x70] sm:$0xff]
  %v31 = vld [vmem:[%s0 + $0x78] sm:$0xff]
  %v32 = vld [vmem:[%s0 + $0x80] sm:$0xf]
  %v33 = vld [vmem:[%s0 + $0x84] sm:$0xff]
  %v34 = vld [vmem:[%s0 + $0x8c] sm:$0xff]
  %v35 = vld [vmem:[%s0 + $0x94] sm:$0xff]
  %v36 = vld [vmem:[%s0 + $0x9c] sm:$0xff]
  %v37 = vld [vmem:[%s0 + $0xa4] sm:$0xff]
  %v38 = vld [vmem:[%s0 + $0xac] sm:$0xf]
  %v39 = vld [vmem:[%s0 + $0xb0] sm:$0xff]
  %v40 = vld [vmem:[%s0 + $0xb8] sm:$0xff]
  %v41 = vld [vmem:[%s0 + $0xc0] sm:$0xff]
  %v42 = vld [vmem:[%s0 + $0xc8] sm:$0xff]
  %v43 = vld [vmem:[%s0 + $0xd0] sm:$0xff]
  %v44 = vld [vmem:[%s0 + $0xd8] sm:$0xf]
  %v45 = vld [vmem:[%s1] sm:$0xf]
  %v46 = vld [vmem:[%s1 + $0x4] sm:$0xf]
  %v47 = vld [vmem:[%s1 + $0x8] sm:$0xf]
  %v48 = vld [vmem:[%s1 + $0xc] sm:$0xf]
  %v49 = vld [vmem:[%s1 + $0x10] sm:$0xf]
  %v50 = vld [vmem:[%s1 + $0x14] sm:$0xf]
  %v51 = vld [vmem:[%s1 + $0x18] sm:$0xf]
  %v52 = vld [vmem:[%s1 + $0x1c] sm:$0xf]
  %v53 = vld [vmem:[%s1 + $0x20] sm:$0xf]
  %v54 = vld [vmem:[%s1 + $0x24] sm:$0xf]
  %v55 = vld [vmem:[%s1 + $0x28] sm:$0xf]
  %v56 = vld [vmem:[%s1 + $0x2c] sm:$0xf]
  %v57 = vld [vmem:[%s1 + $0x30] sm:$0xf]
  %v58 = vld [vmem:[%s1 + $0x34] sm:$0xf]
  %v59 = vld [vmem:[%s1 + $0x38] sm:$0xf]
  %v60 = vld [vmem:[%s1 + $0x3c] sm:$0xf]
  %v61 = vld [vmem:[%s1 + $0x40] sm:$0xf]
  %v62 = vld [vmem:[%s1 + $0x44] sm:$0xf]
  %v63 = vld [vmem:[%s1 + $0x48] sm:$0xf]
  %v64 = vld [vmem:[%s1 + $0x4c] sm:$0xf]
  %v65 = vld [vmem:[%s1 + $0x50] sm:$0xf]
  %v66 = vld [vmem:[%s1 + $0x54] sm:$0xf]
  %v67 = vld [vmem:[%s1 + $0x58] sm:$0xf]
  %v68 = vld [vmem:[%s1 + $0x5c] sm:$0xf]
  %v69 = vld [vmem:[%s1 + $0x60] sm:$0xf]
  %v70 = vld [vmem:[%s1 + $0x64] sm:$0xf]
  %v71 = vld [vmem:[%s1 + $0x68] sm:$0xf]
  %v72 = vld [vmem:[%s1 + $0x6c] sm:$0xf]
  %v73 = vld [vmem:[%s1 + $0x70] sm:$0xf]
  %v74 = vld [vmem:[%s1 + $0x74] sm:$0xf]
  %v75 = vld [vmem:[%s1 + $0x78] sm:$0xf]
  %v76 = vld [vmem:[%s1 + $0x7c] sm:$0xf]
  %v77 = vld [vmem:[%s1 + $0x80] sm:$0xf]
  %v78 = vld [vmem:[%s1 + $0x84] sm:$0xf]
  %v79 = vld [vmem:[%s1 + $0x88] sm:$0xf]
  %v80 = vld [vmem:[%s1 + $0x8c] sm:$0xf]
  %v81 = vld [vmem:[%s1 + $0x90] sm:$0xf]
  %v82 = vld [vmem:[%s1 + $0x94] sm:$0xf]
  %v83 = vld [vmem:[%s1 + $0x98] sm:$0xf]
  %v84 = vld [vmem:[%s1 + $0x9c] sm:$0xf]
  %v85 = vld [vmem:[%s1 + $0xa0] sm:$0xf]
  %v86 = vld [vmem:[%s1 + $0xa4] sm:$0xf]
  %v87 = vld [vmem:[%s1 + $0xa8] sm:$0xf]
  %v88 = vld [vmem:[%s1 + $0xac] sm:$0xf]
  %v89 = vld [vmem:[%s1 + $0xb0] sm:$0xf]
  %v90 = vld [vmem:[%s1 + $0xb4] sm:$0xf]
  %v91 = vld [vmem:[%s1 + $0xb8] sm:$0xf]
  %v92 = vld [vmem:[%s1 + $0xbc] sm:$0xf]
  %v93 = vld [vmem:[%s1 + $0xc0] sm:$0xf]
  %v94 = vld [vmem:[%s1 + $0xc4] sm:$0xf]
  %v95 = vld [vmem:[%s1 + $0xc8] sm:$0xf]
  %v96 = vld [vmem:[%s1 + $0xcc] sm:$0xf]
  %v97 = vld [vmem:[%s1 + $0xd0] sm:$0xf]
  %v98 = vld [vmem:[%s1 + $0xd4] sm:$0xf]
  %v99 = vld [vmem:[%s1 + $0xd8] sm:$0xf]
  %v100 = vld [vmem:[%s1 + $0xdc] sm:$0xf]
  %v101 = vld [vmem:[%s1 + $0xe0] sm:$0xf]
  %v102 = vld [vmem:[%s1 + $0xe4] sm:$0xf]
  %v103 = vld [vmem:[%s1 + $0xe8] sm:$0xf]
  %v104 = vld [vmem:[%s1 + $0xec] sm:$0xf]
  %v105 = vld [vmem:[%s1 + $0xf0] sm:$0xf]
  %v106 = vld [vmem:[%s1 + $0xf4] sm:$0xf]
  %v107 = vld [vmem:[%s1 + $0xf8] sm:$0xf]
  %v108 = vld [vmem:[%s1 + $0xfc] sm:$0xf]
  %v109 = vld [vmem:[%s1 + $0x100] sm:$0xf]
  %v110 = vld [vmem:[%s1 + $0x104] sm:$0xf]
  %v111 = vld [vmem:[%s1 + $0x108] sm:$0xf]
  %v112 = vld [vmem:[%s1 + $0x10c] sm:$0xf]
  %v113 = vld [vmem:[%s1 + $0x110] sm:$0xf]
  %v114 = vld [vmem:[%s1 + $0x114] sm:$0xf]
  %v115 = vld [vmem:[%s1 + $0x118] sm:$0xf]
  %v116 = vld [vmem:[%s1 + $0x11c] sm:$0xf]
  %v117 = vld [vmem:[%s1 + $0x120] sm:$0xf]
  %v118 = vld [vmem:[%s1 + $0x124] sm:$0xf]
  %v119 = vld [vmem:[%s1 + $0x128] sm:$0xf]
  %v120 = vld [vmem:[%s1 + $0x12c] sm:$0xf]
  %v121 = vld [vmem:[%s1 + $0x130] sm:$0xf]
  %v122 = vld [vmem:[%s1 + $0x134] sm:$0xf]
  %v123 = vld [vmem:[%s1 + $0x138] sm:$0xf]
  %v124 = vld [vmem:[%s1 + $0x13c] sm:$0xf]
  %v125 = vld [vmem:[%s1 + $0x140] sm:$0xf]
  %v126 = vld [vmem:[%s1 + $0x144] sm:$0xf]
  %v127 = vld [vmem:[%s1 + $0x148] sm:$0xf]
  %v128 = vld [vmem:[%s1 + $0x14c] sm:$0xf]
  %v129 = vld [vmem:[%s1 + $0x150] sm:$0xf]
  %v130 = vld [vmem:[%s1 + $0x154] sm:$0xf]
  %v131 = vld [vmem:[%s1 + $0x158] sm:$0xf]
  %v132 = vld [vmem:[%s1 + $0x15c] sm:$0xf]
  %v133 = vld [vmem:[%s1 + $0x160] sm:$0xf]
  %v134 = vld [vmem:[%s1 + $0x164] sm:$0xf]
  %v135 = vld [vmem:[%s1 + $0x168] sm:$0xf]
  %v136 = vld [vmem:[%s1 + $0x16c] sm:$0xf]
  %v137 = vld [vmem:[%s1 + $0x170] sm:$0xf]
  %v138 = vld [vmem:[%s1 + $0x174] sm:$0xf]
  %v139 = vld [vmem:[%s1 + $0x178] sm:$0xf]
  %v140 = vld [vmem:[%s1 + $0x17c] sm:$0xf]
  %v141 = vld [vmem:[%s1 + $0x180] sm:$0xf]
  %v142 = vld [vmem:[%s1 + $0x184] sm:$0xf]
  %v143 = vld [vmem:[%s1 + $0x188] sm:$0xf]
  %v144 = vld [vmem:[%s1 + $0x18c] sm:$0xf]
  %v145 = vld [vmem:[%s1 + $0x190] sm:$0xf]
  %v146 = vld [vmem:[%s1 + $0x194] sm:$0xf]
  %v147 = vld [vmem:[%s1 + $0x198] sm:$0xf]
  %v148 = vld [vmem:[%s1 + $0x19c] sm:$0xf]
  %v149 = vld [vmem:[%s1 + $0x1a0] sm:$0xf]
  %v150 = vld [vmem:[%s1 + $0x1a4] sm:$0xf]
  %v151 = vld [vmem:[%s1 + $0x1a8] sm:$0xf]
  %v152 = vld [vmem:[%s1 + $0x1ac] sm:$0xf]
  %v153 = vld [vmem:[%s1 + $0x1b0] sm:$0xf]
  %v154 = vld [vmem:[%s1 + $0x1b4] sm:$0xf]
  %v155 = vld [vmem:[%s1 + $0x1b8] sm:$0xf]
  %v156 = vld [vmem:[%s1 + $0x1bc] sm:$0xf]
  %v157 = vld [vmem:[%s1 + $0x1c0] sm:$0xf]
  %v158 = vld [vmem:[%s1 + $0x1c4] sm:$0xf]
  %v159 = vld [vmem:[%s1 + $0x1c8] sm:$0xf]
  %v160 = vld [vmem:[%s1 + $0x1cc] sm:$0xf]
  %v161 = vld [vmem:[%s1 + $0x1d0] sm:$0xf]
  %v162 = vld [vmem:[%s1 + $0x1d4] sm:$0xf]
  %v163 = vld [vmem:[%s1 + $0x1d8] sm:$0xf]
  %v164 = vld [vmem:[%s1 + $0x1dc] sm:$0xf]
  %v165 = vld [vmem:[%s1 + $0x1e0] sm:$0xf]
  %v166 = vld [vmem:[%s1 + $0x1e4] sm:$0xf]
  %v167 = vld [vmem:[%s1 + $0x1e8] sm:$0xf]
  %v168 = vld [vmem:[%s1 + $0x1ec] sm:$0xf]
  %v169 = vld [vmem:[%s1 + $0x1f0] sm:$0xf]
  %v170 = vld [vmem:[%s1 + $0x1f4] sm:$0xf]
  %v171 = vld [vmem:[%s1 + $0x1f8] sm:$0xf]
  %v172 = vld [vmem:[%s1 + $0x1fc] sm:$0xf]
  %v173 = vld [vmem:[%s1 + $0x200] sm:$0xf]
  %v174 = vld [vmem:[%s1 + $0x204] sm:$0xf]
  %v175 = vld [vmem:[%s1 + $0x208] sm:$0xf]
  %v176 = vld [vmem:[%s1 + $0x20c] sm:$0xf]
  %v177 = vld [vmem:[%s1 + $0x210] sm:$0xf]
  %v178 = vld [vmem:[%s1 + $0x214] sm:$0xf]
  %v179 = vld [vmem:[%s1 + $0x218] sm:$0xf]
  %v180 = vld [vmem:[%s1 + $0x21c] sm:$0xf]
  %v181 = vld [vmem:[%s1 + $0x220] sm:$0xf]
  %v182 = vld [vmem:[%s1 + $0x224] sm:$0xf]
  %v183 = vld [vmem:[%s1 + $0x228] sm:$0xf]
  %v184 = vld [vmem:[%s1 + $0x22c] sm:$0xf]
  %v185 = vld [vmem:[%s1 + $0x230] sm:$0xf]
  %v186 = vld [vmem:[%s1 + $0x234] sm:$0xf]
  %v187 = vld [vmem:[%s1 + $0x238] sm:$0xf]
  %v188 = vld [vmem:[%s1 + $0x23c] sm:$0xf]
  %v189 = vld [vmem:[%s1 + $0x240] sm:$0xf]
  %v190 = vld [vmem:[%s1 + $0x244] sm:$0xf]
  %v191 = vld [vmem:[%s1 + $0x248] sm:$0xf]
  %v192 = vld [vmem:[%s1 + $0x24c] sm:$0xf]
  %v193 = vld [vmem:[%s1 + $0x250] sm:$0xf]
  %v194 = vld [vmem:[%s1 + $0x254] sm:$0xf]
  %v195 = vld [vmem:[%s1 + $0x258] sm:$0xf]
  %v196 = vld [vmem:[%s1 + $0x25c] sm:$0xf]
  %v197 = vld [vmem:[%s1 + $0x260] sm:$0xf]
  %v198 = vld [vmem:[%s1 + $0x264] sm:$0xf]
  %v199 = vld [vmem:[%s1 + $0x268] sm:$0xf]
  %v200 = vld [vmem:[%s1 + $0x26c] sm:$0xf]
  %v201 = vld [vmem:[%s1 + $0x270] sm:$0xf]
  %v202 = vld [vmem:[%s1 + $0x274] sm:$0xf]
  %v203 = vld [vmem:[%s1 + $0x278] sm:$0xf]
  %v204 = vld [vmem:[%s1 + $0x27c] sm:$0xf]
  %v205 = vld [vmem:[%s1 + $0x280] sm:$0xf]
  %v206 = vld [vmem:[%s1 + $0x284] sm:$0xf]
  %v207 = vld [vmem:[%s1 + $0x288] sm:$0xf]
  %v208 = vld [vmem:[%s1 + $0x28c] sm:$0xf]
  %v209 = vld [vmem:[%s1 + $0x290] sm:$0xf]
  %v210 = vld [vmem:[%s1 + $0x294] sm:$0xf]
  %v211 = vld [vmem:[%s1 + $0x298] sm:$0xf]
  %v212 = vld [vmem:[%s1 + $0x29c] sm:$0xf]
  %v213 = vld [vmem:[%s1 + $0x2a0] sm:$0xf]
  %v214 = vld [vmem:[%s1 + $0x2a4] sm:$0xf]
  %v215 = vld [vmem:[%s1 + $0x2a8] sm:$0xf]
  %v216 = vld [vmem:[%s1 + $0x2ac] sm:$0xf]
  %v217 = vld [vmem:[%s1 + $0x2b0] sm:$0xf]
  %v218 = vld [vmem:[%s1 + $0x2b4] sm:$0xf]
  %v219 = vld [vmem:[%s1 + $0x2b8] sm:$0xf]
  %v220 = vld [vmem:[%s1 + $0x2bc] sm:$0xf]
  %v251 = vunpack.c.l.b16 %v15
  %v252 = vunpack.c.h.b16 %v15
  %v253 = vunpack.c.l.b16 %v16
  %v254 = vunpack.c.h.b16 %v16
  %v255 = vunpack.c.l.b16 %v17
  %v256 = vunpack.c.h.b16 %v17
  %v257 = vunpack.c.l.b16 %v18
  %v258 = vunpack.c.h.b16 %v18
  %v259 = vunpack.c.l.b16 %v19
  %v260 = vunpack.c.h.b16 %v19
  %v261 = vunpack.c.l.b16 %v20
  %v262 = vunpack.c.l.b16 %v21
  %v263 = vunpack.c.h.b16 %v21
  %v264 = vunpack.c.l.b16 %v22
  %v265 = vunpack.c.h.b16 %v22
  %v266 = vunpack.c.l.b16 %v23
  %v267 = vunpack.c.h.b16 %v23
  %v268 = vunpack.c.l.b16 %v24
  %v269 = vunpack.c.h.b16 %v24
  %v270 = vunpack.c.l.b16 %v25
  %v271 = vunpack.c.h.b16 %v25
  %v272 = vunpack.c.l.b16 %v26
  %v273 = vunpack.c.l.b16 %v27
  %v274 = vunpack.c.h.b16 %v27
  %v275 = vunpack.c.l.b16 %v28
  %v276 = vunpack.c.h.b16 %v28
  %v277 = vunpack.c.l.b16 %v29
  %v278 = vunpack.c.h.b16 %v29
  %v279 = vunpack.c.l.b16 %v30
  %v280 = vunpack.c.h.b16 %v30
  %v281 = vunpack.c.l.b16 %v31
  %v282 = vunpack.c.h.b16 %v31
  %v283 = vunpack.c.l.b16 %v32
  %v284 = vunpack.c.l.b16 %v33
  %v285 = vunpack.c.h.b16 %v33
  %v286 = vunpack.c.l.b16 %v34
  %v287 = vunpack.c.h.b16 %v34
  %v288 = vunpack.c.l.b16 %v35
  %v289 = vunpack.c.h.b16 %v35
  %v290 = vunpack.c.l.b16 %v36
  %v291 = vunpack.c.h.b16 %v36
  %v292 = vunpack.c.l.b16 %v37
  %v293 = vunpack.c.h.b16 %v37
  %v294 = vunpack.c.l.b16 %v38
  %v295 = vunpack.c.l.b16 %v39
  %v296 = vunpack.c.h.b16 %v39
  %v297 = vunpack.c.l.b16 %v40
  %v298 = vunpack.c.h.b16 %v40
  %v299 = vunpack.c.l.b16 %v41
  %v300 = vunpack.c.h.b16 %v41
  %v301 = vunpack.c.l.b16 %v42
  %v302 = vunpack.c.h.b16 %v42
  %v303 = vunpack.c.l.b16 %v43
  %v304 = vunpack.c.h.b16 %v43
  %v305 = vunpack.c.l.b16 %v44
  %v306 = vpack.c.b16 %v262, %v251
  %v307 = vpack.c.b16 %v263, %v252
  %v308 = vpack.c.b16 %v264, %v253
  %v309 = vpack.c.b16 %v265, %v254
  %v310 = vpack.c.b16 %v266, %v255
  %v311 = vpack.c.b16 %v267, %v256
  %v312 = vpack.c.b16 %v268, %v257
  %v313 = vpack.c.b16 %v269, %v258
  %v314 = vpack.c.b16 %v270, %v259
  %v315 = vpack.c.b16 %v271, %v260
  %v316 = vpack.c.b16 %v272, %v261
  %v317 = vpack.c.b16 %v284, %v273
  %v318 = vpack.c.b16 %v285, %v274
  %v319 = vpack.c.b16 %v286, %v275
  %v320 = vpack.c.b16 %v287, %v276
  %v321 = vpack.c.b16 %v288, %v277
  %v322 = vpack.c.b16 %v289, %v278
  %v323 = vpack.c.b16 %v290, %v279
  %v324 = vpack.c.b16 %v291, %v280
  %v325 = vpack.c.b16 %v292, %v281
  %v326 = vpack.c.b16 %v293, %v282
  %v327 = vpack.c.b16 %v294, %v283
  %v328 = vpack.c.b16 %v295, %v295
  %v329 = vpack.c.b16 %v296, %v296
  %v330 = vpack.c.b16 %v297, %v297
  %v331 = vpack.c.b16 %v298, %v298
  %v332 = vpack.c.b16 %v299, %v299
  %v333 = vpack.c.b16 %v300, %v300
  %v334 = vpack.c.b16 %v301, %v301
  %v335 = vpack.c.b16 %v302, %v302
  %v336 = vpack.c.b16 %v303, %v303
  %v337 = vpack.c.b16 %v304, %v304
  %v338 = vpack.c.b16 %v305, %v305
  %v548 = vunpack.c.l.b16 %v45
  %v549 = vunpack.c.l.b16 %v46
  %v550 = vunpack.c.l.b16 %v47
  %v551 = vunpack.c.l.b16 %v48
  %v552 = vunpack.c.l.b16 %v49
  %v553 = vunpack.c.l.b16 %v50
  %v554 = vunpack.c.l.b16 %v51
  %v555 = vunpack.c.l.b16 %v52
  %v556 = vunpack.c.l.b16 %v53
  %v557 = vunpack.c.l.b16 %v54
  %v558 = vunpack.c.l.b16 %v55
  %v559 = vunpack.c.l.b16 %v56
  %v560 = vunpack.c.l.b16 %v57
  %v561 = vunpack.c.l.b16 %v58
  %v562 = vunpack.c.l.b16 %v59
  %v563 = vunpack.c.l.b16 %v60
  %v564 = vunpack.c.l.b16 %v61
  %v565 = vunpack.c.l.b16 %v62
  %v566 = vunpack.c.l.b16 %v63
  %v567 = vunpack.c.l.b16 %v64
  %v568 = vunpack.c.l.b16 %v65
  %v569 = vunpack.c.l.b16 %v66
  %v570 = vunpack.c.l.b16 %v67
  %v571 = vunpack.c.l.b16 %v68
  %v572 = vunpack.c.l.b16 %v69
  %v573 = vunpack.c.l.b16 %v70
  %v574 = vunpack.c.l.b16 %v71
  %v575 = vunpack.c.l.b16 %v72
  %v576 = vunpack.c.l.b16 %v73
  %v577 = vunpack.c.l.b16 %v74
  %v578 = vunpack.c.l.b16 %v75
  %v579 = vunpack.c.l.b16 %v76
  %v580 = vunpack.c.l.b16 %v77
  %v581 = vunpack.c.l.b16 %v78
  %v582 = vunpack.c.l.b16 %v79
  %v583 = vunpack.c.l.b16 %v80
  %v584 = vunpack.c.l.b16 %v81
  %v585 = vunpack.c.l.b16 %v82
  %v586 = vunpack.c.l.b16 %v83
  %v587 = vunpack.c.l.b16 %v84
  %v588 = vunpack.c.l.b16 %v85
  %v589 = vunpack.c.l.b16 %v86
  %v590 = vunpack.c.l.b16 %v87
  %v591 = vunpack.c.l.b16 %v88
  %v592 = vunpack.c.l.b16 %v89
  %v593 = vunpack.c.l.b16 %v90
  %v594 = vunpack.c.l.b16 %v91
  %v595 = vunpack.c.l.b16 %v92
  %v596 = vunpack.c.l.b16 %v93
  %v597 = vunpack.c.l.b16 %v94
  %v598 = vunpack.c.l.b16 %v95
  %v599 = vunpack.c.l.b16 %v96
  %v600 = vunpack.c.l.b16 %v97
  %v601 = vunpack.c.l.b16 %v98
  %v602 = vunpack.c.l.b16 %v99
  %v603 = vunpack.c.l.b16 %v100
  %v604 = vunpack.c.l.b16 %v101
  %v605 = vunpack.c.l.b16 %v102
  %v606 = vunpack.c.l.b16 %v103
  %v607 = vunpack.c.l.b16 %v104
  %v608 = vunpack.c.l.b16 %v105
  %v609 = vunpack.c.l.b16 %v106
  %v610 = vunpack.c.l.b16 %v107
  %v611 = vunpack.c.l.b16 %v108
  %v612 = vunpack.c.l.b16 %v109
  %v613 = vunpack.c.l.b16 %v110
  %v614 = vunpack.c.l.b16 %v111
  %v615 = vunpack.c.l.b16 %v112
  %v616 = vunpack.c.l.b16 %v113
  %v617 = vunpack.c.l.b16 %v114
  %v618 = vunpack.c.l.b16 %v115
  %v619 = vunpack.c.l.b16 %v116
  %v620 = vunpack.c.l.b16 %v117
  %v621 = vunpack.c.l.b16 %v118
  %v622 = vunpack.c.l.b16 %v119
  %v623 = vunpack.c.l.b16 %v120
  %v624 = vunpack.c.l.b16 %v121
  %v625 = vunpack.c.l.b16 %v122
  %v626 = vunpack.c.l.b16 %v123
  %v627 = vunpack.c.l.b16 %v124
  %v628 = vunpack.c.l.b16 %v125
  %v629 = vunpack.c.l.b16 %v126
  %v630 = vunpack.c.l.b16 %v127
  %v631 = vunpack.c.l.b16 %v128
  %v632 = vunpack.c.l.b16 %v129
  %v633 = vunpack.c.l.b16 %v130
  %v634 = vunpack.c.l.b16 %v131
  %v635 = vunpack.c.l.b16 %v132
  %v636 = vunpack.c.l.b16 %v133
  %v637 = vunpack.c.l.b16 %v134
  %v638 = vunpack.c.l.b16 %v135
  %v639 = vunpack.c.l.b16 %v136
  %v640 = vunpack.c.l.b16 %v137
  %v641 = vunpack.c.l.b16 %v138
  %v642 = vunpack.c.l.b16 %v139
  %v643 = vunpack.c.l.b16 %v140
  %v644 = vunpack.c.l.b16 %v141
  %v645 = vunpack.c.l.b16 %v142
  %v646 = vunpack.c.l.b16 %v143
  %v647 = vunpack.c.l.b16 %v144
  %v648 = vunpack.c.l.b16 %v145
  %v649 = vunpack.c.l.b16 %v146
  %v650 = vunpack.c.l.b16 %v147
  %v651 = vunpack.c.l.b16 %v148
  %v652 = vunpack.c.l.b16 %v149
  %v653 = vunpack.c.l.b16 %v150
  %v654 = vunpack.c.l.b16 %v151
  %v655 = vunpack.c.l.b16 %v152
  %v656 = vunpack.c.l.b16 %v153
  %v657 = vunpack.c.l.b16 %v154
  %v658 = vunpack.c.l.b16 %v155
  %v659 = vunpack.c.l.b16 %v156
  %v660 = vunpack.c.l.b16 %v157
  %v661 = vunpack.c.l.b16 %v158
  %v662 = vunpack.c.l.b16 %v159
  %v663 = vunpack.c.l.b16 %v160
  %v664 = vunpack.c.l.b16 %v161
  %v665 = vunpack.c.l.b16 %v162
  %v666 = vunpack.c.l.b16 %v163
  %v667 = vunpack.c.l.b16 %v164
  %v668 = vunpack.c.l.b16 %v165
  %v669 = vunpack.c.l.b16 %v166
  %v670 = vunpack.c.l.b16 %v167
  %v671 = vunpack.c.l.b16 %v168
  %v672 = vunpack.c.l.b16 %v169
  %v673 = vunpack.c.l.b16 %v170
  %v674 = vunpack.c.l.b16 %v171
  %v675 = vunpack.c.l.b16 %v172
  %v676 = vunpack.c.l.b16 %v173
  %v677 = vunpack.c.l.b16 %v174
  %v678 = vunpack.c.l.b16 %v175
  %v679 = vunpack.c.l.b16 %v176
  %v680 = vunpack.c.l.b16 %v177
  %v681 = vunpack.c.l.b16 %v178
  %v682 = vunpack.c.l.b16 %v179
  %v683 = vunpack.c.l.b16 %v180
  %v684 = vunpack.c.l.b16 %v181
  %v685 = vunpack.c.l.b16 %v182
  %v686 = vunpack.c.l.b16 %v183
  %v687 = vunpack.c.l.b16 %v184
  %v688 = vunpack.c.l.b16 %v185
  %v689 = vunpack.c.l.b16 %v186
  %v690 = vunpack.c.l.b16 %v187
  %v691 = vunpack.c.l.b16 %v188
  %v692 = vunpack.c.l.b16 %v189
  %v693 = vunpack.c.l.b16 %v190
  %v694 = vunpack.c.l.b16 %v191
  %v695 = vunpack.c.l.b16 %v192
  %v696 = vunpack.c.l.b16 %v193
  %v697 = vunpack.c.l.b16 %v194
  %v698 = vunpack.c.l.b16 %v195
  %v699 = vunpack.c.l.b16 %v196
  %v700 = vunpack.c.l.b16 %v197
  %v701 = vunpack.c.l.b16 %v198
  %v702 = vunpack.c.l.b16 %v199
  %v703 = vunpack.c.l.b16 %v200
  %v704 = vunpack.c.l.b16 %v201
  %v705 = vunpack.c.l.b16 %v202
  %v706 = vunpack.c.l.b16 %v203
  %v707 = vunpack.c.l.b16 %v204
  %v708 = vunpack.c.l.b16 %v205
  %v709 = vunpack.c.l.b16 %v206
  %v710 = vunpack.c.l.b16 %v207
  %v711 = vunpack.c.l.b16 %v208
  %v712 = vunpack.c.l.b16 %v209
  %v713 = vunpack.c.l.b16 %v210
  %v714 = vunpack.c.l.b16 %v211
  %v715 = vunpack.c.l.b16 %v212
  %v716 = vunpack.c.l.b16 %v213
  %v717 = vunpack.c.l.b16 %v214
  %v718 = vunpack.c.l.b16 %v215
  %v719 = vunpack.c.l.b16 %v216
  %v720 = vunpack.c.l.b16 %v217
  %v721 = vunpack.c.l.b16 %v218
  %v722 = vunpack.c.l.b16 %v219
  %v723 = vunpack.c.l.b16 %v220
  %v724 = vpack.c.b16 %v549, %v548
  %v725 = vpack.c.b16 %v551, %v550
  %v726 = vpack.c.b16 %v553, %v552
  %v727 = vpack.c.b16 %v555, %v554
  %v728 = vpack.c.b16 %v557, %v556
  %v729 = vpack.c.b16 %v559, %v558
  %v730 = vpack.c.b16 %v561, %v560
  %v731 = vpack.c.b16 %v563, %v562
  %v732 = vpack.c.b16 %v565, %v564
  %v733 = vpack.c.b16 %v567, %v566
  %v734 = vpack.c.b16 %v569, %v568
  %v735 = vpack.c.b16 %v571, %v570
  %v736 = vpack.c.b16 %v573, %v572
  %v737 = vpack.c.b16 %v575, %v574
  %v738 = vpack.c.b16 %v577, %v576
  %v739 = vpack.c.b16 %v579, %v578
  %v740 = vpack.c.b16 %v581, %v580
  %v741 = vpack.c.b16 %v583, %v582
  %v742 = vpack.c.b16 %v585, %v584
  %v743 = vpack.c.b16 %v587, %v586
  %v744 = vpack.c.b16 %v589, %v588
  %v745 = vpack.c.b16 %v591, %v590
  %v746 = vpack.c.b16 %v593, %v592
  %v747 = vpack.c.b16 %v595, %v594
  %v748 = vpack.c.b16 %v597, %v596
  %v749 = vpack.c.b16 %v599, %v598
  %v750 = vpack.c.b16 %v601, %v600
  %v751 = vpack.c.b16 %v603, %v602
  %v752 = vpack.c.b16 %v605, %v604
  %v753 = vpack.c.b16 %v607, %v606
  %v754 = vpack.c.b16 %v609, %v608
  %v755 = vpack.c.b16 %v611, %v610
  %v756 = vpack.c.b16 %v613, %v612
  %v757 = vpack.c.b16 %v615, %v614
  %v758 = vpack.c.b16 %v617, %v616
  %v759 = vpack.c.b16 %v619, %v618
  %v760 = vpack.c.b16 %v621, %v620
  %v761 = vpack.c.b16 %v623, %v622
  %v762 = vpack.c.b16 %v625, %v624
  %v763 = vpack.c.b16 %v627, %v626
  %v764 = vpack.c.b16 %v629, %v628
  %v765 = vpack.c.b16 %v631, %v630
  %v766 = vpack.c.b16 %v633, %v632
  %v767 = vpack.c.b16 %v635, %v634
  %v768 = vpack.c.b16 %v637, %v636
  %v769 = vpack.c.b16 %v639, %v638
  %v770 = vpack.c.b16 %v641, %v640
  %v771 = vpack.c.b16 %v643, %v642
  %v772 = vpack.c.b16 %v645, %v644
  %v773 = vpack.c.b16 %v647, %v646
  %v774 = vpack.c.b16 %v649, %v648
  %v775 = vpack.c.b16 %v651, %v650
  %v776 = vpack.c.b16 %v653, %v652
  %v777 = vpack.c.b16 %v655, %v654
  %v778 = vpack.c.b16 %v657, %v656
  %v779 = vpack.c.b16 %v659, %v658
  %v780 = vpack.c.b16 %v661, %v660
  %v781 = vpack.c.b16 %v663, %v662
  %v782 = vpack.c.b16 %v665, %v664
  %v783 = vpack.c.b16 %v667, %v666
  %v784 = vpack.c.b16 %v669, %v668
  %v785 = vpack.c.b16 %v671, %v670
  %v786 = vpack.c.b16 %v673, %v672
  %v787 = vpack.c.b16 %v675, %v674
  %v788 = vpack.c.b16 %v677, %v676
  %v789 = vpack.c.b16 %v679, %v678
  %v790 = vpack.c.b16 %v681, %v680
  %v791 = vpack.c.b16 %v683, %v682
  %v792 = vpack.c.b16 %v685, %v684
  %v793 = vpack.c.b16 %v687, %v686
  %v794 = vpack.c.b16 %v689, %v688
  %v795 = vpack.c.b16 %v691, %v690
  %v796 = vpack.c.b16 %v693, %v692
  %v797 = vpack.c.b16 %v695, %v694
  %v798 = vpack.c.b16 %v697, %v696
  %v799 = vpack.c.b16 %v699, %v698
  %v800 = vpack.c.b16 %v701, %v700
  %v801 = vpack.c.b16 %v703, %v702
  %v802 = vpack.c.b16 %v705, %v704
  %v803 = vpack.c.b16 %v707, %v706
  %v804 = vpack.c.b16 %v709, %v708
  %v805 = vpack.c.b16 %v711, %v710
  %v806 = vpack.c.b16 %v713, %v712
  %v807 = vpack.c.b16 %v715, %v714
  %v808 = vpack.c.b16 %v717, %v716
  %v809 = vpack.c.b16 %v719, %v718
  %v810 = vpack.c.b16 %v721, %v720
  %v811 = vpack.c.b16 %v723, %v722
  %900 = vmatprep.subr.bf16.mxu0 0
  %901 = vmatpush1.bf16.msra.mxu0 %v731
  %902 = vmatprep.subr.bf16.mxu0 0
  %903 = vmatpush1.bf16.msra.mxu0 %v730
  %904 = vmatprep.subr.bf16.mxu0 0
  %905 = vmatpush1.bf16.msra.mxu0 %v729
  %906 = vmatprep.subr.bf16.mxu0 0
  %907 = vmatpush1.bf16.msra.mxu0 %v728
  %908 = vmatprep.subr.bf16.mxu0 0
  %909 = vmatpush1.bf16.msra.mxu0 %v727
  %910 = vmatprep.subr.bf16.mxu0 0
  %911 = vmatpush1.bf16.msra.mxu0 %v726
  %912 = vmatprep.subr.bf16.mxu0 0
  %913 = vmatpush1.bf16.msra.mxu0 %v725
  %914 = vmatprep.subr.bf16.mxu0 0
  %915 = vmatpush1.bf16.msra.mxu0 %v724
  %916 = vmatprep.subr.bf16.mxu0 0
  %917 = vmatpush2.bf16.msra.mxu0 %v739
  %918 = vmatprep.subr.bf16.mxu0 0
  %919 = vmatpush2.bf16.msra.mxu0 %v738
  %920 = vmatprep.subr.bf16.mxu0 0
  %921 = vmatpush2.bf16.msra.mxu0 %v737
  %922 = vmatprep.subr.bf16.mxu0 0
  %923 = vmatpush2.bf16.msra.mxu0 %v736
  %924 = vmatprep.subr.bf16.mxu0 0
  %925 = vmatpush2.bf16.msra.mxu0 %v735
  %926 = vmatprep.subr.bf16.mxu0 0
  %927 = vmatpush2.bf16.msra.mxu0 %v734
  %928 = vmatprep.subr.bf16.mxu0 0
  %929 = vmatpush2.bf16.msra.mxu0 %v733
  %930 = vmatprep.subr.bf16.mxu0 0
  %931 = vmatpush2.bf16.msra.mxu0 %v732
  %932 = vmatprep.mubr.bf16.mxu0 %v307
  %933 = vmatmul.mubr.bf16.gmra.mxu0 %v306
  %v934 = vpop.f32.mrf.mxu0
  %v935 = vadd.f32 0.0, %v934
  %v936 = vpop.f32.mrf.mxu0
  %v937 = vpop.f32.mrf.mxu0
  %v938 = vadd.f32 0.0, %v937
  %v939 = vpop.f32.mrf.mxu0
  %940 = vmatprep.mubr.bf16.mxu0 %v318
  %941 = vmatmul.mubr.bf16.gmra.mxu0 %v317
  %v942 = vpop.f32.mrf.mxu0
  %v943 = vadd.f32 0.0, %v942
  %v944 = vpop.f32.mrf.mxu0
  %v945 = vpop.f32.mrf.mxu0
  %v946 = vadd.f32 0.0, %v945
  %v947 = vpop.f32.mrf.mxu0
  %948 = vmatprep.mubr.bf16.mxu0 %v329
  %949 = vmatmul.mubr.bf16.gmra.mxu0 %v328
  %v950 = vpop.f32.mrf.mxu0
  %v951 = vadd.f32 0.0, %v950
  %v952 = vpop.f32.mrf.mxu0
  %v953 = vpop.f32.mrf.mxu0
  %v954 = vpop.f32.mrf.mxu0
  %955 = vdwg.mxu0
  %956 = vmatprep.subr.bf16.mxu0 0
  %957 = vmatpush1.bf16.msra.mxu0 %v747
  %958 = vmatprep.subr.bf16.mxu0 0
  %959 = vmatpush1.bf16.msra.mxu0 %v746
  %960 = vmatprep.subr.bf16.mxu0 0
  %961 = vmatpush1.bf16.msra.mxu0 %v745
  %962 = vmatprep.subr.bf16.mxu0 0
  %963 = vmatpush1.bf16.msra.mxu0 %v744
  %964 = vmatprep.subr.bf16.mxu0 0
  %965 = vmatpush1.bf16.msra.mxu0 %v743
  %966 = vmatprep.subr.bf16.mxu0 0
  %967 = vmatpush1.bf16.msra.mxu0 %v742
  %968 = vmatprep.subr.bf16.mxu0 0
  %969 = vmatpush1.bf16.msra.mxu0 %v741
  %970 = vmatprep.subr.bf16.mxu0 0
  %971 = vmatpush1.bf16.msra.mxu0 %v740
  %972 = vmatprep.subr.bf16.mxu0 0
  %973 = vmatpush2.bf16.msra.mxu0 %v755
  %974 = vmatprep.subr.bf16.mxu0 0
  %975 = vmatpush2.bf16.msra.mxu0 %v754
  %976 = vmatprep.subr.bf16.mxu0 0
  %977 = vmatpush2.bf16.msra.mxu0 %v753
  %978 = vmatprep.subr.bf16.mxu0 0
  %979 = vmatpush2.bf16.msra.mxu0 %v752
  %980 = vmatprep.subr.bf16.mxu0 0
  %981 = vmatpush2.bf16.msra.mxu0 %v751
  %982 = vmatprep.subr.bf16.mxu0 0
  %983 = vmatpush2.bf16.msra.mxu0 %v750
  %984 = vmatprep.subr.bf16.mxu0 0
  %985 = vmatpush2.bf16.msra.mxu0 %v749
  %986 = vmatprep.subr.bf16.mxu0 0
  %987 = vmatpush2.bf16.msra.mxu0 %v748
  %988 = vmatprep.mubr.bf16.mxu0 %v309
  %989 = vmatmul.mubr.bf16.gmra.mxu0 %v308
  %v990 = vpop.f32.mrf.mxu0
  %v991 = vadd.f32 %v935, %v990
  %v992 = vpop.f32.mrf.mxu0
  %v993 = vpop.f32.mrf.mxu0
  %v994 = vadd.f32 %v938, %v993
  %v995 = vpop.f32.mrf.mxu0
  %996 = vmatprep.mubr.bf16.mxu0 %v320
  %997 = vmatmul.mubr.bf16.gmra.mxu0 %v319
  %v998 = vpop.f32.mrf.mxu0
  %v999 = vadd.f32 %v943, %v998
  %v1000 = vpop.f32.mrf.mxu0
  %v1001 = vpop.f32.mrf.mxu0
  %v1002 = vadd.f32 %v946, %v1001
  %v1003 = vpop.f32.mrf.mxu0
  %1004 = vmatprep.mubr.bf16.mxu0 %v331
  %1005 = vmatmul.mubr.bf16.gmra.mxu0 %v330
  %v1006 = vpop.f32.mrf.mxu0
  %v1007 = vadd.f32 %v951, %v1006
  %v1008 = vpop.f32.mrf.mxu0
  %v1009 = vpop.f32.mrf.mxu0
  %v1010 = vpop.f32.mrf.mxu0
  %1011 = vdwg.mxu0
  %1012 = vmatprep.subr.bf16.mxu0 0
  %1013 = vmatpush1.bf16.msra.mxu0 %v763
  %1014 = vmatprep.subr.bf16.mxu0 0
  %1015 = vmatpush1.bf16.msra.mxu0 %v762
  %1016 = vmatprep.subr.bf16.mxu0 0
  %1017 = vmatpush1.bf16.msra.mxu0 %v761
  %1018 = vmatprep.subr.bf16.mxu0 0
  %1019 = vmatpush1.bf16.msra.mxu0 %v760
  %1020 = vmatprep.subr.bf16.mxu0 0
  %1021 = vmatpush1.bf16.msra.mxu0 %v759
  %1022 = vmatprep.subr.bf16.mxu0 0
  %1023 = vmatpush1.bf16.msra.mxu0 %v758
  %1024 = vmatprep.subr.bf16.mxu0 0
  %1025 = vmatpush1.bf16.msra.mxu0 %v757
  %1026 = vmatprep.subr.bf16.mxu0 0
  %1027 = vmatpush1.bf16.msra.mxu0 %v756
  %1028 = vmatprep.subr.bf16.mxu0 0
  %1029 = vmatpush2.bf16.msra.mxu0 %v771
  %1030 = vmatprep.subr.bf16.mxu0 0
  %1031 = vmatpush2.bf16.msra.mxu0 %v770
  %1032 = vmatprep.subr.bf16.mxu0 0
  %1033 = vmatpush2.bf16.msra.mxu0 %v769
  %1034 = vmatprep.subr.bf16.mxu0 0
  %1035 = vmatpush2.bf16.msra.mxu0 %v768
  %1036 = vmatprep.subr.bf16.mxu0 0
  %1037 = vmatpush2.bf16.msra.mxu0 %v767
  %1038 = vmatprep.subr.bf16.mxu0 0
  %1039 = vmatpush2.bf16.msra.mxu0 %v766
  %1040 = vmatprep.subr.bf16.mxu0 0
  %1041 = vmatpush2.bf16.msra.mxu0 %v765
  %1042 = vmatprep.subr.bf16.mxu0 0
  %1043 = vmatpush2.bf16.msra.mxu0 %v764
  %1044 = vmatprep.mubr.bf16.mxu0 %v311
  %1045 = vmatmul.mubr.bf16.gmra.mxu0 %v310
  %v1046 = vpop.f32.mrf.mxu0
  %v1047 = vadd.f32 %v991, %v1046
  %v1048 = vpop.f32.mrf.mxu0
  %v1049 = vpop.f32.mrf.mxu0
  %v1050 = vadd.f32 %v994, %v1049
  %v1051 = vpop.f32.mrf.mxu0
  %1052 = vmatprep.mubr.bf16.mxu0 %v322
  %1053 = vmatmul.mubr.bf16.gmra.mxu0 %v321
  %v1054 = vpop.f32.mrf.mxu0
  %v1055 = vadd.f32 %v999, %v1054
  %v1056 = vpop.f32.mrf.mxu0
  %v1057 = vpop.f32.mrf.mxu0
  %v1058 = vadd.f32 %v1002, %v1057
  %v1059 = vpop.f32.mrf.mxu0
  %1060 = vmatprep.mubr.bf16.mxu0 %v333
  %1061 = vmatmul.mubr.bf16.gmra.mxu0 %v332
  %v1062 = vpop.f32.mrf.mxu0
  %v1063 = vadd.f32 %v1007, %v1062
  %v1064 = vpop.f32.mrf.mxu0
  %v1065 = vpop.f32.mrf.mxu0
  %v1066 = vpop.f32.mrf.mxu0
  %1067 = vdwg.mxu0
  %1068 = vmatprep.subr.bf16.mxu0 0
  %1069 = vmatpush1.bf16.msra.mxu0 %v779
  %1070 = vmatprep.subr.bf16.mxu0 0
  %1071 = vmatpush1.bf16.msra.mxu0 %v778
  %1072 = vmatprep.subr.bf16.mxu0 0
  %1073 = vmatpush1.bf16.msra.mxu0 %v777
  %1074 = vmatprep.subr.bf16.mxu0 0
  %1075 = vmatpush1.bf16.msra.mxu0 %v776
  %1076 = vmatprep.subr.bf16.mxu0 0
  %1077 = vmatpush1.bf16.msra.mxu0 %v775
  %1078 = vmatprep.subr.bf16.mxu0 0
  %1079 = vmatpush1.bf16.msra.mxu0 %v774
  %1080 = vmatprep.subr.bf16.mxu0 0
  %1081 = vmatpush1.bf16.msra.mxu0 %v773
  %1082 = vmatprep.subr.bf16.mxu0 0
  %1083 = vmatpush1.bf16.msra.mxu0 %v772
  %1084 = vmatprep.subr.bf16.mxu0 0
  %1085 = vmatpush2.bf16.msra.mxu0 %v787
  %1086 = vmatprep.subr.bf16.mxu0 0
  %1087 = vmatpush2.bf16.msra.mxu0 %v786
  %1088 = vmatprep.subr.bf16.mxu0 0
  %1089 = vmatpush2.bf16.msra.mxu0 %v785
  %1090 = vmatprep.subr.bf16.mxu0 0
  %1091 = vmatpush2.bf16.msra.mxu0 %v784
  %1092 = vmatprep.subr.bf16.mxu0 0
  %1093 = vmatpush2.bf16.msra.mxu0 %v783
  %1094 = vmatprep.subr.bf16.mxu0 0
  %1095 = vmatpush2.bf16.msra.mxu0 %v782
  %1096 = vmatprep.subr.bf16.mxu0 0
  %1097 = vmatpush2.bf16.msra.mxu0 %v781
  %1098 = vmatprep.subr.bf16.mxu0 0
  %1099 = vmatpush2.bf16.msra.mxu0 %v780
  %1100 = vmatprep.mubr.bf16.mxu0 %v313
  %1101 = vmatmul.mubr.bf16.gmra.mxu0 %v312
  %v1102 = vpop.f32.mrf.mxu0
  %v1103 = vadd.f32 %v1047, %v1102
  %v1104 = vpop.f32.mrf.mxu0
  %v1105 = vpop.f32.mrf.mxu0
  %v1106 = vadd.f32 %v1050, %v1105
  %v1107 = vpop.f32.mrf.mxu0
  %1108 = vmatprep.mubr.bf16.mxu0 %v324
  %1109 = vmatmul.mubr.bf16.gmra.mxu0 %v323
  %v1110 = vpop.f32.mrf.mxu0
  %v1111 = vadd.f32 %v1055, %v1110
  %v1112 = vpop.f32.mrf.mxu0
  %v1113 = vpop.f32.mrf.mxu0
  %v1114 = vadd.f32 %v1058, %v1113
  %v1115 = vpop.f32.mrf.mxu0
  %1116 = vmatprep.mubr.bf16.mxu0 %v335
  %1117 = vmatmul.mubr.bf16.gmra.mxu0 %v334
  %v1118 = vpop.f32.mrf.mxu0
  %v1119 = vadd.f32 %v1063, %v1118
  %v1120 = vpop.f32.mrf.mxu0
  %v1121 = vpop.f32.mrf.mxu0
  %v1122 = vpop.f32.mrf.mxu0
  %1123 = vdwg.mxu0
  %1124 = vmatprep.subr.bf16.mxu0 0
  %1125 = vmatpush1.bf16.msra.mxu0 %v795
  %1126 = vmatprep.subr.bf16.mxu0 0
  %1127 = vmatpush1.bf16.msra.mxu0 %v794
  %1128 = vmatprep.subr.bf16.mxu0 0
  %1129 = vmatpush1.bf16.msra.mxu0 %v793
  %1130 = vmatprep.subr.bf16.mxu0 0
  %1131 = vmatpush1.bf16.msra.mxu0 %v792
  %1132 = vmatprep.subr.bf16.mxu0 0
  %1133 = vmatpush1.bf16.msra.mxu0 %v791
  %1134 = vmatprep.subr.bf16.mxu0 0
  %1135 = vmatpush1.bf16.msra.mxu0 %v790
  %1136 = vmatprep.subr.bf16.mxu0 0
  %1137 = vmatpush1.bf16.msra.mxu0 %v789
  %1138 = vmatprep.subr.bf16.mxu0 0
  %1139 = vmatpush1.bf16.msra.mxu0 %v788
  %1140 = vmatprep.subr.bf16.mxu0 0
  %1141 = vmatpush2.bf16.msra.mxu0 %v803
  %1142 = vmatprep.subr.bf16.mxu0 0
  %1143 = vmatpush2.bf16.msra.mxu0 %v802
  %1144 = vmatprep.subr.bf16.mxu0 0
  %1145 = vmatpush2.bf16.msra.mxu0 %v801
  %1146 = vmatprep.subr.bf16.mxu0 0
  %1147 = vmatpush2.bf16.msra.mxu0 %v800
  %1148 = vmatprep.subr.bf16.mxu0 0
  %1149 = vmatpush2.bf16.msra.mxu0 %v799
  %1150 = vmatprep.subr.bf16.mxu0 0
  %1151 = vmatpush2.bf16.msra.mxu0 %v798
  %1152 = vmatprep.subr.bf16.mxu0 0
  %1153 = vmatpush2.bf16.msra.mxu0 %v797
  %1154 = vmatprep.subr.bf16.mxu0 0
  %1155 = vmatpush2.bf16.msra.mxu0 %v796
  %1156 = vmatprep.mubr.bf16.mxu0 %v315
  %1157 = vmatmul.mubr.bf16.gmra.mxu0 %v314
  %v1158 = vpop.f32.mrf.mxu0
  %v1159 = vadd.f32 %v1103, %v1158
  %v1160 = vpop.f32.mrf.mxu0
  %v1161 = vpop.f32.mrf.mxu0
  %v1162 = vadd.f32 %v1106, %v1161
  %v1163 = vpop.f32.mrf.mxu0
  %1164 = vmatprep.mubr.bf16.mxu0 %v326
  %1165 = vmatmul.mubr.bf16.gmra.mxu0 %v325
  %v1166 = vpop.f32.mrf.mxu0
  %v1167 = vadd.f32 %v1111, %v1166
  %v1168 = vpop.f32.mrf.mxu0
  %v1169 = vpop.f32.mrf.mxu0
  %v1170 = vadd.f32 %v1114, %v1169
  %v1171 = vpop.f32.mrf.mxu0
  %1172 = vmatprep.mubr.bf16.mxu0 %v337
  %1173 = vmatmul.mubr.bf16.gmra.mxu0 %v336
  %v1174 = vpop.f32.mrf.mxu0
  %v1175 = vadd.f32 %v1119, %v1174
  %v1176 = vpop.f32.mrf.mxu0
  %v1177 = vpop.f32.mrf.mxu0
  %v1178 = vpop.f32.mrf.mxu0
  %1179 = vdwg.mxu0
  %1180 = vmatprep.subr.bf16.mxu0 0
  %1181 = vmatpush1.bf16.msra.mxu0 %v811
  %1182 = vmatprep.subr.bf16.mxu0 0
  %1183 = vmatpush1.bf16.msra.mxu0 %v810
  %1184 = vmatprep.subr.bf16.mxu0 0
  %1185 = vmatpush1.bf16.msra.mxu0 %v809
  %1186 = vmatprep.subr.bf16.mxu0 0
  %1187 = vmatpush1.bf16.msra.mxu0 %v808
  %1188 = vmatprep.subr.bf16.mxu0 0
  %1189 = vmatpush1.bf16.msra.mxu0 %v807
  %1190 = vmatprep.subr.bf16.mxu0 0
  %1191 = vmatpush1.bf16.msra.mxu0 %v806
  %1192 = vmatprep.subr.bf16.mxu0 0
  %1193 = vmatpush1.bf16.msra.mxu0 %v805
  %1194 = vmatprep.subr.bf16.mxu0 0
  %1195 = vmatpush1.bf16.msra.mxu0 %v804
  %1196 = vmatprep.subr.bf16.mxu0 0
  %1197 = vmatpush2.bf16.msra.mxu0 0
  %1198 = vmatprep.subr.bf16.mxu0 0
  %1199 = vmatpush2.bf16.msra.mxu0 0
  %1200 = vmatprep.subr.bf16.mxu0 0
  %1201 = vmatpush2.bf16.msra.mxu0 0
  %1202 = vmatprep.subr.bf16.mxu0 0
  %1203 = vmatpush2.bf16.msra.mxu0 0
  %1204 = vmatprep.subr.bf16.mxu0 0
  %1205 = vmatpush2.bf16.msra.mxu0 0
  %1206 = vmatprep.subr.bf16.mxu0 0
  %1207 = vmatpush2.bf16.msra.mxu0 0
  %1208 = vmatprep.subr.bf16.mxu0 0
  %1209 = vmatpush2.bf16.msra.mxu0 0
  %1210 = vmatprep.subr.bf16.mxu0 0
  %1211 = vmatpush2.bf16.msra.mxu0 0
  %1212 = vmatprep.mubr.bf16.mxu0 0
  %1213 = vmatmul.mubr.bf16.gmra.mxu0 %v316
  %v1214 = vpop.f32.mrf.mxu0
  %v1215 = vadd.f32 %v1159, %v1214
  %v1216 = vpop.f32.mrf.mxu0
  %v1217 = vpop.f32.mrf.mxu0
  %v1218 = vadd.f32 %v1162, %v1217
  %v1219 = vpop.f32.mrf.mxu0
  %1220 = vmatprep.mubr.bf16.mxu0 0
  %1221 = vmatmul.mubr.bf16.gmra.mxu0 %v327
  %v1222 = vpop.f32.mrf.mxu0
  %v1223 = vadd.f32 %v1167, %v1222
  %v1224 = vpop.f32.mrf.mxu0
  %v1225 = vpop.f32.mrf.mxu0
  %v1226 = vadd.f32 %v1170, %v1225
  %v1227 = vpop.f32.mrf.mxu0
  %1228 = vmatprep.mubr.bf16.mxu0 0
  %1229 = vmatmul.mubr.bf16.gmra.mxu0 %v338
  %v1230 = vpop.f32.mrf.mxu0
  %v1231 = vadd.f32 %v1175, %v1230
  %v1232 = vpop.f32.mrf.mxu0
  %v1233 = vpop.f32.mrf.mxu0
  %v1234 = vpop.f32.mrf.mxu0
  %1235 = vdwg.mxu0
  %1236 = vst [vmem:[%s2] sm:$0xff] %v1215
  %1237 = vst [vmem:[%s2 + $0x8] sm:$0xff] %v1218
  %1238 = vst [vmem:[%s2 + $0x10] sm:$0xff] %v1223
  %1239 = vst [vmem:[%s2 + $0x18] sm:$0xff] %v1226
  %1240 = vst [vmem:[%s2 + $0x20] sm:$0xff] %v1231
  %v1241 = vadd.f32 %v1215, %v1218
  %v1242 = vadd.f32 %v1241, %v1223
  %v1243 = vadd.f32 %v1242, %v1226
  %v1244 = vadd.f32 %v1243, %v1231
  %v1245 = vrot.slane %v1244, 4
  %v1246 = vadd.f32 %v1244, %v1245
  %v1247 = vrot.slane %v1246, 2
  %v1248 = vadd.f32 %v1246, %v1247
  %v1249 = vrot.slane %v1248, 1
  %v1250 = vadd.f32 %v1248, %v1249
  %v1251 = vmul.f32 %v1215, %v1215
  %v1252 = vmul.f32 %v1218, %v1218
  %v1253 = vmul.f32 %v1223, %v1223
  %v1254 = vmul.f32 %v1226, %v1226
  %v1255 = vmul.f32 %v1231, %v1231
  %v1256 = vadd.f32 %v1251, %v1252
  %v1257 = vadd.f32 %v1256, %v1253
  %v1258 = vadd.f32 %v1257, %v1254
  %v1259 = vadd.f32 %v1258, %v1255
  %v1260 = vrot.slane %v1259, 4
  %v1261 = vadd.f32 %v1259, %v1260
  %v1262 = vrot.slane %v1261, 2
  %v1263 = vadd.f32 %v1261, %v1262
  %v1264 = vrot.slane %v1263, 1
  %v1265 = vadd.f32 %v1263, %v1264
  %1266 = vst [vmem:[%s3] sm:$0xff] %v1250
  %1267 = vst [vmem:[%s4] sm:$0xff] %v1265
  // Predicated region
  $region10: #{linking_forward.14} parent=0 // pred_check
    _
  $region11: #{linking_forward.14} parent=0 // pred_check_branch
    %1269 = sbr.rel (0) target = $region13
  $region12: #{linking_forward.14} parent=0 // pred_region
    _
  $region13: #{linking_forward.14} parent=0 // pred_fallthru
    _
  // Predicated region
  $region14: #{linking_forward.14} parent=0 // pred_check
    _
  $region15: #{linking_forward.14} parent=0 // pred_check_branch
    %1271 = sbr.rel (0) target = $region17
  $region16: #{linking_forward.14} parent=0 // pred_region
    _
  $region17: #{linking_forward.14} parent=0 // pred_fallthru
    _
  // Predicated region
  $region18: #{linking_forward.14} parent=0 // pred_check
    _
  $region19: #{linking_forward.14} parent=0 // pred_check_branch
    %1273 = sbr.rel (0) target = $region21
  $region20: #{linking_forward.14} parent=0 // pred_region
    _
  $region21: #{linking_forward.14} parent=0 // pred_fallthru
    _
  // Predicated region
  $region22: #{linking_forward.14} parent=0 // pred_check
    _
  $region23: #{linking_forward.14} parent=0 // pred_check_branch
    %1275 = sbr.rel (0) target = $region25
  $region24: #{linking_forward.14} parent=0 // pred_region
    _
  $region25: #{linking_forward.14} parent=0 // pred_fallthru
    _
  // Predicated region
  $region26: #{linking_forward.14} parent=0 // pred_check
    _
  $region27: #{linking_forward.14} parent=0 // pred_check_branch
    %1277 = sbr.rel (0) target = $region29
  $region28: #{linking_forward.14} parent=0 // pred_region
    _
  $region29: #{linking_forward.14} parent=0 // pred_fallthru
    _
  // Predicated region
  $region30: #{linking_forward.14} parent=0 // pred_check
    _
  $region31: #{linking_forward.14} parent=0 // pred_check_branch
    %1279 = sbr.rel (0) target = $region33
  $region32: #{linking_forward.14} parent=0 // pred_region
    _
  $region33: #{linking_forward.14} parent=0 // pred_fallthru
    _

// kernel: linking_forward.16
$region0: #{linking_forward.16}
  #allocation0 [shape = 'u32[]', space=smem, size = 0x4, offset = 0x4, fixed_abs, tag = 'smem constant byte address 0x4 - core index']
  #allocation1 [shape = 'u32[144,128]{1,0:T(1,128)}', space=vmem, size = 0x12000, scoped, tag = 'internal scratch']
  %s0 = inlined_call_operand.vmem [shape: bf16[40,512], index: 0, kind: input, shape index: {}]
  %s1 = inlined_call_operand.vmem [shape: bf16[512,128], index: 1, kind: input, shape index: {}]
  %s2 = inlined_call_operand.vmem [shape: f32[40,128], index: 2, kind: output, shape index: {0}]
  %s3 = inlined_call_operand.vmem [shape: f32[1,8,128], index: 3, kind: output, shape index: {1}]
  %s4 = inlined_call_operand.vmem [shape: f32[1,8,128], index: 4, kind: output, shape index: {2}]
  %5 = xla_tuple %s2, %s3, %s4
  %s6 = sld [smem:[#allocation0]]
  $region34: #{linking_forward.16} parent=0
    _
  %s8 = ssub.s32 1, %s6
  %s9 = scalar_select 0, %s8, %s6
  // Predicated region
  $region2: #{linking_forward.16} parent=0 // pred_check
    _
  $region3: #{linking_forward.16} parent=0 // pred_check_branch
    %11 = sbr.rel (0) target = $region5
  $region4: #{linking_forward.16} parent=0 // pred_region
    _
  $region5: #{linking_forward.16} parent=0 // pred_fallthru
    _
  // Predicated region
  $region6: #{linking_forward.16} parent=0 // pred_check
    _
  $region7: #{linking_forward.16} parent=0 // pred_check_branch
    %13 = sbr.rel (0) target = $region9
  $region8: #{linking_forward.16} parent=0 // pred_region
    _
  $region9: #{linking_forward.16} parent=0 // pred_fallthru
    _
  %v15 = vld [vmem:[%s0] sm:$0xff]
  %v16 = vld [vmem:[%s0 + $0x8] sm:$0xff]
  %v17 = vld [vmem:[%s0 + $0x10] sm:$0xff]
  %v18 = vld [vmem:[%s0 + $0x18] sm:$0xff]
  %v19 = vld [vmem:[%s0 + $0x20] sm:$0xff]
  %v20 = vld [vmem:[%s0 + $0x28] sm:$0xff]
  %v21 = vld [vmem:[%s0 + $0x30] sm:$0xff]
  %v22 = vld [vmem:[%s0 + $0x38] sm:$0xff]
  %v23 = vld [vmem:[%s0 + $0x40] sm:$0xff]
  %v24 = vld [vmem:[%s0 + $0x48] sm:$0xff]
  %v25 = vld [vmem:[%s1] sm:$0xf]
  %v26 = vld [vmem:[%s1 + $0x4] sm:$0xf]
  %v27 = vld [vmem:[%s1 + $0x8] sm:$0xf]
  %v28 = vld [vmem:[%s1 + $0xc] sm:$0xf]
  %v29 = vld [vmem:[%s1 + $0x10] sm:$0xf]
  %v30 = vld [vmem:[%s1 + $0x14] sm:$0xf]
  %v31 = vld [vmem:[%s1 + $0x18] sm:$0xf]
  %v32 = vld [vmem:[%s1 + $0x1c] sm:$0xf]
  %v33 = vld [vmem:[%s1 + $0x20] sm:$0xf]
  %v34 = vld [vmem:[%s1 + $0x24] sm:$0xf]
  %v35 = vld [vmem:[%s1 + $0x28] sm:$0xf]
  %v36 = vld [vmem:[%s1 + $0x2c] sm:$0xf]
  %v37 = vld [vmem:[%s1 + $0x30] sm:$0xf]
  %v38 = vld [vmem:[%s1 + $0x34] sm:$0xf]
  %v39 = vld [vmem:[%s1 + $0x38] sm:$0xf]
  %v40 = vld [vmem:[%s1 + $0x3c] sm:$0xf]
  %v41 = vld [vmem:[%s1 + $0x40] sm:$0xf]
  %v42 = vld [vmem:[%s1 + $0x44] sm:$0xf]
  %v43 = vld [vmem:[%s1 + $0x48] sm:$0xf]
  %v44 = vld [vmem:[%s1 + $0x4c] sm:$0xf]
  %v45 = vld [vmem:[%s1 + $0x50] sm:$0xf]
  %v46 = vld [vmem:[%s1 + $0x54] sm:$0xf]
  %v47 = vld [vmem:[%s1 + $0x58] sm:$0xf]
  %v48 = vld [vmem:[%s1 + $0x5c] sm:$0xf]
  %v49 = vld [vmem:[%s1 + $0x60] sm:$0xf]
  %v50 = vld [vmem:[%s1 + $0x64] sm:$0xf]
  %v51 = vld [vmem:[%s1 + $0x68] sm:$0xf]
  %v52 = vld [vmem:[%s1 + $0x6c] sm:$0xf]
  %v53 = vld [vmem:[%s1 + $0x70] sm:$0xf]
  %v54 = vld [vmem:[%s1 + $0x74] sm:$0xf]
  %v55 = vld [vmem:[%s1 + $0x78] sm:$0xf]
  %v56 = vld [vmem:[%s1 + $0x7c] sm:$0xf]
  %v57 = vld [vmem:[%s1 + $0x80] sm:$0xf]
  %v58 = vld [vmem:[%s1 + $0x84] sm:$0xf]
  %v59 = vld [vmem:[%s1 + $0x88] sm:$0xf]
  %v60 = vld [vmem:[%s1 + $0x8c] sm:$0xf]
  %v61 = vld [vmem:[%s1 + $0x90] sm:$0xf]
  %v62 = vld [vmem:[%s1 + $0x94] sm:$0xf]
  %v63 = vld [vmem:[%s1 + $0x98] sm:$0xf]
  %v64 = vld [vmem:[%s1 + $0x9c] sm:$0xf]
  %v65 = vld [vmem:[%s1 + $0xa0] sm:$0xf]
  %v66 = vld [vmem:[%s1 + $0xa4] sm:$0xf]
  %v67 = vld [vmem:[%s1 + $0xa8] sm:$0xf]
  %v68 = vld [vmem:[%s1 + $0xac] sm:$0xf]
  %v69 = vld [vmem:[%s1 + $0xb0] sm:$0xf]
  %v70 = vld [vmem:[%s1 + $0xb4] sm:$0xf]
  %v71 = vld [vmem:[%s1 + $0xb8] sm:$0xf]
  %v72 = vld [vmem:[%s1 + $0xbc] sm:$0xf]
  %v73 = vld [vmem:[%s1 + $0xc0] sm:$0xf]
  %v74 = vld [vmem:[%s1 + $0xc4] sm:$0xf]
  %v75 = vld [vmem:[%s1 + $0xc8] sm:$0xf]
  %v76 = vld [vmem:[%s1 + $0xcc] sm:$0xf]
  %v77 = vld [vmem:[%s1 + $0xd0] sm:$0xf]
  %v78 = vld [vmem:[%s1 + $0xd4] sm:$0xf]
  %v79 = vld [vmem:[%s1 + $0xd8] sm:$0xf]
  %v80 = vld [vmem:[%s1 + $0xdc] sm:$0xf]
  %v81 = vld [vmem:[%s1 + $0xe0] sm:$0xf]
  %v82 = vld [vmem:[%s1 + $0xe4] sm:$0xf]
  %v83 = vld [vmem:[%s1 + $0xe8] sm:$0xf]
  %v84 = vld [vmem:[%s1 + $0xec] sm:$0xf]
  %v85 = vld [vmem:[%s1 + $0xf0] sm:$0xf]
  %v86 = vld [vmem:[%s1 + $0xf4] sm:$0xf]
  %v87 = vld [vmem:[%s1 + $0xf8] sm:$0xf]
  %v88 = vld [vmem:[%s1 + $0xfc] sm:$0xf]
  %v99 = vunpack.c.l.b16 %v15
  %v100 = vunpack.c.h.b16 %v15
  %v101 = vunpack.c.l.b16 %v16
  %v102 = vunpack.c.h.b16 %v16
  %v103 = vunpack.c.l.b16 %v17
  %v104 = vunpack.c.h.b16 %v17
  %v105 = vunpack.c.l.b16 %v18
  %v106 = vunpack.c.h.b16 %v18
  %v107 = vunpack.c.l.b16 %v19
  %v108 = vunpack.c.h.b16 %v19
  %v109 = vunpack.c.l.b16 %v20
  %v110 = vunpack.c.h.b16 %v20
  %v111 = vunpack.c.l.b16 %v21
  %v112 = vunpack.c.h.b16 %v21
  %v113 = vunpack.c.l.b16 %v22
  %v114 = vunpack.c.h.b16 %v22
  %v115 = vunpack.c.l.b16 %v23
  %v116 = vunpack.c.h.b16 %v23
  %v117 = vunpack.c.l.b16 %v24
  %v118 = vunpack.c.h.b16 %v24
  %v119 = vpack.c.b16 %v103, %v99
  %v120 = vpack.c.b16 %v104, %v100
  %v121 = vpack.c.b16 %v105, %v101
  %v122 = vpack.c.b16 %v106, %v102
  %v123 = vpack.c.b16 %v111, %v107
  %v124 = vpack.c.b16 %v112, %v108
  %v125 = vpack.c.b16 %v113, %v109
  %v126 = vpack.c.b16 %v114, %v110
  %v127 = vpack.c.b16 %v115, %v115
  %v128 = vpack.c.b16 %v116, %v116
  %v129 = vpack.c.b16 %v117, %v117
  %v130 = vpack.c.b16 %v118, %v118
  %v207 = vunpack.c.l.b16 %v25
  %v208 = vunpack.c.l.b16 %v26
  %v209 = vunpack.c.l.b16 %v27
  %v210 = vunpack.c.l.b16 %v28
  %v211 = vunpack.c.l.b16 %v29
  %v212 = vunpack.c.l.b16 %v30
  %v213 = vunpack.c.l.b16 %v31
  %v214 = vunpack.c.l.b16 %v32
  %v215 = vunpack.c.l.b16 %v33
  %v216 = vunpack.c.l.b16 %v34
  %v217 = vunpack.c.l.b16 %v35
  %v218 = vunpack.c.l.b16 %v36
  %v219 = vunpack.c.l.b16 %v37
  %v220 = vunpack.c.l.b16 %v38
  %v221 = vunpack.c.l.b16 %v39
  %v222 = vunpack.c.l.b16 %v40
  %v223 = vunpack.c.l.b16 %v41
  %v224 = vunpack.c.l.b16 %v42
  %v225 = vunpack.c.l.b16 %v43
  %v226 = vunpack.c.l.b16 %v44
  %v227 = vunpack.c.l.b16 %v45
  %v228 = vunpack.c.l.b16 %v46
  %v229 = vunpack.c.l.b16 %v47
  %v230 = vunpack.c.l.b16 %v48
  %v231 = vunpack.c.l.b16 %v49
  %v232 = vunpack.c.l.b16 %v50
  %v233 = vunpack.c.l.b16 %v51
  %v234 = vunpack.c.l.b16 %v52
  %v235 = vunpack.c.l.b16 %v53
  %v236 = vunpack.c.l.b16 %v54
  %v237 = vunpack.c.l.b16 %v55
  %v238 = vunpack.c.l.b16 %v56
  %v239 = vunpack.c.l.b16 %v57
  %v240 = vunpack.c.l.b16 %v58
  %v241 = vunpack.c.l.b16 %v59
  %v242 = vunpack.c.l.b16 %v60
  %v243 = vunpack.c.l.b16 %v61
  %v244 = vunpack.c.l.b16 %v62
  %v245 = vunpack.c.l.b16 %v63
  %v246 = vunpack.c.l.b16 %v64
  %v247 = vunpack.c.l.b16 %v65
  %v248 = vunpack.c.l.b16 %v66
  %v249 = vunpack.c.l.b16 %v67
  %v250 = vunpack.c.l.b16 %v68
  %v251 = vunpack.c.l.b16 %v69
  %v252 = vunpack.c.l.b16 %v70
  %v253 = vunpack.c.l.b16 %v71
  %v254 = vunpack.c.l.b16 %v72
  %v255 = vunpack.c.l.b16 %v73
  %v256 = vunpack.c.l.b16 %v74
  %v257 = vunpack.c.l.b16 %v75
  %v258 = vunpack.c.l.b16 %v76
  %v259 = vunpack.c.l.b16 %v77
  %v260 = vunpack.c.l.b16 %v78
  %v261 = vunpack.c.l.b16 %v79
  %v262 = vunpack.c.l.b16 %v80
  %v263 = vunpack.c.l.b16 %v81
  %v264 = vunpack.c.l.b16 %v82
  %v265 = vunpack.c.l.b16 %v83
  %v266 = vunpack.c.l.b16 %v84
  %v267 = vunpack.c.l.b16 %v85
  %v268 = vunpack.c.l.b16 %v86
  %v269 = vunpack.c.l.b16 %v87
  %v270 = vunpack.c.l.b16 %v88
  %v271 = vpack.c.b16 %v208, %v207
  %v272 = vpack.c.b16 %v210, %v209
  %v273 = vpack.c.b16 %v212, %v211
  %v274 = vpack.c.b16 %v214, %v213
  %v275 = vpack.c.b16 %v216, %v215
  %v276 = vpack.c.b16 %v218, %v217
  %v277 = vpack.c.b16 %v220, %v219
  %v278 = vpack.c.b16 %v222, %v221
  %v279 = vpack.c.b16 %v224, %v223
  %v280 = vpack.c.b16 %v226, %v225
  %v281 = vpack.c.b16 %v228, %v227
  %v282 = vpack.c.b16 %v230, %v229
  %v283 = vpack.c.b16 %v232, %v231
  %v284 = vpack.c.b16 %v234, %v233
  %v285 = vpack.c.b16 %v236, %v235
  %v286 = vpack.c.b16 %v238, %v237
  %v287 = vpack.c.b16 %v240, %v239
  %v288 = vpack.c.b16 %v242, %v241
  %v289 = vpack.c.b16 %v244, %v243
  %v290 = vpack.c.b16 %v246, %v245
  %v291 = vpack.c.b16 %v248, %v247
  %v292 = vpack.c.b16 %v250, %v249
  %v293 = vpack.c.b16 %v252, %v251
  %v294 = vpack.c.b16 %v254, %v253
  %v295 = vpack.c.b16 %v256, %v255
  %v296 = vpack.c.b16 %v258, %v257
  %v297 = vpack.c.b16 %v260, %v259
  %v298 = vpack.c.b16 %v262, %v261
  %v299 = vpack.c.b16 %v264, %v263
  %v300 = vpack.c.b16 %v266, %v265
  %v301 = vpack.c.b16 %v268, %v267
  %v302 = vpack.c.b16 %v270, %v269
  %335 = vmatprep.subr.bf16.mxu0 0
  %336 = vmatpush1.bf16.msra.mxu0 %v278
  %337 = vmatprep.subr.bf16.mxu0 0
  %338 = vmatpush1.bf16.msra.mxu0 %v277
  %339 = vmatprep.subr.bf16.mxu0 0
  %340 = vmatpush1.bf16.msra.mxu0 %v276
  %341 = vmatprep.subr.bf16.mxu0 0
  %342 = vmatpush1.bf16.msra.mxu0 %v275
  %343 = vmatprep.subr.bf16.mxu0 0
  %344 = vmatpush1.bf16.msra.mxu0 %v274
  %345 = vmatprep.subr.bf16.mxu0 0
  %346 = vmatpush1.bf16.msra.mxu0 %v273
  %347 = vmatprep.subr.bf16.mxu0 0
  %348 = vmatpush1.bf16.msra.mxu0 %v272
  %349 = vmatprep.subr.bf16.mxu0 0
  %350 = vmatpush1.bf16.msra.mxu0 %v271
  %351 = vmatprep.subr.bf16.mxu0 0
  %352 = vmatpush2.bf16.msra.mxu0 %v286
  %353 = vmatprep.subr.bf16.mxu0 0
  %354 = vmatpush2.bf16.msra.mxu0 %v285
  %355 = vmatprep.subr.bf16.mxu0 0
  %356 = vmatpush2.bf16.msra.mxu0 %v284
  %357 = vmatprep.subr.bf16.mxu0 0
  %358 = vmatpush2.bf16.msra.mxu0 %v283
  %359 = vmatprep.subr.bf16.mxu0 0
  %360 = vmatpush2.bf16.msra.mxu0 %v282
  %361 = vmatprep.subr.bf16.mxu0 0
  %362 = vmatpush2.bf16.msra.mxu0 %v281
  %363 = vmatprep.subr.bf16.mxu0 0
  %364 = vmatpush2.bf16.msra.mxu0 %v280
  %365 = vmatprep.subr.bf16.mxu0 0
  %366 = vmatpush2.bf16.msra.mxu0 %v279
  %367 = vmatprep.mubr.bf16.mxu0 %v120
  %368 = vmatmul.mubr.bf16.gmra.mxu0 %v119
  %v369 = vpop.f32.mrf.mxu0
  %v370 = vadd.f32 0.0, %v369
  %v371 = vpop.f32.mrf.mxu0
  %v372 = vpop.f32.mrf.mxu0
  %v373 = vadd.f32 0.0, %v372
  %v374 = vpop.f32.mrf.mxu0
  %375 = vmatprep.mubr.bf16.mxu0 %v124
  %376 = vmatmul.mubr.bf16.gmra.mxu0 %v123
  %v377 = vpop.f32.mrf.mxu0
  %v378 = vadd.f32 0.0, %v377
  %v379 = vpop.f32.mrf.mxu0
  %v380 = vpop.f32.mrf.mxu0
  %v381 = vadd.f32 0.0, %v380
  %v382 = vpop.f32.mrf.mxu0
  %383 = vmatprep.mubr.bf16.mxu0 %v128
  %384 = vmatmul.mubr.bf16.gmra.mxu0 %v127
  %v385 = vpop.f32.mrf.mxu0
  %v386 = vadd.f32 0.0, %v385
  %v387 = vpop.f32.mrf.mxu0
  %v388 = vpop.f32.mrf.mxu0
  %v389 = vpop.f32.mrf.mxu0
  %390 = vdwg.mxu0
  %391 = vmatprep.subr.bf16.mxu0 0
  %392 = vmatpush1.bf16.msra.mxu0 %v294
  %393 = vmatprep.subr.bf16.mxu0 0
  %394 = vmatpush1.bf16.msra.mxu0 %v293
  %395 = vmatprep.subr.bf16.mxu0 0
  %396 = vmatpush1.bf16.msra.mxu0 %v292
  %397 = vmatprep.subr.bf16.mxu0 0
  %398 = vmatpush1.bf16.msra.mxu0 %v291
  %399 = vmatprep.subr.bf16.mxu0 0
  %400 = vmatpush1.bf16.msra.mxu0 %v290
  %401 = vmatprep.subr.bf16.mxu0 0
  %402 = vmatpush1.bf16.msra.mxu0 %v289
  %403 = vmatprep.subr.bf16.mxu0 0
  %404 = vmatpush1.bf16.msra.mxu0 %v288
  %405 = vmatprep.subr.bf16.mxu0 0
  %406 = vmatpush1.bf16.msra.mxu0 %v287
  %407 = vmatprep.subr.bf16.mxu0 0
  %408 = vmatpush2.bf16.msra.mxu0 %v302
  %409 = vmatprep.subr.bf16.mxu0 0
  %410 = vmatpush2.bf16.msra.mxu0 %v301
  %411 = vmatprep.subr.bf16.mxu0 0
  %412 = vmatpush2.bf16.msra.mxu0 %v300
  %413 = vmatprep.subr.bf16.mxu0 0
  %414 = vmatpush2.bf16.msra.mxu0 %v299
  %415 = vmatprep.subr.bf16.mxu0 0
  %416 = vmatpush2.bf16.msra.mxu0 %v298
  %417 = vmatprep.subr.bf16.mxu0 0
  %418 = vmatpush2.bf16.msra.mxu0 %v297
  %419 = vmatprep.subr.bf16.mxu0 0
  %420 = vmatpush2.bf16.msra.mxu0 %v296
  %421 = vmatprep.subr.bf16.mxu0 0
  %422 = vmatpush2.bf16.msra.mxu0 %v295
  %423 = vmatprep.mubr.bf16.mxu0 %v122
  %424 = vmatmul.mubr.bf16.gmra.mxu0 %v121
  %v425 = vpop.f32.mrf.mxu0
  %v426 = vadd.f32 %v370, %v425
  %v427 = vpop.f32.mrf.mxu0
  %v428 = vpop.f32.mrf.mxu0
  %v429 = vadd.f32 %v373, %v428
  %v430 = vpop.f32.mrf.mxu0
  %431 = vmatprep.mubr.bf16.mxu0 %v126
  %432 = vmatmul.mubr.bf16.gmra.mxu0 %v125
  %v433 = vpop.f32.mrf.mxu0
  %v434 = vadd.f32 %v378, %v433
  %v435 = vpop.f32.mrf.mxu0
  %v436 = vpop.f32.mrf.mxu0
  %v437 = vadd.f32 %v381, %v436
  %v438 = vpop.f32.mrf.mxu0
  %439 = vmatprep.mubr.bf16.mxu0 %v130
  %440 = vmatmul.mubr.bf16.gmra.mxu0 %v129
  %v441 = vpop.f32.mrf.mxu0
  %v442 = vadd.f32 %v386, %v441
  %v443 = vpop.f32.mrf.mxu0
  %v444 = vpop.f32.mrf.mxu0
  %v445 = vpop.f32.mrf.mxu0
  %446 = vdwg.mxu0
  %447 = vst [vmem:[%s2] sm:$0xff] %v426
  %448 = vst [vmem:[%s2 + $0x8] sm:$0xff] %v429
  %449 = vst [vmem:[%s2 + $0x10] sm:$0xff] %v434
  %450 = vst [vmem:[%s2 + $0x18] sm:$0xff] %v437
  %451 = vst [vmem:[%s2 + $0x20] sm:$0xff] %v442
  %v452 = vadd.f32 %v426, %v429
  %v453 = vadd.f32 %v452, %v434
  %v454 = vadd.f32 %v453, %v437
  %v455 = vadd.f32 %v454, %v442
  %v456 = vrot.slane %v455, 4
  %v457 = vadd.f32 %v455, %v456
  %v458 = vrot.slane %v457, 2
  %v459 = vadd.f32 %v457, %v458
  %v460 = vrot.slane %v459, 1
  %v461 = vadd.f32 %v459, %v460
  %v462 = vmul.f32 %v426, %v426
  %v463 = vmul.f32 %v429, %v429
  %v464 = vmul.f32 %v434, %v434
  %v465 = vmul.f32 %v437, %v437
  %v466 = vmul.f32 %v442, %v442
  %v467 = vadd.f32 %v462, %v463
  %v468 = vadd.f32 %v467, %v464
  %v469 = vadd.f32 %v468, %v465
  %v470 = vadd.f32 %v469, %v466
  %v471 = vrot.slane %v470, 4
  %v472 = vadd.f32 %v470, %v471
  %v473 = vrot.slane %v472, 2
  %v474 = vadd.f32 %v472, %v473
  %v475 = vrot.slane %v474, 1
  %v476 = vadd.f32 %v474, %v475
  %477 = vst [vmem:[%s3] sm:$0xff] %v461
  %478 = vst [vmem:[%s4] sm:$0xff] %v476
  // Predicated region
  $region10: #{linking_forward.16} parent=0 // pred_check
    _
  $region11: #{linking_forward.16} parent=0 // pred_check_branch
    %480 = sbr.rel (0) target = $region13
  $region12: #{linking_forward.16} parent=0 // pred_region
    _
  $region13: #{linking_forward.16} parent=0 // pred_fallthru
    _
  // Predicated region
  $region14: #{linking_forward.16} parent=0 // pred_check
    _
  $region15: #{linking_forward.16} parent=0 // pred_check_branch
    %482 = sbr.rel (0) target = $region17
  $region16: #{linking_forward.16} parent=0 // pred_region
    _
  $region17: #{linking_forward.16} parent=0 // pred_fallthru
    _
  // Predicated region
  $region18: #{linking_forward.16} parent=0 // pred_check
    _
  $region19: #{linking_forward.16} parent=0 // pred_check_branch
    %484 = sbr.rel (0) target = $region21
  $region20: #{linking_forward.16} parent=0 // pred_region
    _
  $region21: #{linking_forward.16} parent=0 // pred_fallthru
    _
  // Predicated region
  $region22: #{linking_forward.16} parent=0 // pred_check
    _
  $region23: #{linking_forward.16} parent=0 // pred_check_branch
    %486 = sbr.rel (0) target = $region25
  $region24: #{linking_forward.16} parent=0 // pred_region
    _
  $region25: #{linking_forward.16} parent=0 // pred_fallthru
    _
  // Predicated region
  $region26: #{linking_forward.16} parent=0 // pred_check
    _
  $region27: #{linking_forward.16} parent=0 // pred_check_branch
    %488 = sbr.rel (0) target = $region29
  $region28: #{linking_forward.16} parent=0 // pred_region
    _
  $region29: #{linking_forward.16} parent=0 // pred_fallthru
    _
  // Predicated region
  $region30: #{linking_forward.16} parent=0 // pred_check
    _
  $region31: #{linking_forward.16} parent=0 // pred_check_branch
    %490 = sbr.rel (0) target = $region33
  $region32: #{linking_forward.16} parent=0 // pred_region
    _
  $region33: #{linking_forward.16} parent=0 // pred_fallthru
    _

// kernel: linking_forward.18
$region0: #{linking_forward.18}
  #allocation0 [shape = 'u32[]', space=smem, size = 0x4, offset = 0x4, fixed_abs, tag = 'smem constant byte address 0x4 - core index']
  #allocation1 [shape = 'u32[144,128]{1,0:T(1,128)}', space=vmem, size = 0x12000, scoped, tag = 'internal scratch']
  %s0 = inlined_call_operand.vmem [shape: bf16[40,1792], index: 0, kind: input, shape index: {}]
  %s1 = inlined_call_operand.vmem [shape: bf16[1792,128], index: 1, kind: input, shape index: {}]
  %s2 = inlined_call_operand.vmem [shape: f32[40,128], index: 2, kind: output, shape index: {0}]
  %s3 = inlined_call_operand.vmem [shape: f32[1,8,128], index: 3, kind: output, shape index: {1}]
  %s4 = inlined_call_operand.vmem [shape: f32[1,8,128], index: 4, kind: output, shape index: {2}]
  %5 = xla_tuple %s2, %s3, %s4
  %s6 = sld [smem:[#allocation0]]
  $region34: #{linking_forward.18} parent=0
    _
  %s8 = ssub.s32 1, %s6
  %s9 = scalar_select 0, %s8, %s6
  // Predicated region
  $region2: #{linking_forward.18} parent=0 // pred_check
    _
  $region3: #{linking_forward.18} parent=0 // pred_check_branch
    %11 = sbr.rel (0) target = $region5
  $region4: #{linking_forward.18} parent=0 // pred_region
    _
  $region5: #{linking_forward.18} parent=0 // pred_fallthru
    _
  // Predicated region
  $region6: #{linking_forward.18} parent=0 // pred_check
    _
  $region7: #{linking_forward.18} parent=0 // pred_check_branch
    %13 = sbr.rel (0) target = $region9
  $region8: #{linking_forward.18} parent=0 // pred_region
    _
  $region9: #{linking_forward.18} parent=0 // pred_fallthru
    _
  %v15 = vld [vmem:[%s0] sm:$0xff]
  %v16 = vld [vmem:[%s0 + $0x8] sm:$0xff]
  %v17 = vld [vmem:[%s0 + $0x10] sm:$0xff]
  %v18 = vld [vmem:[%s0 + $0x18] sm:$0xff]
  %v19 = vld [vmem:[%s0 + $0x20] sm:$0xff]
  %v20 = vld [vmem:[%s0 + $0x28] sm:$0xff]
  %v21 = vld [vmem:[%s0 + $0x30] sm:$0xff]
  %v22 = vld [vmem:[%s0 + $0x38] sm:$0xff]
  %v23 = vld [vmem:[%s0 + $0x40] sm:$0xff]
  %v24 = vld [vmem:[%s0 + $0x48] sm:$0xff]
  %v25 = vld [vmem:[%s0 + $0x50] sm:$0xff]
  %v26 = vld [vmem:[%s0 + $0x58] sm:$0xff]
  %v27 = vld [vmem:[%s0 + $0x60] sm:$0xff]
  %v28 = vld [vmem:[%s0 + $0x68] sm:$0xff]
  %v29 = vld [vmem:[%s0 + $0x70] sm:$0xff]
  %v30 = vld [vmem:[%s0 + $0x78] sm:$0xff]
  %v31 = vld [vmem:[%s0 + $0x80] sm:$0xff]
  %v32 = vld [vmem:[%s0 + $0x88] sm:$0xff]
  %v33 = vld [vmem:[%s0 + $0x90] sm:$0xff]
  %v34 = vld [vmem:[%s0 + $0x98] sm:$0xff]
  %v35 = vld [vmem:[%s0 + $0xa0] sm:$0xff]
  %v36 = vld [vmem:[%s0 + $0xa8] sm:$0xff]
  %v37 = vld [vmem:[%s0 + $0xb0] sm:$0xff]
  %v38 = vld [vmem:[%s0 + $0xb8] sm:$0xff]
  %v39 = vld [vmem:[%s0 + $0xc0] sm:$0xff]
  %v40 = vld [vmem:[%s0 + $0xc8] sm:$0xff]
  %v41 = vld [vmem:[%s0 + $0xd0] sm:$0xff]
  %v42 = vld [vmem:[%s0 + $0xd8] sm:$0xff]
  %v43 = vld [vmem:[%s0 + $0xe0] sm:$0xff]
  %v44 = vld [vmem:[%s0 + $0xe8] sm:$0xff]
  %v45 = vld [vmem:[%s0 + $0xf0] sm:$0xff]
  %v46 = vld [vmem:[%s0 + $0xf8] sm:$0xff]
  %v47 = vld [vmem:[%s0 + $0x100] sm:$0xff]
  %v48 = vld [vmem:[%s0 + $0x108] sm:$0xff]
  %v49 = vld [vmem:[%s0 + $0x110] sm:$0xff]
  %v50 = vld [vmem:[%s1] sm:$0xf]
  %v51 = vld [vmem:[%s1 + $0x4] sm:$0xf]
  %v52 = vld [vmem:[%s1 + $0x8] sm:$0xf]
  %v53 = vld [vmem:[%s1 + $0xc] sm:$0xf]
  %v54 = vld [vmem:[%s1 + $0x10] sm:$0xf]
  %v55 = vld [vmem:[%s1 + $0x14] sm:$0xf]
  %v56 = vld [vmem:[%s1 + $0x18] sm:$0xf]
  %v57 = vld [vmem:[%s1 + $0x1c] sm:$0xf]
  %v58 = vld [vmem:[%s1 + $0x20] sm:$0xf]
  %v59 = vld [vmem:[%s1 + $0x24] sm:$0xf]
  %v60 = vld [vmem:[%s1 + $0x28] sm:$0xf]
  %v61 = vld [vmem:[%s1 + $0x2c] sm:$0xf]
  %v62 = vld [vmem:[%s1 + $0x30] sm:$0xf]
  %v63 = vld [vmem:[%s1 + $0x34] sm:$0xf]
  %v64 = vld [vmem:[%s1 + $0x38] sm:$0xf]
  %v65 = vld [vmem:[%s1 + $0x3c] sm:$0xf]
  %v66 = vld [vmem:[%s1 + $0x40] sm:$0xf]
  %v67 = vld [vmem:[%s1 + $0x44] sm:$0xf]
  %v68 = vld [vmem:[%s1 + $0x48] sm:$0xf]
  %v69 = vld [vmem:[%s1 + $0x4c] sm:$0xf]
  %v70 = vld [vmem:[%s1 + $0x50] sm:$0xf]
  %v71 = vld [vmem:[%s1 + $0x54] sm:$0xf]
  %v72 = vld [vmem:[%s1 + $0x58] sm:$0xf]
  %v73 = vld [vmem:[%s1 + $0x5c] sm:$0xf]
  %v74 = vld [vmem:[%s1 + $0x60] sm:$0xf]
  %v75 = vld [vmem:[%s1 + $0x64] sm:$0xf]
  %v76 = vld [vmem:[%s1 + $0x68] sm:$0xf]
  %v77 = vld [vmem:[%s1 + $0x6c] sm:$0xf]
  %v78 = vld [vmem:[%s1 + $0x70] sm:$0xf]
  %v79 = vld [vmem:[%s1 + $0x74] sm:$0xf]
  %v80 = vld [vmem:[%s1 + $0x78] sm:$0xf]
  %v81 = vld [vmem:[%s1 + $0x7c] sm:$0xf]
  %v82 = vld [vmem:[%s1 + $0x80] sm:$0xf]
  %v83 = vld [vmem:[%s1 + $0x84] sm:$0xf]
  %v84 = vld [vmem:[%s1 + $0x88] sm:$0xf]
  %v85 = vld [vmem:[%s1 + $0x8c] sm:$0xf]
  %v86 = vld [vmem:[%s1 + $0x90] sm:$0xf]
  %v87 = vld [vmem:[%s1 + $0x94] sm:$0xf]
  %v88 = vld [vmem:[%s1 + $0x98] sm:$0xf]
  %v89 = vld [vmem:[%s1 + $0x9c] sm:$0xf]
  %v90 = vld [vmem:[%s1 + $0xa0] sm:$0xf]
  %v91 = vld [vmem:[%s1 + $0xa4] sm:$0xf]
  %v92 = vld [vmem:[%s1 + $0xa8] sm:$0xf]
  %v93 = vld [vmem:[%s1 + $0xac] sm:$0xf]
  %v94 = vld [vmem:[%s1 + $0xb0] sm:$0xf]
  %v95 = vld [vmem:[%s1 + $0xb4] sm:$0xf]
  %v96 = vld [vmem:[%s1 + $0xb8] sm:$0xf]
  %v97 = vld [vmem:[%s1 + $0xbc] sm:$0xf]
  %v98 = vld [vmem:[%s1 + $0xc0] sm:$0xf]
  %v99 = vld [vmem:[%s1 + $0xc4] sm:$0xf]
  %v100 = vld [vmem:[%s1 + $0xc8] sm:$0xf]
  %v101 = vld [vmem:[%s1 + $0xcc] sm:$0xf]
  %v102 = vld [vmem:[%s1 + $0xd0] sm:$0xf]
  %v103 = vld [vmem:[%s1 + $0xd4] sm:$0xf]
  %v104 = vld [vmem:[%s1 + $0xd8] sm:$0xf]
  %v105 = vld [vmem:[%s1 + $0xdc] sm:$0xf]
  %v106 = vld [vmem:[%s1 + $0xe0] sm:$0xf]
  %v107 = vld [vmem:[%s1 + $0xe4] sm:$0xf]
  %v108 = vld [vmem:[%s1 + $0xe8] sm:$0xf]
  %v109 = vld [vmem:[%s1 + $0xec] sm:$0xf]
  %v110 = vld [vmem:[%s1 + $0xf0] sm:$0xf]
  %v111 = vld [vmem:[%s1 + $0xf4] sm:$0xf]
  %v112 = vld [vmem:[%s1 + $0xf8] sm:$0xf]
  %v113 = vld [vmem:[%s1 + $0xfc] sm:$0xf]
  %v114 = vld [vmem:[%s1 + $0x100] sm:$0xf]
  %v115 = vld [vmem:[%s1 + $0x104] sm:$0xf]
  %v116 = vld [vmem:[%s1 + $0x108] sm:$0xf]
  %v117 = vld [vmem:[%s1 + $0x10c] sm:$0xf]
  %v118 = vld [vmem:[%s1 + $0x110] sm:$0xf]
  %v119 = vld [vmem:[%s1 + $0x114] sm:$0xf]
  %v120 = vld [vmem:[%s1 + $0x118] sm:$0xf]
  %v121 = vld [vmem:[%s1 + $0x11c] sm:$0xf]
  %v122 = vld [vmem:[%s1 + $0x120] sm:$0xf]
  %v123 = vld [vmem:[%s1 + $0x124] sm:$0xf]
  %v124 = vld [vmem:[%s1 + $0x128] sm:$0xf]
  %v125 = vld [vmem:[%s1 + $0x12c] sm:$0xf]
  %v126 = vld [vmem:[%s1 + $0x130] sm:$0xf]
  %v127 = vld [vmem:[%s1 + $0x134] sm:$0xf]
  %v128 = vld [vmem:[%s1 + $0x138] sm:$0xf]
  %v129 = vld [vmem:[%s1 + $0x13c] sm:$0xf]
  %v130 = vld [vmem:[%s1 + $0x140] sm:$0xf]
  %v131 = vld [vmem:[%s1 + $0x144] sm:$0xf]
  %v132 = vld [vmem:[%s1 + $0x148] sm:$0xf]
  %v133 = vld [vmem:[%s1 + $0x14c] sm:$0xf]
  %v134 = vld [vmem:[%s1 + $0x150] sm:$0xf]
  %v135 = vld [vmem:[%s1 + $0x154] sm:$0xf]
  %v136 = vld [vmem:[%s1 + $0x158] sm:$0xf]
  %v137 = vld [vmem:[%s1 + $0x15c] sm:$0xf]
  %v138 = vld [vmem:[%s1 + $0x160] sm:$0xf]
  %v139 = vld [vmem:[%s1 + $0x164] sm:$0xf]
  %v140 = vld [vmem:[%s1 + $0x168] sm:$0xf]
  %v141 = vld [vmem:[%s1 + $0x16c] sm:$0xf]
  %v142 = vld [vmem:[%s1 + $0x170] sm:$0xf]
  %v143 = vld [vmem:[%s1 + $0x174] sm:$0xf]
  %v144 = vld [vmem:[%s1 + $0x178] sm:$0xf]
  %v145 = vld [vmem:[%s1 + $0x17c] sm:$0xf]
  %v146 = vld [vmem:[%s1 + $0x180] sm:$0xf]
  %v147 = vld [vmem:[%s1 + $0x184] sm:$0xf]
  %v148 = vld [vmem:[%s1 + $0x188] sm:$0xf]
  %v149 = vld [vmem:[%s1 + $0x18c] sm:$0xf]
  %v150 = vld [vmem:[%s1 + $0x190] sm:$0xf]
  %v151 = vld [vmem:[%s1 + $0x194] sm:$0xf]
  %v152 = vld [vmem:[%s1 + $0x198] sm:$0xf]
  %v153 = vld [vmem:[%s1 + $0x19c] sm:$0xf]
  %v154 = vld [vmem:[%s1 + $0x1a0] sm:$0xf]
  %v155 = vld [vmem:[%s1 + $0x1a4] sm:$0xf]
  %v156 = vld [vmem:[%s1 + $0x1a8] sm:$0xf]
  %v157 = vld [vmem:[%s1 + $0x1ac] sm:$0xf]
  %v158 = vld [vmem:[%s1 + $0x1b0] sm:$0xf]
  %v159 = vld [vmem:[%s1 + $0x1b4] sm:$0xf]
  %v160 = vld [vmem:[%s1 + $0x1b8] sm:$0xf]
  %v161 = vld [vmem:[%s1 + $0x1bc] sm:$0xf]
  %v162 = vld [vmem:[%s1 + $0x1c0] sm:$0xf]
  %v163 = vld [vmem:[%s1 + $0x1c4] sm:$0xf]
  %v164 = vld [vmem:[%s1 + $0x1c8] sm:$0xf]
  %v165 = vld [vmem:[%s1 + $0x1cc] sm:$0xf]
  %v166 = vld [vmem:[%s1 + $0x1d0] sm:$0xf]
  %v167 = vld [vmem:[%s1 + $0x1d4] sm:$0xf]
  %v168 = vld [vmem:[%s1 + $0x1d8] sm:$0xf]
  %v169 = vld [vmem:[%s1 + $0x1dc] sm:$0xf]
  %v170 = vld [vmem:[%s1 + $0x1e0] sm:$0xf]
  %v171 = vld [vmem:[%s1 + $0x1e4] sm:$0xf]
  %v172 = vld [vmem:[%s1 + $0x1e8] sm:$0xf]
  %v173 = vld [vmem:[%s1 + $0x1ec] sm:$0xf]
  %v174 = vld [vmem:[%s1 + $0x1f0] sm:$0xf]
  %v175 = vld [vmem:[%s1 + $0x1f4] sm:$0xf]
  %v176 = vld [vmem:[%s1 + $0x1f8] sm:$0xf]
  %v177 = vld [vmem:[%s1 + $0x1fc] sm:$0xf]
  %v178 = vld [vmem:[%s1 + $0x200] sm:$0xf]
  %v179 = vld [vmem:[%s1 + $0x204] sm:$0xf]
  %v180 = vld [vmem:[%s1 + $0x208] sm:$0xf]
  %v181 = vld [vmem:[%s1 + $0x20c] sm:$0xf]
  %v182 = vld [vmem:[%s1 + $0x210] sm:$0xf]
  %v183 = vld [vmem:[%s1 + $0x214] sm:$0xf]
  %v184 = vld [vmem:[%s1 + $0x218] sm:$0xf]
  %v185 = vld [vmem:[%s1 + $0x21c] sm:$0xf]
  %v186 = vld [vmem:[%s1 + $0x220] sm:$0xf]
  %v187 = vld [vmem:[%s1 + $0x224] sm:$0xf]
  %v188 = vld [vmem:[%s1 + $0x228] sm:$0xf]
  %v189 = vld [vmem:[%s1 + $0x22c] sm:$0xf]
  %v190 = vld [vmem:[%s1 + $0x230] sm:$0xf]
  %v191 = vld [vmem:[%s1 + $0x234] sm:$0xf]
  %v192 = vld [vmem:[%s1 + $0x238] sm:$0xf]
  %v193 = vld [vmem:[%s1 + $0x23c] sm:$0xf]
  %v194 = vld [vmem:[%s1 + $0x240] sm:$0xf]
  %v195 = vld [vmem:[%s1 + $0x244] sm:$0xf]
  %v196 = vld [vmem:[%s1 + $0x248] sm:$0xf]
  %v197 = vld [vmem:[%s1 + $0x24c] sm:$0xf]
  %v198 = vld [vmem:[%s1 + $0x250] sm:$0xf]
  %v199 = vld [vmem:[%s1 + $0x254] sm:$0xf]
  %v200 = vld [vmem:[%s1 + $0x258] sm:$0xf]
  %v201 = vld [vmem:[%s1 + $0x25c] sm:$0xf]
  %v202 = vld [vmem:[%s1 + $0x260] sm:$0xf]
  %v203 = vld [vmem:[%s1 + $0x264] sm:$0xf]
  %v204 = vld [vmem:[%s1 + $0x268] sm:$0xf]
  %v205 = vld [vmem:[%s1 + $0x26c] sm:$0xf]
  %v206 = vld [vmem:[%s1 + $0x270] sm:$0xf]
  %v207 = vld [vmem:[%s1 + $0x274] sm:$0xf]
  %v208 = vld [vmem:[%s1 + $0x278] sm:$0xf]
  %v209 = vld [vmem:[%s1 + $0x27c] sm:$0xf]
  %v210 = vld [vmem:[%s1 + $0x280] sm:$0xf]
  %v211 = vld [vmem:[%s1 + $0x284] sm:$0xf]
  %v212 = vld [vmem:[%s1 + $0x288] sm:$0xf]
  %v213 = vld [vmem:[%s1 + $0x28c] sm:$0xf]
  %v214 = vld [vmem:[%s1 + $0x290] sm:$0xf]
  %v215 = vld [vmem:[%s1 + $0x294] sm:$0xf]
  %v216 = vld [vmem:[%s1 + $0x298] sm:$0xf]
  %v217 = vld [vmem:[%s1 + $0x29c] sm:$0xf]
  %v218 = vld [vmem:[%s1 + $0x2a0] sm:$0xf]
  %v219 = vld [vmem:[%s1 + $0x2a4] sm:$0xf]
  %v220 = vld [vmem:[%s1 + $0x2a8] sm:$0xf]
  %v221 = vld [vmem:[%s1 + $0x2ac] sm:$0xf]
  %v222 = vld [vmem:[%s1 + $0x2b0] sm:$0xf]
  %v223 = vld [vmem:[%s1 + $0x2b4] sm:$0xf]
  %v224 = vld [vmem:[%s1 + $0x2b8] sm:$0xf]
  %v225 = vld [vmem:[%s1 + $0x2bc] sm:$0xf]
  %v226 = vld [vmem:[%s1 + $0x2c0] sm:$0xf]
  %v227 = vld [vmem:[%s1 + $0x2c4] sm:$0xf]
  %v228 = vld [vmem:[%s1 + $0x2c8] sm:$0xf]
  %v229 = vld [vmem:[%s1 + $0x2cc] sm:$0xf]
  %v230 = vld [vmem:[%s1 + $0x2d0] sm:$0xf]
  %v231 = vld [vmem:[%s1 + $0x2d4] sm:$0xf]
  %v232 = vld [vmem:[%s1 + $0x2d8] sm:$0xf]
  %v233 = vld [vmem:[%s1 + $0x2dc] sm:$0xf]
  %v234 = vld [vmem:[%s1 + $0x2e0] sm:$0xf]
  %v235 = vld [vmem:[%s1 + $0x2e4] sm:$0xf]
  %v236 = vld [vmem:[%s1 + $0x2e8] sm:$0xf]
  %v237 = vld [vmem:[%s1 + $0x2ec] sm:$0xf]
  %v238 = vld [vmem:[%s1 + $0x2f0] sm:$0xf]
  %v239 = vld [vmem:[%s1 + $0x2f4] sm:$0xf]
  %v240 = vld [vmem:[%s1 + $0x2f8] sm:$0xf]
  %v241 = vld [vmem:[%s1 + $0x2fc] sm:$0xf]
  %v242 = vld [vmem:[%s1 + $0x300] sm:$0xf]
  %v243 = vld [vmem:[%s1 + $0x304] sm:$0xf]
  %v244 = vld [vmem:[%s1 + $0x308] sm:$0xf]
  %v245 = vld [vmem:[%s1 + $0x30c] sm:$0xf]
  %v246 = vld [vmem:[%s1 + $0x310] sm:$0xf]
  %v247 = vld [vmem:[%s1 + $0x314] sm:$0xf]
  %v248 = vld [vmem:[%s1 + $0x318] sm:$0xf]
  %v249 = vld [vmem:[%s1 + $0x31c] sm:$0xf]
  %v250 = vld [vmem:[%s1 + $0x320] sm:$0xf]
  %v251 = vld [vmem:[%s1 + $0x324] sm:$0xf]
  %v252 = vld [vmem:[%s1 + $0x328] sm:$0xf]
  %v253 = vld [vmem:[%s1 + $0x32c] sm:$0xf]
  %v254 = vld [vmem:[%s1 + $0x330] sm:$0xf]
  %v255 = vld [vmem:[%s1 + $0x334] sm:$0xf]
  %v256 = vld [vmem:[%s1 + $0x338] sm:$0xf]
  %v257 = vld [vmem:[%s1 + $0x33c] sm:$0xf]
  %v258 = vld [vmem:[%s1 + $0x340] sm:$0xf]
  %v259 = vld [vmem:[%s1 + $0x344] sm:$0xf]
  %v260 = vld [vmem:[%s1 + $0x348] sm:$0xf]
  %v261 = vld [vmem:[%s1 + $0x34c] sm:$0xf]
  %v262 = vld [vmem:[%s1 + $0x350] sm:$0xf]
  %v263 = vld [vmem:[%s1 + $0x354] sm:$0xf]
  %v264 = vld [vmem:[%s1 + $0x358] sm:$0xf]
  %v265 = vld [vmem:[%s1 + $0x35c] sm:$0xf]
  %v266 = vld [vmem:[%s1 + $0x360] sm:$0xf]
  %v267 = vld [vmem:[%s1 + $0x364] sm:$0xf]
  %v268 = vld [vmem:[%s1 + $0x368] sm:$0xf]
  %v269 = vld [vmem:[%s1 + $0x36c] sm:$0xf]
  %v270 = vld [vmem:[%s1 + $0x370] sm:$0xf]
  %v271 = vld [vmem:[%s1 + $0x374] sm:$0xf]
  %v272 = vld [vmem:[%s1 + $0x378] sm:$0xf]
  %v273 = vld [vmem:[%s1 + $0x37c] sm:$0xf]
  %v309 = vunpack.c.l.b16 %v15
  %v310 = vunpack.c.h.b16 %v15
  %v311 = vunpack.c.l.b16 %v16
  %v312 = vunpack.c.h.b16 %v16
  %v313 = vunpack.c.l.b16 %v17
  %v314 = vunpack.c.h.b16 %v17
  %v315 = vunpack.c.l.b16 %v18
  %v316 = vunpack.c.h.b16 %v18
  %v317 = vunpack.c.l.b16 %v19
  %v318 = vunpack.c.h.b16 %v19
  %v319 = vunpack.c.l.b16 %v20
  %v320 = vunpack.c.h.b16 %v20
  %v321 = vunpack.c.l.b16 %v21
  %v322 = vunpack.c.h.b16 %v21
  %v323 = vunpack.c.l.b16 %v22
  %v324 = vunpack.c.h.b16 %v22
  %v325 = vunpack.c.l.b16 %v23
  %v326 = vunpack.c.h.b16 %v23
  %v327 = vunpack.c.l.b16 %v24
  %v328 = vunpack.c.h.b16 %v24
  %v329 = vunpack.c.l.b16 %v25
  %v330 = vunpack.c.h.b16 %v25
  %v331 = vunpack.c.l.b16 %v26
  %v332 = vunpack.c.h.b16 %v26
  %v333 = vunpack.c.l.b16 %v27
  %v334 = vunpack.c.h.b16 %v27
  %v335 = vunpack.c.l.b16 %v28
  %v336 = vunpack.c.h.b16 %v28
  %v337 = vunpack.c.l.b16 %v29
  %v338 = vunpack.c.h.b16 %v29
  %v339 = vunpack.c.l.b16 %v30
  %v340 = vunpack.c.h.b16 %v30
  %v341 = vunpack.c.l.b16 %v31
  %v342 = vunpack.c.h.b16 %v31
  %v343 = vunpack.c.l.b16 %v32
  %v344 = vunpack.c.h.b16 %v32
  %v345 = vunpack.c.l.b16 %v33
  %v346 = vunpack.c.h.b16 %v33
  %v347 = vunpack.c.l.b16 %v34
  %v348 = vunpack.c.h.b16 %v34
  %v349 = vunpack.c.l.b16 %v35
  %v350 = vunpack.c.h.b16 %v35
  %v351 = vunpack.c.l.b16 %v36
  %v352 = vunpack.c.h.b16 %v36
  %v353 = vunpack.c.l.b16 %v37
  %v354 = vunpack.c.h.b16 %v37
  %v355 = vunpack.c.l.b16 %v38
  %v356 = vunpack.c.h.b16 %v38
  %v357 = vunpack.c.l.b16 %v39
  %v358 = vunpack.c.h.b16 %v39
  %v359 = vunpack.c.l.b16 %v40
  %v360 = vunpack.c.h.b16 %v40
  %v361 = vunpack.c.l.b16 %v41
  %v362 = vunpack.c.h.b16 %v41
  %v363 = vunpack.c.l.b16 %v42
  %v364 = vunpack.c.h.b16 %v42
  %v365 = vunpack.c.l.b16 %v43
  %v366 = vunpack.c.h.b16 %v43
  %v367 = vunpack.c.l.b16 %v44
  %v368 = vunpack.c.h.b16 %v44
  %v369 = vunpack.c.l.b16 %v45
  %v370 = vunpack.c.h.b16 %v45
  %v371 = vunpack.c.l.b16 %v46
  %v372 = vunpack.c.h.b16 %v46
  %v373 = vunpack.c.l.b16 %v47
  %v374 = vunpack.c.h.b16 %v47
  %v375 = vunpack.c.l.b16 %v48
  %v376 = vunpack.c.h.b16 %v48
  %v377 = vunpack.c.l.b16 %v49
  %v378 = vunpack.c.h.b16 %v49
  %v379 = vpack.c.b16 %v323, %v309
  %v380 = vpack.c.b16 %v324, %v310
  %v381 = vpack.c.b16 %v325, %v311
  %v382 = vpack.c.b16 %v326, %v312
  %v383 = vpack.c.b16 %v327, %v313
  %v384 = vpack.c.b16 %v328, %v314
  %v385 = vpack.c.b16 %v329, %v315
  %v386 = vpack.c.b16 %v330, %v316
  %v387 = vpack.c.b16 %v331, %v317
  %v388 = vpack.c.b16 %v332, %v318
  %v389 = vpack.c.b16 %v333, %v319
  %v390 = vpack.c.b16 %v334, %v320
  %v391 = vpack.c.b16 %v335, %v321
  %v392 = vpack.c.b16 %v336, %v322
  %v393 = vpack.c.b16 %v351, %v337
  %v394 = vpack.c.b16 %v352, %v338
  %v395 = vpack.c.b16 %v353, %v339
  %v396 = vpack.c.b16 %v354, %v340
  %v397 = vpack.c.b16 %v355, %v341
  %v398 = vpack.c.b16 %v356, %v342
  %v399 = vpack.c.b16 %v357, %v343
  %v400 = vpack.c.b16 %v358, %v344
  %v401 = vpack.c.b16 %v359, %v345
  %v402 = vpack.c.b16 %v360, %v346
  %v403 = vpack.c.b16 %v361, %v347
  %v404 = vpack.c.b16 %v362, %v348
  %v405 = vpack.c.b16 %v363, %v349
  %v406 = vpack.c.b16 %v364, %v350
  %v407 = vpack.c.b16 %v365, %v365
  %v408 = vpack.c.b16 %v366, %v366
  %v409 = vpack.c.b16 %v367, %v367
  %v410 = vpack.c.b16 %v368, %v368
  %v411 = vpack.c.b16 %v369, %v369
  %v412 = vpack.c.b16 %v370, %v370
  %v413 = vpack.c.b16 %v371, %v371
  %v414 = vpack.c.b16 %v372, %v372
  %v415 = vpack.c.b16 %v373, %v373
  %v416 = vpack.c.b16 %v374, %v374
  %v417 = vpack.c.b16 %v375, %v375
  %v418 = vpack.c.b16 %v376, %v376
  %v419 = vpack.c.b16 %v377, %v377
  %v420 = vpack.c.b16 %v378, %v378
  %v687 = vunpack.c.l.b16 %v50
  %v688 = vunpack.c.l.b16 %v51
  %v689 = vunpack.c.l.b16 %v52
  %v690 = vunpack.c.l.b16 %v53
  %v691 = vunpack.c.l.b16 %v54
  %v692 = vunpack.c.l.b16 %v55
  %v693 = vunpack.c.l.b16 %v56
  %v694 = vunpack.c.l.b16 %v57
  %v695 = vunpack.c.l.b16 %v58
  %v696 = vunpack.c.l.b16 %v59
  %v697 = vunpack.c.l.b16 %v60
  %v698 = vunpack.c.l.b16 %v61
  %v699 = vunpack.c.l.b16 %v62
  %v700 = vunpack.c.l.b16 %v63
  %v701 = vunpack.c.l.b16 %v64
  %v702 = vunpack.c.l.b16 %v65
  %v703 = vunpack.c.l.b16 %v66
  %v704 = vunpack.c.l.b16 %v67
  %v705 = vunpack.c.l.b16 %v68
  %v706 = vunpack.c.l.b16 %v69
  %v707 = vunpack.c.l.b16 %v70
  %v708 = vunpack.c.l.b16 %v71
  %v709 = vunpack.c.l.b16 %v72
  %v710 = vunpack.c.l.b16 %v73
  %v711 = vunpack.c.l.b16 %v74
  %v712 = vunpack.c.l.b16 %v75
  %v713 = vunpack.c.l.b16 %v76
  %v714 = vunpack.c.l.b16 %v77
  %v715 = vunpack.c.l.b16 %v78
  %v716 = vunpack.c.l.b16 %v79
  %v717 = vunpack.c.l.b16 %v80
  %v718 = vunpack.c.l.b16 %v81
  %v719 = vunpack.c.l.b16 %v82
  %v720 = vunpack.c.l.b16 %v83
  %v721 = vunpack.c.l.b16 %v84
  %v722 = vunpack.c.l.b16 %v85
  %v723 = vunpack.c.l.b16 %v86
  %v724 = vunpack.c.l.b16 %v87
  %v725 = vunpack.c.l.b16 %v88
  %v726 = vunpack.c.l.b16 %v89
  %v727 = vunpack.c.l.b16 %v90
  %v728 = vunpack.c.l.b16 %v91
  %v729 = vunpack.c.l.b16 %v92
  %v730 = vunpack.c.l.b16 %v93
  %v731 = vunpack.c.l.b16 %v94
  %v732 = vunpack.c.l.b16 %v95
  %v733 = vunpack.c.l.b16 %v96
  %v734 = vunpack.c.l.b16 %v97
  %v735 = vunpack.c.l.b16 %v98
  %v736 = vunpack.c.l.b16 %v99
  %v737 = vunpack.c.l.b16 %v100
  %v738 = vunpack.c.l.b16 %v101
  %v739 = vunpack.c.l.b16 %v102
  %v740 = vunpack.c.l.b16 %v103
  %v741 = vunpack.c.l.b16 %v104
  %v742 = vunpack.c.l.b16 %v105
  %v743 = vunpack.c.l.b16 %v106
  %v744 = vunpack.c.l.b16 %v107
  %v745 = vunpack.c.l.b16 %v108
  %v746 = vunpack.c.l.b16 %v109
  %v747 = vunpack.c.l.b16 %v110
  %v748 = vunpack.c.l.b16 %v111
  %v749 = vunpack.c.l.b16 %v112
  %v750 = vunpack.c.l.b16 %v113
  %v751 = vunpack.c.l.b16 %v114
  %v752 = vunpack.c.l.b16 %v115
  %v753 = vunpack.c.l.b16 %v116
  %v754 = vunpack.c.l.b16 %v117
  %v755 = vunpack.c.l.b16 %v118
  %v756 = vunpack.c.l.b16 %v119
  %v757 = vunpack.c.l.b16 %v120
  %v758 = vunpack.c.l.b16 %v121
  %v759 = vunpack.c.l.b16 %v122
  %v760 = vunpack.c.l.b16 %v123
  %v761 = vunpack.c.l.b16 %v124
  %v762 = vunpack.c.l.b16 %v125
  %v763 = vunpack.c.l.b16 %v126
  %v764 = vunpack.c.l.b16 %v127
  %v765 = vunpack.c.l.b16 %v128
  %v766 = vunpack.c.l.b16 %v129
  %v767 = vunpack.c.l.b16 %v130
  %v768 = vunpack.c.l.b16 %v131
  %v769 = vunpack.c.l.b16 %v132
  %v770 = vunpack.c.l.b16 %v133
  %v771 = vunpack.c.l.b16 %v134
  %v772 = vunpack.c.l.b16 %v135
  %v773 = vunpack.c.l.b16 %v136
  %v774 = vunpack.c.l.b16 %v137
  %v775 = vunpack.c.l.b16 %v138
  %v776 = vunpack.c.l.b16 %v139
  %v777 = vunpack.c.l.b16 %v140
  %v778 = vunpack.c.l.b16 %v141
  %v779 = vunpack.c.l.b16 %v142
  %v780 = vunpack.c.l.b16 %v143
  %v781 = vunpack.c.l.b16 %v144
  %v782 = vunpack.c.l.b16 %v145
  %v783 = vunpack.c.l.b16 %v146
  %v784 = vunpack.c.l.b16 %v147
  %v785 = vunpack.c.l.b16 %v148
  %v786 = vunpack.c.l.b16 %v149
  %v787 = vunpack.c.l.b16 %v150
  %v788 = vunpack.c.l.b16 %v151
  %v789 = vunpack.c.l.b16 %v152
  %v790 = vunpack.c.l.b16 %v153
  %v791 = vunpack.c.l.b16 %v154
  %v792 = vunpack.c.l.b16 %v155
  %v793 = vunpack.c.l.b16 %v156
  %v794 = vunpack.c.l.b16 %v157
  %v795 = vunpack.c.l.b16 %v158
  %v796 = vunpack.c.l.b16 %v159
  %v797 = vunpack.c.l.b16 %v160
  %v798 = vunpack.c.l.b16 %v161
  %v799 = vunpack.c.l.b16 %v162
  %v800 = vunpack.c.l.b16 %v163
  %v801 = vunpack.c.l.b16 %v164
  %v802 = vunpack.c.l.b16 %v165
  %v803 = vunpack.c.l.b16 %v166
  %v804 = vunpack.c.l.b16 %v167
  %v805 = vunpack.c.l.b16 %v168
  %v806 = vunpack.c.l.b16 %v169
  %v807 = vunpack.c.l.b16 %v170
  %v808 = vunpack.c.l.b16 %v171
  %v809 = vunpack.c.l.b16 %v172
  %v810 = vunpack.c.l.b16 %v173
  %v811 = vunpack.c.l.b16 %v174
  %v812 = vunpack.c.l.b16 %v175
  %v813 = vunpack.c.l.b16 %v176
  %v814 = vunpack.c.l.b16 %v177
  %v815 = vunpack.c.l.b16 %v178
  %v816 = vunpack.c.l.b16 %v179
  %v817 = vunpack.c.l.b16 %v180
  %v818 = vunpack.c.l.b16 %v181
  %v819 = vunpack.c.l.b16 %v182
  %v820 = vunpack.c.l.b16 %v183
  %v821 = vunpack.c.l.b16 %v184
  %v822 = vunpack.c.l.b16 %v185
  %v823 = vunpack.c.l.b16 %v186
  %v824 = vunpack.c.l.b16 %v187
  %v825 = vunpack.c.l.b16 %v188
  %v826 = vunpack.c.l.b16 %v189
  %v827 = vunpack.c.l.b16 %v190
  %v828 = vunpack.c.l.b16 %v191
  %v829 = vunpack.c.l.b16 %v192
  %v830 = vunpack.c.l.b16 %v193
  %v831 = vunpack.c.l.b16 %v194
  %v832 = vunpack.c.l.b16 %v195
  %v833 = vunpack.c.l.b16 %v196
  %v834 = vunpack.c.l.b16 %v197
  %v835 = vunpack.c.l.b16 %v198
  %v836 = vunpack.c.l.b16 %v199
  %v837 = vunpack.c.l.b16 %v200
  %v838 = vunpack.c.l.b16 %v201
  %v839 = vunpack.c.l.b16 %v202
  %v840 = vunpack.c.l.b16 %v203
  %v841 = vunpack.c.l.b16 %v204
  %v842 = vunpack.c.l.b16 %v205
  %v843 = vunpack.c.l.b16 %v206
  %v844 = vunpack.c.l.b16 %v207
  %v845 = vunpack.c.l.b16 %v208
  %v846 = vunpack.c.l.b16 %v209
  %v847 = vunpack.c.l.b16 %v210
  %v848 = vunpack.c.l.b16 %v211
  %v849 = vunpack.c.l.b16 %v212
  %v850 = vunpack.c.l.b16 %v213
  %v851 = vunpack.c.l.b16 %v214
  %v852 = vunpack.c.l.b16 %v215
  %v853 = vunpack.c.l.b16 %v216
  %v854 = vunpack.c.l.b16 %v217
  %v855 = vunpack.c.l.b16 %v218
  %v856 = vunpack.c.l.b16 %v219
  %v857 = vunpack.c.l.b16 %v220
  %v858 = vunpack.c.l.b16 %v221
  %v859 = vunpack.c.l.b16 %v222
  %v860 = vunpack.c.l.b16 %v223
  %v861 = vunpack.c.l.b16 %v224
  %v862 = vunpack.c.l.b16 %v225
  %v863 = vunpack.c.l.b16 %v226
  %v864 = vunpack.c.l.b16 %v227
  %v865 = vunpack.c.l.b16 %v228
  %v866 = vunpack.c.l.b16 %v229
  %v867 = vunpack.c.l.b16 %v230
  %v868 = vunpack.c.l.b16 %v231
  %v869 = vunpack.c.l.b16 %v232
  %v870 = vunpack.c.l.b16 %v233
  %v871 = vunpack.c.l.b16 %v234
  %v872 = vunpack.c.l.b16 %v235
  %v873 = vunpack.c.l.b16 %v236
  %v874 = vunpack.c.l.b16 %v237
  %v875 = vunpack.c.l.b16 %v238
  %v876 = vunpack.c.l.b16 %v239
  %v877 = vunpack.c.l.b16 %v240
  %v878 = vunpack.c.l.b16 %v241
  %v879 = vunpack.c.l.b16 %v242
  %v880 = vunpack.c.l.b16 %v243
  %v881 = vunpack.c.l.b16 %v244
  %v882 = vunpack.c.l.b16 %v245
  %v883 = vunpack.c.l.b16 %v246
  %v884 = vunpack.c.l.b16 %v247
  %v885 = vunpack.c.l.b16 %v248
  %v886 = vunpack.c.l.b16 %v249
  %v887 = vunpack.c.l.b16 %v250
  %v888 = vunpack.c.l.b16 %v251
  %v889 = vunpack.c.l.b16 %v252
  %v890 = vunpack.c.l.b16 %v253
  %v891 = vunpack.c.l.b16 %v254
  %v892 = vunpack.c.l.b16 %v255
  %v893 = vunpack.c.l.b16 %v256
  %v894 = vunpack.c.l.b16 %v257
  %v895 = vunpack.c.l.b16 %v258
  %v896 = vunpack.c.l.b16 %v259
  %v897 = vunpack.c.l.b16 %v260
  %v898 = vunpack.c.l.b16 %v261
  %v899 = vunpack.c.l.b16 %v262
  %v900 = vunpack.c.l.b16 %v263
  %v901 = vunpack.c.l.b16 %v264
  %v902 = vunpack.c.l.b16 %v265
  %v903 = vunpack.c.l.b16 %v266
  %v904 = vunpack.c.l.b16 %v267
  %v905 = vunpack.c.l.b16 %v268
  %v906 = vunpack.c.l.b16 %v269
  %v907 = vunpack.c.l.b16 %v270
  %v908 = vunpack.c.l.b16 %v271
  %v909 = vunpack.c.l.b16 %v272
  %v910 = vunpack.c.l.b16 %v273
  %v911 = vpack.c.b16 %v688, %v687
  %v912 = vpack.c.b16 %v690, %v689
  %v913 = vpack.c.b16 %v692, %v691
  %v914 = vpack.c.b16 %v694, %v693
  %v915 = vpack.c.b16 %v696, %v695
  %v916 = vpack.c.b16 %v698, %v697
  %v917 = vpack.c.b16 %v700, %v699
  %v918 = vpack.c.b16 %v702, %v701
  %v919 = vpack.c.b16 %v704, %v703
  %v920 = vpack.c.b16 %v706, %v705
  %v921 = vpack.c.b16 %v708, %v707
  %v922 = vpack.c.b16 %v710, %v709
  %v923 = vpack.c.b16 %v712, %v711
  %v924 = vpack.c.b16 %v714, %v713
  %v925 = vpack.c.b16 %v716, %v715
  %v926 = vpack.c.b16 %v718, %v717
  %v927 = vpack.c.b16 %v720, %v719
  %v928 = vpack.c.b16 %v722, %v721
  %v929 = vpack.c.b16 %v724, %v723
  %v930 = vpack.c.b16 %v726, %v725
  %v931 = vpack.c.b16 %v728, %v727
  %v932 = vpack.c.b16 %v730, %v729
  %v933 = vpack.c.b16 %v732, %v731
  %v934 = vpack.c.b16 %v734, %v733
  %v935 = vpack.c.b16 %v736, %v735
  %v936 = vpack.c.b16 %v738, %v737
  %v937 = vpack.c.b16 %v740, %v739
  %v938 = vpack.c.b16 %v742, %v741
  %v939 = vpack.c.b16 %v744, %v743
  %v940 = vpack.c.b16 %v746, %v745
  %v941 = vpack.c.b16 %v748, %v747
  %v942 = vpack.c.b16 %v750, %v749
  %v943 = vpack.c.b16 %v752, %v751
  %v944 = vpack.c.b16 %v754, %v753
  %v945 = vpack.c.b16 %v756, %v755
  %v946 = vpack.c.b16 %v758, %v757
  %v947 = vpack.c.b16 %v760, %v759
  %v948 = vpack.c.b16 %v762, %v761
  %v949 = vpack.c.b16 %v764, %v763
  %v950 = vpack.c.b16 %v766, %v765
  %v951 = vpack.c.b16 %v768, %v767
  %v952 = vpack.c.b16 %v770, %v769
  %v953 = vpack.c.b16 %v772, %v771
  %v954 = vpack.c.b16 %v774, %v773
  %v955 = vpack.c.b16 %v776, %v775
  %v956 = vpack.c.b16 %v778, %v777
  %v957 = vpack.c.b16 %v780, %v779
  %v958 = vpack.c.b16 %v782, %v781
  %v959 = vpack.c.b16 %v784, %v783
  %v960 = vpack.c.b16 %v786, %v785
  %v961 = vpack.c.b16 %v788, %v787
  %v962 = vpack.c.b16 %v790, %v789
  %v963 = vpack.c.b16 %v792, %v791
  %v964 = vpack.c.b16 %v794, %v793
  %v965 = vpack.c.b16 %v796, %v795
  %v966 = vpack.c.b16 %v798, %v797
  %v967 = vpack.c.b16 %v800, %v799
  %v968 = vpack.c.b16 %v802, %v801
  %v969 = vpack.c.b16 %v804, %v803
  %v970 = vpack.c.b16 %v806, %v805
  %v971 = vpack.c.b16 %v808, %v807
  %v972 = vpack.c.b16 %v810, %v809
  %v973 = vpack.c.b16 %v812, %v811
  %v974 = vpack.c.b16 %v814, %v813
  %v975 = vpack.c.b16 %v816, %v815
  %v976 = vpack.c.b16 %v818, %v817
  %v977 = vpack.c.b16 %v820, %v819
  %v978 = vpack.c.b16 %v822, %v821
  %v979 = vpack.c.b16 %v824, %v823
  %v980 = vpack.c.b16 %v826, %v825
  %v981 = vpack.c.b16 %v828, %v827
  %v982 = vpack.c.b16 %v830, %v829
  %v983 = vpack.c.b16 %v832, %v831
  %v984 = vpack.c.b16 %v834, %v833
  %v985 = vpack.c.b16 %v836, %v835
  %v986 = vpack.c.b16 %v838, %v837
  %v987 = vpack.c.b16 %v840, %v839
  %v988 = vpack.c.b16 %v842, %v841
  %v989 = vpack.c.b16 %v844, %v843
  %v990 = vpack.c.b16 %v846, %v845
  %v991 = vpack.c.b16 %v848, %v847
  %v992 = vpack.c.b16 %v850, %v849
  %v993 = vpack.c.b16 %v852, %v851
  %v994 = vpack.c.b16 %v854, %v853
  %v995 = vpack.c.b16 %v856, %v855
  %v996 = vpack.c.b16 %v858, %v857
  %v997 = vpack.c.b16 %v860, %v859
  %v998 = vpack.c.b16 %v862, %v861
  %v999 = vpack.c.b16 %v864, %v863
  %v1000 = vpack.c.b16 %v866, %v865
  %v1001 = vpack.c.b16 %v868, %v867
  %v1002 = vpack.c.b16 %v870, %v869
  %v1003 = vpack.c.b16 %v872, %v871
  %v1004 = vpack.c.b16 %v874, %v873
  %v1005 = vpack.c.b16 %v876, %v875
  %v1006 = vpack.c.b16 %v878, %v877
  %v1007 = vpack.c.b16 %v880, %v879
  %v1008 = vpack.c.b16 %v882, %v881
  %v1009 = vpack.c.b16 %v884, %v883
  %v1010 = vpack.c.b16 %v886, %v885
  %v1011 = vpack.c.b16 %v888, %v887
  %v1012 = vpack.c.b16 %v890, %v889
  %v1013 = vpack.c.b16 %v892, %v891
  %v1014 = vpack.c.b16 %v894, %v893
  %v1015 = vpack.c.b16 %v896, %v895
  %v1016 = vpack.c.b16 %v898, %v897
  %v1017 = vpack.c.b16 %v900, %v899
  %v1018 = vpack.c.b16 %v902, %v901
  %v1019 = vpack.c.b16 %v904, %v903
  %v1020 = vpack.c.b16 %v906, %v905
  %v1021 = vpack.c.b16 %v908, %v907
  %v1022 = vpack.c.b16 %v910, %v909
  %1135 = vmatprep.subr.bf16.mxu0 0
  %1136 = vmatpush1.bf16.msra.mxu0 %v918
  %1137 = vmatprep.subr.bf16.mxu0 0
  %1138 = vmatpush1.bf16.msra.mxu0 %v917
  %1139 = vmatprep.subr.bf16.mxu0 0
  %1140 = vmatpush1.bf16.msra.mxu0 %v916
  %1141 = vmatprep.subr.bf16.mxu0 0
  %1142 = vmatpush1.bf16.msra.mxu0 %v915
  %1143 = vmatprep.subr.bf16.mxu0 0
  %1144 = vmatpush1.bf16.msra.mxu0 %v914
  %1145 = vmatprep.subr.bf16.mxu0 0
  %1146 = vmatpush1.bf16.msra.mxu0 %v913
  %1147 = vmatprep.subr.bf16.mxu0 0
  %1148 = vmatpush1.bf16.msra.mxu0 %v912
  %1149 = vmatprep.subr.bf16.mxu0 0
  %1150 = vmatpush1.bf16.msra.mxu0 %v911
  %1151 = vmatprep.subr.bf16.mxu0 0
  %1152 = vmatpush2.bf16.msra.mxu0 %v926
  %1153 = vmatprep.subr.bf16.mxu0 0
  %1154 = vmatpush2.bf16.msra.mxu0 %v925
  %1155 = vmatprep.subr.bf16.mxu0 0
  %1156 = vmatpush2.bf16.msra.mxu0 %v924
  %1157 = vmatprep.subr.bf16.mxu0 0
  %1158 = vmatpush2.bf16.msra.mxu0 %v923
  %1159 = vmatprep.subr.bf16.mxu0 0
  %1160 = vmatpush2.bf16.msra.mxu0 %v922
  %1161 = vmatprep.subr.bf16.mxu0 0
  %1162 = vmatpush2.bf16.msra.mxu0 %v921
  %1163 = vmatprep.subr.bf16.mxu0 0
  %1164 = vmatpush2.bf16.msra.mxu0 %v920
  %1165 = vmatprep.subr.bf16.mxu0 0
  %1166 = vmatpush2.bf16.msra.mxu0 %v919
  %1167 = vmatprep.mubr.bf16.mxu0 %v380
  %1168 = vmatmul.mubr.bf16.gmra.mxu0 %v379
  %v1169 = vpop.f32.mrf.mxu0
  %v1170 = vadd.f32 0.0, %v1169
  %v1171 = vpop.f32.mrf.mxu0
  %v1172 = vpop.f32.mrf.mxu0
  %v1173 = vadd.f32 0.0, %v1172
  %v1174 = vpop.f32.mrf.mxu0
  %1175 = vmatprep.mubr.bf16.mxu0 %v394
  %1176 = vmatmul.mubr.bf16.gmra.mxu0 %v393
  %v1177 = vpop.f32.mrf.mxu0
  %v1178 = vadd.f32 0.0, %v1177
  %v1179 = vpop.f32.mrf.mxu0
  %v1180 = vpop.f32.mrf.mxu0
  %v1181 = vadd.f32 0.0, %v1180
  %v1182 = vpop.f32.mrf.mxu0
  %1183 = vmatprep.mubr.bf16.mxu0 %v408
  %1184 = vmatmul.mubr.bf16.gmra.mxu0 %v407
  %v1185 = vpop.f32.mrf.mxu0
  %v1186 = vadd.f32 0.0, %v1185
  %v1187 = vpop.f32.mrf.mxu0
  %v1188 = vpop.f32.mrf.mxu0
  %v1189 = vpop.f32.mrf.mxu0
  %1190 = vdwg.mxu0
  %1191 = vmatprep.subr.bf16.mxu0 0
  %1192 = vmatpush1.bf16.msra.mxu0 %v934
  %1193 = vmatprep.subr.bf16.mxu0 0
  %1194 = vmatpush1.bf16.msra.mxu0 %v933
  %1195 = vmatprep.subr.bf16.mxu0 0
  %1196 = vmatpush1.bf16.msra.mxu0 %v932
  %1197 = vmatprep.subr.bf16.mxu0 0
  %1198 = vmatpush1.bf16.msra.mxu0 %v931
  %1199 = vmatprep.subr.bf16.mxu0 0
  %1200 = vmatpush1.bf16.msra.mxu0 %v930
  %1201 = vmatprep.subr.bf16.mxu0 0
  %1202 = vmatpush1.bf16.msra.mxu0 %v929
  %1203 = vmatprep.subr.bf16.mxu0 0
  %1204 = vmatpush1.bf16.msra.mxu0 %v928
  %1205 = vmatprep.subr.bf16.mxu0 0
  %1206 = vmatpush1.bf16.msra.mxu0 %v927
  %1207 = vmatprep.subr.bf16.mxu0 0
  %1208 = vmatpush2.bf16.msra.mxu0 %v942
  %1209 = vmatprep.subr.bf16.mxu0 0
  %1210 = vmatpush2.bf16.msra.mxu0 %v941
  %1211 = vmatprep.subr.bf16.mxu0 0
  %1212 = vmatpush2.bf16.msra.mxu0 %v940
  %1213 = vmatprep.subr.bf16.mxu0 0
  %1214 = vmatpush2.bf16.msra.mxu0 %v939
  %1215 = vmatprep.subr.bf16.mxu0 0
  %1216 = vmatpush2.bf16.msra.mxu0 %v938
  %1217 = vmatprep.subr.bf16.mxu0 0
  %1218 = vmatpush2.bf16.msra.mxu0 %v937
  %1219 = vmatprep.subr.bf16.mxu0 0
  %1220 = vmatpush2.bf16.msra.mxu0 %v936
  %1221 = vmatprep.subr.bf16.mxu0 0
  %1222 = vmatpush2.bf16.msra.mxu0 %v935
  %1223 = vmatprep.mubr.bf16.mxu0 %v382
  %1224 = vmatmul.mubr.bf16.gmra.mxu0 %v381
  %v1225 = vpop.f32.mrf.mxu0
  %v1226 = vadd.f32 %v1170, %v1225
  %v1227 = vpop.f32.mrf.mxu0
  %v1228 = vpop.f32.mrf.mxu0
  %v1229 = vadd.f32 %v1173, %v1228
  %v1230 = vpop.f32.mrf.mxu0
  %1231 = vmatprep.mubr.bf16.mxu0 %v396
  %1232 = vmatmul.mubr.bf16.gmra.mxu0 %v395
  %v1233 = vpop.f32.mrf.mxu0
  %v1234 = vadd.f32 %v1178, %v1233
  %v1235 = vpop.f32.mrf.mxu0
  %v1236 = vpop.f32.mrf.mxu0
  %v1237 = vadd.f32 %v1181, %v1236
  %v1238 = vpop.f32.mrf.mxu0
  %1239 = vmatprep.mubr.bf16.mxu0 %v410
  %1240 = vmatmul.mubr.bf16.gmra.mxu0 %v409
  %v1241 = vpop.f32.mrf.mxu0
  %v1242 = vadd.f32 %v1186, %v1241
  %v1243 = vpop.f32.mrf.mxu0
  %v1244 = vpop.f32.mrf.mxu0
  %v1245 = vpop.f32.mrf.mxu0
  %1246 = vdwg.mxu0
  %1247 = vmatprep.subr.bf16.mxu0 0
  %1248 = vmatpush1.bf16.msra.mxu0 %v950
  %1249 = vmatprep.subr.bf16.mxu0 0
  %1250 = vmatpush1.bf16.msra.mxu0 %v949
  %1251 = vmatprep.subr.bf16.mxu0 0
  %1252 = vmatpush1.bf16.msra.mxu0 %v948
  %1253 = vmatprep.subr.bf16.mxu0 0
  %1254 = vmatpush1.bf16.msra.mxu0 %v947
  %1255 = vmatprep.subr.bf16.mxu0 0
  %1256 = vmatpush1.bf16.msra.mxu0 %v946
  %1257 = vmatprep.subr.bf16.mxu0 0
  %1258 = vmatpush1.bf16.msra.mxu0 %v945
  %1259 = vmatprep.subr.bf16.mxu0 0
  %1260 = vmatpush1.bf16.msra.mxu0 %v944
  %1261 = vmatprep.subr.bf16.mxu0 0
  %1262 = vmatpush1.bf16.msra.mxu0 %v943
  %1263 = vmatprep.subr.bf16.mxu0 0
  %1264 = vmatpush2.bf16.msra.mxu0 %v958
  %1265 = vmatprep.subr.bf16.mxu0 0
  %1266 = vmatpush2.bf16.msra.mxu0 %v957
  %1267 = vmatprep.subr.bf16.mxu0 0
  %1268 = vmatpush2.bf16.msra.mxu0 %v956
  %1269 = vmatprep.subr.bf16.mxu0 0
  %1270 = vmatpush2.bf16.msra.mxu0 %v955
  %1271 = vmatprep.subr.bf16.mxu0 0
  %1272 = vmatpush2.bf16.msra.mxu0 %v954
  %1273 = vmatprep.subr.bf16.mxu0 0
  %1274 = vmatpush2.bf16.msra.mxu0 %v953
  %1275 = vmatprep.subr.bf16.mxu0 0
  %1276 = vmatpush2.bf16.msra.mxu0 %v952
  %1277 = vmatprep.subr.bf16.mxu0 0
  %1278 = vmatpush2.bf16.msra.mxu0 %v951
  %1279 = vmatprep.mubr.bf16.mxu0 %v384
  %1280 = vmatmul.mubr.bf16.gmra.mxu0 %v383
  %v1281 = vpop.f32.mrf.mxu0
  %v1282 = vadd.f32 %v1226, %v1281
  %v1283 = vpop.f32.mrf.mxu0
  %v1284 = vpop.f32.mrf.mxu0
  %v1285 = vadd.f32 %v1229, %v1284
  %v1286 = vpop.f32.mrf.mxu0
  %1287 = vmatprep.mubr.bf16.mxu0 %v398
  %1288 = vmatmul.mubr.bf16.gmra.mxu0 %v397
  %v1289 = vpop.f32.mrf.mxu0
  %v1290 = vadd.f32 %v1234, %v1289
  %v1291 = vpop.f32.mrf.mxu0
  %v1292 = vpop.f32.mrf.mxu0
  %v1293 = vadd.f32 %v1237, %v1292
  %v1294 = vpop.f32.mrf.mxu0
  %1295 = vmatprep.mubr.bf16.mxu0 %v412
  %1296 = vmatmul.mubr.bf16.gmra.mxu0 %v411
  %v1297 = vpop.f32.mrf.mxu0
  %v1298 = vadd.f32 %v1242, %v1297
  %v1299 = vpop.f32.mrf.mxu0
  %v1300 = vpop.f32.mrf.mxu0
  %v1301 = vpop.f32.mrf.mxu0
  %1302 = vdwg.mxu0
  %1303 = vmatprep.subr.bf16.mxu0 0
  %1304 = vmatpush1.bf16.msra.mxu0 %v966
  %1305 = vmatprep.subr.bf16.mxu0 0
  %1306 = vmatpush1.bf16.msra.mxu0 %v965
  %1307 = vmatprep.subr.bf16.mxu0 0
  %1308 = vmatpush1.bf16.msra.mxu0 %v964
  %1309 = vmatprep.subr.bf16.mxu0 0
  %1310 = vmatpush1.bf16.msra.mxu0 %v963
  %1311 = vmatprep.subr.bf16.mxu0 0
  %1312 = vmatpush1.bf16.msra.mxu0 %v962
  %1313 = vmatprep.subr.bf16.mxu0 0
  %1314 = vmatpush1.bf16.msra.mxu0 %v961
  %1315 = vmatprep.subr.bf16.mxu0 0
  %1316 = vmatpush1.bf16.msra.mxu0 %v960
  %1317 = vmatprep.subr.bf16.mxu0 0
  %1318 = vmatpush1.bf16.msra.mxu0 %v959
  %1319 = vmatprep.subr.bf16.mxu0 0
  %1320 = vmatpush2.bf16.msra.mxu0 %v974
  %1321 = vmatprep.subr.bf16.mxu0 0
  %1322 = vmatpush2.bf16.msra.mxu0 %v973
  %1323 = vmatprep.subr.bf16.mxu0 0
  %1324 = vmatpush2.bf16.msra.mxu0 %v972
  %1325 = vmatprep.subr.bf16.mxu0 0
  %1326 = vmatpush2.bf16.msra.mxu0 %v971
  %1327 = vmatprep.subr.bf16.mxu0 0
  %1328 = vmatpush2.bf16.msra.mxu0 %v970
  %1329 = vmatprep.subr.bf16.mxu0 0
  %1330 = vmatpush2.bf16.msra.mxu0 %v969
  %1331 = vmatprep.subr.bf16.mxu0 0
  %1332 = vmatpush2.bf16.msra.mxu0 %v968
  %1333 = vmatprep.subr.bf16.mxu0 0
  %1334 = vmatpush2.bf16.msra.mxu0 %v967
  %1335 = vmatprep.mubr.bf16.mxu0 %v386
  %1336 = vmatmul.mubr.bf16.gmra.mxu0 %v385
  %v1337 = vpop.f32.mrf.mxu0
  %v1338 = vadd.f32 %v1282, %v1337
  %v1339 = vpop.f32.mrf.mxu0
  %v1340 = vpop.f32.mrf.mxu0
  %v1341 = vadd.f32 %v1285, %v1340
  %v1342 = vpop.f32.mrf.mxu0
  %1343 = vmatprep.mubr.bf16.mxu0 %v400
  %1344 = vmatmul.mubr.bf16.gmra.mxu0 %v399
  %v1345 = vpop.f32.mrf.mxu0
  %v1346 = vadd.f32 %v1290, %v1345
  %v1347 = vpop.f32.mrf.mxu0
  %v1348 = vpop.f32.mrf.mxu0
  %v1349 = vadd.f32 %v1293, %v1348
  %v1350 = vpop.f32.mrf.mxu0
  %1351 = vmatprep.mubr.bf16.mxu0 %v414
  %1352 = vmatmul.mubr.bf16.gmra.mxu0 %v413
  %v1353 = vpop.f32.mrf.mxu0
  %v1354 = vadd.f32 %v1298, %v1353
  %v1355 = vpop.f32.mrf.mxu0
  %v1356 = vpop.f32.mrf.mxu0
  %v1357 = vpop.f32.mrf.mxu0
  %1358 = vdwg.mxu0
  %1359 = vmatprep.subr.bf16.mxu0 0
  %1360 = vmatpush1.bf16.msra.mxu0 %v982
  %1361 = vmatprep.subr.bf16.mxu0 0
  %1362 = vmatpush1.bf16.msra.mxu0 %v981
  %1363 = vmatprep.subr.bf16.mxu0 0
  %1364 = vmatpush1.bf16.msra.mxu0 %v980
  %1365 = vmatprep.subr.bf16.mxu0 0
  %1366 = vmatpush1.bf16.msra.mxu0 %v979
  %1367 = vmatprep.subr.bf16.mxu0 0
  %1368 = vmatpush1.bf16.msra.mxu0 %v978
  %1369 = vmatprep.subr.bf16.mxu0 0
  %1370 = vmatpush1.bf16.msra.mxu0 %v977
  %1371 = vmatprep.subr.bf16.mxu0 0
  %1372 = vmatpush1.bf16.msra.mxu0 %v976
  %1373 = vmatprep.subr.bf16.mxu0 0
  %1374 = vmatpush1.bf16.msra.mxu0 %v975
  %1375 = vmatprep.subr.bf16.mxu0 0
  %1376 = vmatpush2.bf16.msra.mxu0 %v990
  %1377 = vmatprep.subr.bf16.mxu0 0
  %1378 = vmatpush2.bf16.msra.mxu0 %v989
  %1379 = vmatprep.subr.bf16.mxu0 0
  %1380 = vmatpush2.bf16.msra.mxu0 %v988
  %1381 = vmatprep.subr.bf16.mxu0 0
  %1382 = vmatpush2.bf16.msra.mxu0 %v987
  %1383 = vmatprep.subr.bf16.mxu0 0
  %1384 = vmatpush2.bf16.msra.mxu0 %v986
  %1385 = vmatprep.subr.bf16.mxu0 0
  %1386 = vmatpush2.bf16.msra.mxu0 %v985
  %1387 = vmatprep.subr.bf16.mxu0 0
  %1388 = vmatpush2.bf16.msra.mxu0 %v984
  %1389 = vmatprep.subr.bf16.mxu0 0
  %1390 = vmatpush2.bf16.msra.mxu0 %v983
  %1391 = vmatprep.mubr.bf16.mxu0 %v388
  %1392 = vmatmul.mubr.bf16.gmra.mxu0 %v387
  %v1393 = vpop.f32.mrf.mxu0
  %v1394 = vadd.f32 %v1338, %v1393
  %v1395 = vpop.f32.mrf.mxu0
  %v1396 = vpop.f32.mrf.mxu0
  %v1397 = vadd.f32 %v1341, %v1396
  %v1398 = vpop.f32.mrf.mxu0
  %1399 = vmatprep.mubr.bf16.mxu0 %v402
  %1400 = vmatmul.mubr.bf16.gmra.mxu0 %v401
  %v1401 = vpop.f32.mrf.mxu0
  %v1402 = vadd.f32 %v1346, %v1401
  %v1403 = vpop.f32.mrf.mxu0
  %v1404 = vpop.f32.mrf.mxu0
  %v1405 = vadd.f32 %v1349, %v1404
  %v1406 = vpop.f32.mrf.mxu0
  %1407 = vmatprep.mubr.bf16.mxu0 %v416
  %1408 = vmatmul.mubr.bf16.gmra.mxu0 %v415
  %v1409 = vpop.f32.mrf.mxu0
  %v1410 = vadd.f32 %v1354, %v1409
  %v1411 = vpop.f32.mrf.mxu0
  %v1412 = vpop.f32.mrf.mxu0
  %v1413 = vpop.f32.mrf.mxu0
  %1414 = vdwg.mxu0
  %1415 = vmatprep.subr.bf16.mxu0 0
  %1416 = vmatpush1.bf16.msra.mxu0 %v998
  %1417 = vmatprep.subr.bf16.mxu0 0
  %1418 = vmatpush1.bf16.msra.mxu0 %v997
  %1419 = vmatprep.subr.bf16.mxu0 0
  %1420 = vmatpush1.bf16.msra.mxu0 %v996
  %1421 = vmatprep.subr.bf16.mxu0 0
  %1422 = vmatpush1.bf16.msra.mxu0 %v995
  %1423 = vmatprep.subr.bf16.mxu0 0
  %1424 = vmatpush1.bf16.msra.mxu0 %v994
  %1425 = vmatprep.subr.bf16.mxu0 0
  %1426 = vmatpush1.bf16.msra.mxu0 %v993
  %1427 = vmatprep.subr.bf16.mxu0 0
  %1428 = vmatpush1.bf16.msra.mxu0 %v992
  %1429 = vmatprep.subr.bf16.mxu0 0
  %1430 = vmatpush1.bf16.msra.mxu0 %v991
  %1431 = vmatprep.subr.bf16.mxu0 0
  %1432 = vmatpush2.bf16.msra.mxu0 %v1006
  %1433 = vmatprep.subr.bf16.mxu0 0
  %1434 = vmatpush2.bf16.msra.mxu0 %v1005
  %1435 = vmatprep.subr.bf16.mxu0 0
  %1436 = vmatpush2.bf16.msra.mxu0 %v1004
  %1437 = vmatprep.subr.bf16.mxu0 0
  %1438 = vmatpush2.bf16.msra.mxu0 %v1003
  %1439 = vmatprep.subr.bf16.mxu0 0
  %1440 = vmatpush2.bf16.msra.mxu0 %v1002
  %1441 = vmatprep.subr.bf16.mxu0 0
  %1442 = vmatpush2.bf16.msra.mxu0 %v1001
  %1443 = vmatprep.subr.bf16.mxu0 0
  %1444 = vmatpush2.bf16.msra.mxu0 %v1000
  %1445 = vmatprep.subr.bf16.mxu0 0
  %1446 = vmatpush2.bf16.msra.mxu0 %v999
  %1447 = vmatprep.mubr.bf16.mxu0 %v390
  %1448 = vmatmul.mubr.bf16.gmra.mxu0 %v389
  %v1449 = vpop.f32.mrf.mxu0
  %v1450 = vadd.f32 %v1394, %v1449
  %v1451 = vpop.f32.mrf.mxu0
  %v1452 = vpop.f32.mrf.mxu0
  %v1453 = vadd.f32 %v1397, %v1452
  %v1454 = vpop.f32.mrf.mxu0
  %1455 = vmatprep.mubr.bf16.mxu0 %v404
  %1456 = vmatmul.mubr.bf16.gmra.mxu0 %v403
  %v1457 = vpop.f32.mrf.mxu0
  %v1458 = vadd.f32 %v1402, %v1457
  %v1459 = vpop.f32.mrf.mxu0
  %v1460 = vpop.f32.mrf.mxu0
  %v1461 = vadd.f32 %v1405, %v1460
  %v1462 = vpop.f32.mrf.mxu0
  %1463 = vmatprep.mubr.bf16.mxu0 %v418
  %1464 = vmatmul.mubr.bf16.gmra.mxu0 %v417
  %v1465 = vpop.f32.mrf.mxu0
  %v1466 = vadd.f32 %v1410, %v1465
  %v1467 = vpop.f32.mrf.mxu0
  %v1468 = vpop.f32.mrf.mxu0
  %v1469 = vpop.f32.mrf.mxu0
  %1470 = vdwg.mxu0
  %1471 = vmatprep.subr.bf16.mxu0 0
  %1472 = vmatpush1.bf16.msra.mxu0 %v1014
  %1473 = vmatprep.subr.bf16.mxu0 0
  %1474 = vmatpush1.bf16.msra.mxu0 %v1013
  %1475 = vmatprep.subr.bf16.mxu0 0
  %1476 = vmatpush1.bf16.msra.mxu0 %v1012
  %1477 = vmatprep.subr.bf16.mxu0 0
  %1478 = vmatpush1.bf16.msra.mxu0 %v1011
  %1479 = vmatprep.subr.bf16.mxu0 0
  %1480 = vmatpush1.bf16.msra.mxu0 %v1010
  %1481 = vmatprep.subr.bf16.mxu0 0
  %1482 = vmatpush1.bf16.msra.mxu0 %v1009
  %1483 = vmatprep.subr.bf16.mxu0 0
  %1484 = vmatpush1.bf16.msra.mxu0 %v1008
  %1485 = vmatprep.subr.bf16.mxu0 0
  %1486 = vmatpush1.bf16.msra.mxu0 %v1007
  %1487 = vmatprep.subr.bf16.mxu0 0
  %1488 = vmatpush2.bf16.msra.mxu0 %v1022
  %1489 = vmatprep.subr.bf16.mxu0 0
  %1490 = vmatpush2.bf16.msra.mxu0 %v1021
  %1491 = vmatprep.subr.bf16.mxu0 0
  %1492 = vmatpush2.bf16.msra.mxu0 %v1020
  %1493 = vmatprep.subr.bf16.mxu0 0
  %1494 = vmatpush2.bf16.msra.mxu0 %v1019
  %1495 = vmatprep.subr.bf16.mxu0 0
  %1496 = vmatpush2.bf16.msra.mxu0 %v1018
  %1497 = vmatprep.subr.bf16.mxu0 0
  %1498 = vmatpush2.bf16.msra.mxu0 %v1017
  %1499 = vmatprep.subr.bf16.mxu0 0
  %1500 = vmatpush2.bf16.msra.mxu0 %v1016
  %1501 = vmatprep.subr.bf16.mxu0 0
  %1502 = vmatpush2.bf16.msra.mxu0 %v1015
  %1503 = vmatprep.mubr.bf16.mxu0 %v392
  %1504 = vmatmul.mubr.bf16.gmra.mxu0 %v391
  %v1505 = vpop.f32.mrf.mxu0
  %v1506 = vadd.f32 %v1450, %v1505
  %v1507 = vpop.f32.mrf.mxu0
  %v1508 = vpop.f32.mrf.mxu0
  %v1509 = vadd.f32 %v1453, %v1508
  %v1510 = vpop.f32.mrf.mxu0
  %1511 = vmatprep.mubr.bf16.mxu0 %v406
  %1512 = vmatmul.mubr.bf16.gmra.mxu0 %v405
  %v1513 = vpop.f32.mrf.mxu0
  %v1514 = vadd.f32 %v1458, %v1513
  %v1515 = vpop.f32.mrf.mxu0
  %v1516 = vpop.f32.mrf.mxu0
  %v1517 = vadd.f32 %v1461, %v1516
  %v1518 = vpop.f32.mrf.mxu0
  %1519 = vmatprep.mubr.bf16.mxu0 %v420
  %1520 = vmatmul.mubr.bf16.gmra.mxu0 %v419
  %v1521 = vpop.f32.mrf.mxu0
  %v1522 = vadd.f32 %v1466, %v1521
  %v1523 = vpop.f32.mrf.mxu0
  %v1524 = vpop.f32.mrf.mxu0
  %v1525 = vpop.f32.mrf.mxu0
  %1526 = vdwg.mxu0
  %1527 = vst [vmem:[%s2] sm:$0xff] %v1506
  %1528 = vst [vmem:[%s2 + $0x8] sm:$0xff] %v1509
  %1529 = vst [vmem:[%s2 + $0x10] sm:$0xff] %v1514
  %1530 = vst [vmem:[%s2 + $0x18] sm:$0xff] %v1517
  %1531 = vst [vmem:[%s2 + $0x20] sm:$0xff] %v1522
  %v1532 = vadd.f32 %v1506, %v1509
  %v1533 = vadd.f32 %v1532, %v1514
  %v1534 = vadd.f32 %v1533, %v1517
  %v1535 = vadd.f32 %v1534, %v1522
  %v1536 = vrot.slane %v1535, 4
  %v1537 = vadd.f32 %v1535, %v1536
  %v1538 = vrot.slane %v1537, 2
  %v1539 = vadd.f32 %v1537, %v1538
  %v1540 = vrot.slane %v1539, 1
  %v1541 = vadd.f32 %v1539, %v1540
  %v1542 = vmul.f32 %v1506, %v1506
  %v1543 = vmul.f32 %v1509, %v1509
  %v1544 = vmul.f32 %v1514, %v1514
  %v1545 = vmul.f32 %v1517, %v1517
  %v1546 = vmul.f32 %v1522, %v1522
  %v1547 = vadd.f32 %v1542, %v1543
  %v1548 = vadd.f32 %v1547, %v1544
  %v1549 = vadd.f32 %v1548, %v1545
  %v1550 = vadd.f32 %v1549, %v1546
  %v1551 = vrot.slane %v1550, 4
  %v1552 = vadd.f32 %v1550, %v1551
  %v1553 = vrot.slane %v1552, 2
  %v1554 = vadd.f32 %v1552, %v1553
  %v1555 = vrot.slane %v1554, 1
  %v1556 = vadd.f32 %v1554, %v1555
  %1557 = vst [vmem:[%s3] sm:$0xff] %v1541
  %1558 = vst [vmem:[%s4] sm:$0xff] %v1556
  // Predicated region
  $region10: #{linking_forward.18} parent=0 // pred_check
    _
  $region11: #{linking_forward.18} parent=0 // pred_check_branch
    %1560 = sbr.rel (0) target = $region13
  $region12: #{linking_forward.18} parent=0 // pred_region
    _
  $region13: #{linking_forward.18} parent=0 // pred_fallthru
    _
  // Predicated region
  $region14: #{linking_forward.18} parent=0 // pred_check
    _
  $region15: #{linking_forward.18} parent=0 // pred_check_branch
    %1562 = sbr.rel (0) target = $region17
  $region16: #{linking_forward.18} parent=0 // pred_region
    _
  $region17: #{linking_forward.18} parent=0 // pred_fallthru
    _
  // Predicated region
  $region18: #{linking_forward.18} parent=0 // pred_check
    _
  $region19: #{linking_forward.18} parent=0 // pred_check_branch
    %1564 = sbr.rel (0) target = $region21
  $region20: #{linking_forward.18} parent=0 // pred_region
    _
  $region21: #{linking_forward.18} parent=0 // pred_fallthru
    _
  // Predicated region
  $region22: #{linking_forward.18} parent=0 // pred_check
    _
  $region23: #{linking_forward.18} parent=0 // pred_check_branch
    %1566 = sbr.rel (0) target = $region25
  $region24: #{linking_forward.18} parent=0 // pred_region
    _
  $region25: #{linking_forward.18} parent=0 // pred_fallthru
    _
  // Predicated region
  $region26: #{linking_forward.18} parent=0 // pred_check
    _
  $region27: #{linking_forward.18} parent=0 // pred_check_branch
    %1568 = sbr.rel (0) target = $region29
  $region28: #{linking_forward.18} parent=0 // pred_region
    _
  $region29: #{linking_forward.18} parent=0 // pred_fallthru
    _
  // Predicated region
  $region30: #{linking_forward.18} parent=0 // pred_check
    _
  $region31: #{linking_forward.18} parent=0 // pred_check_branch
    %1570 = sbr.rel (0) target = $region33
  $region32: #{linking_forward.18} parent=0 // pred_region
    _
  $region33: #{linking_forward.18} parent=0 // pred_fallthru
    _

// kernel: linking_forward.10
$region0: #{linking_forward.10}
  #allocation0 [shape = 'u32[]', space=smem, size = 0x4, offset = 0x4, fixed_abs, tag = 'smem constant byte address 0x4 - core index']
  #allocation1 [shape = 'u32[144,128]{1,0:T(1,128)}', space=vmem, size = 0x12000, scoped, tag = 'internal scratch']
  %s0 = inlined_call_operand.vmem [shape: bf16[40,896], index: 0, kind: input, shape index: {}]
  %s1 = inlined_call_operand.vmem [shape: bf16[896,128], index: 1, kind: input, shape index: {}]
  %s2 = inlined_call_operand.vmem [shape: f32[40,128], index: 2, kind: output, shape index: {0}]
  %s3 = inlined_call_operand.vmem [shape: f32[1,8,128], index: 3, kind: output, shape index: {1}]
  %s4 = inlined_call_operand.vmem [shape: f32[1,8,128], index: 4, kind: output, shape index: {2}]
  %5 = xla_tuple %s2, %s3, %s4
  %s6 = sld [smem:[#allocation0]]
  $region34: #{linking_forward.10} parent=0
    _
  %s8 = ssub.s32 1, %s6
  %s9 = scalar_select 0, %s8, %s6
  // Predicated region
  $region2: #{linking_forward.10} parent=0 // pred_check
    _
  $region3: #{linking_forward.10} parent=0 // pred_check_branch
    %11 = sbr.rel (0) target = $region5
  $region4: #{linking_forward.10} parent=0 // pred_region
    _
  $region5: #{linking_forward.10} parent=0 // pred_fallthru
    _
  // Predicated region
  $region6: #{linking_forward.10} parent=0 // pred_check
    _
  $region7: #{linking_forward.10} parent=0 // pred_check_branch
    %13 = sbr.rel (0) target = $region9
  $region8: #{linking_forward.10} parent=0 // pred_region
    _
  $region9: #{linking_forward.10} parent=0 // pred_fallthru
    _
  %v15 = vld [vmem:[%s0] sm:$0xff]
  %v16 = vld [vmem:[%s0 + $0x8] sm:$0xff]
  %v17 = vld [vmem:[%s0 + $0x10] sm:$0xff]
  %v18 = vld [vmem:[%s0 + $0x18] sm:$0xf]
  %v19 = vld [vmem:[%s0 + $0x1c] sm:$0xff]
  %v20 = vld [vmem:[%s0 + $0x24] sm:$0xff]
  %v21 = vld [vmem:[%s0 + $0x2c] sm:$0xff]
  %v22 = vld [vmem:[%s0 + $0x34] sm:$0xf]
  %v23 = vld [vmem:[%s0 + $0x38] sm:$0xff]
  %v24 = vld [vmem:[%s0 + $0x40] sm:$0xff]
  %v25 = vld [vmem:[%s0 + $0x48] sm:$0xff]
  %v26 = vld [vmem:[%s0 + $0x50] sm:$0xf]
  %v27 = vld [vmem:[%s0 + $0x54] sm:$0xff]
  %v28 = vld [vmem:[%s0 + $0x5c] sm:$0xff]
  %v29 = vld [vmem:[%s0 + $0x64] sm:$0xff]
  %v30 = vld [vmem:[%s0 + $0x6c] sm:$0xf]
  %v31 = vld [vmem:[%s0 + $0x70] sm:$0xff]
  %v32 = vld [vmem:[%s0 + $0x78] sm:$0xff]
  %v33 = vld [vmem:[%s0 + $0x80] sm:$0xff]
  %v34 = vld [vmem:[%s0 + $0x88] sm:$0xf]
  %v35 = vld [vmem:[%s1] sm:$0xf]
  %v36 = vld [vmem:[%s1 + $0x4] sm:$0xf]
  %v37 = vld [vmem:[%s1 + $0x8] sm:$0xf]
  %v38 = vld [vmem:[%s1 + $0xc] sm:$0xf]
  %v39 = vld [vmem:[%s1 + $0x10] sm:$0xf]
  %v40 = vld [vmem:[%s1 + $0x14] sm:$0xf]
  %v41 = vld [vmem:[%s1 + $0x18] sm:$0xf]
  %v42 = vld [vmem:[%s1 + $0x1c] sm:$0xf]
  %v43 = vld [vmem:[%s1 + $0x20] sm:$0xf]
  %v44 = vld [vmem:[%s1 + $0x24] sm:$0xf]
  %v45 = vld [vmem:[%s1 + $0x28] sm:$0xf]
  %v46 = vld [vmem:[%s1 + $0x2c] sm:$0xf]
  %v47 = vld [vmem:[%s1 + $0x30] sm:$0xf]
  %v48 = vld [vmem:[%s1 + $0x34] sm:$0xf]
  %v49 = vld [vmem:[%s1 + $0x38] sm:$0xf]
  %v50 = vld [vmem:[%s1 + $0x3c] sm:$0xf]
  %v51 = vld [vmem:[%s1 + $0x40] sm:$0xf]
  %v52 = vld [vmem:[%s1 + $0x44] sm:$0xf]
  %v53 = vld [vmem:[%s1 + $0x48] sm:$0xf]
  %v54 = vld [vmem:[%s1 + $0x4c] sm:$0xf]
  %v55 = vld [vmem:[%s1 + $0x50] sm:$0xf]
  %v56 = vld [vmem:[%s1 + $0x54] sm:$0xf]
  %v57 = vld [vmem:[%s1 + $0x58] sm:$0xf]
  %v58 = vld [vmem:[%s1 + $0x5c] sm:$0xf]
  %v59 = vld [vmem:[%s1 + $0x60] sm:$0xf]
  %v60 = vld [vmem:[%s1 + $0x64] sm:$0xf]
  %v61 = vld [vmem:[%s1 + $0x68] sm:$0xf]
  %v62 = vld [vmem:[%s1 + $0x6c] sm:$0xf]
  %v63 = vld [vmem:[%s1 + $0x70] sm:$0xf]
  %v64 = vld [vmem:[%s1 + $0x74] sm:$0xf]
  %v65 = vld [vmem:[%s1 + $0x78] sm:$0xf]
  %v66 = vld [vmem:[%s1 + $0x7c] sm:$0xf]
  %v67 = vld [vmem:[%s1 + $0x80] sm:$0xf]
  %v68 = vld [vmem:[%s1 + $0x84] sm:$0xf]
  %v69 = vld [vmem:[%s1 + $0x88] sm:$0xf]
  %v70 = vld [vmem:[%s1 + $0x8c] sm:$0xf]
  %v71 = vld [vmem:[%s1 + $0x90] sm:$0xf]
  %v72 = vld [vmem:[%s1 + $0x94] sm:$0xf]
  %v73 = vld [vmem:[%s1 + $0x98] sm:$0xf]
  %v74 = vld [vmem:[%s1 + $0x9c] sm:$0xf]
  %v75 = vld [vmem:[%s1 + $0xa0] sm:$0xf]
  %v76 = vld [vmem:[%s1 + $0xa4] sm:$0xf]
  %v77 = vld [vmem:[%s1 + $0xa8] sm:$0xf]
  %v78 = vld [vmem:[%s1 + $0xac] sm:$0xf]
  %v79 = vld [vmem:[%s1 + $0xb0] sm:$0xf]
  %v80 = vld [vmem:[%s1 + $0xb4] sm:$0xf]
  %v81 = vld [vmem:[%s1 + $0xb8] sm:$0xf]
  %v82 = vld [vmem:[%s1 + $0xbc] sm:$0xf]
  %v83 = vld [vmem:[%s1 + $0xc0] sm:$0xf]
  %v84 = vld [vmem:[%s1 + $0xc4] sm:$0xf]
  %v85 = vld [vmem:[%s1 + $0xc8] sm:$0xf]
  %v86 = vld [vmem:[%s1 + $0xcc] sm:$0xf]
  %v87 = vld [vmem:[%s1 + $0xd0] sm:$0xf]
  %v88 = vld [vmem:[%s1 + $0xd4] sm:$0xf]
  %v89 = vld [vmem:[%s1 + $0xd8] sm:$0xf]
  %v90 = vld [vmem:[%s1 + $0xdc] sm:$0xf]
  %v91 = vld [vmem:[%s1 + $0xe0] sm:$0xf]
  %v92 = vld [vmem:[%s1 + $0xe4] sm:$0xf]
  %v93 = vld [vmem:[%s1 + $0xe8] sm:$0xf]
  %v94 = vld [vmem:[%s1 + $0xec] sm:$0xf]
  %v95 = vld [vmem:[%s1 + $0xf0] sm:$0xf]
  %v96 = vld [vmem:[%s1 + $0xf4] sm:$0xf]
  %v97 = vld [vmem:[%s1 + $0xf8] sm:$0xf]
  %v98 = vld [vmem:[%s1 + $0xfc] sm:$0xf]
  %v99 = vld [vmem:[%s1 + $0x100] sm:$0xf]
  %v100 = vld [vmem:[%s1 + $0x104] sm:$0xf]
  %v101 = vld [vmem:[%s1 + $0x108] sm:$0xf]
  %v102 = vld [vmem:[%s1 + $0x10c] sm:$0xf]
  %v103 = vld [vmem:[%s1 + $0x110] sm:$0xf]
  %v104 = vld [vmem:[%s1 + $0x114] sm:$0xf]
  %v105 = vld [vmem:[%s1 + $0x118] sm:$0xf]
  %v106 = vld [vmem:[%s1 + $0x11c] sm:$0xf]
  %v107 = vld [vmem:[%s1 + $0x120] sm:$0xf]
  %v108 = vld [vmem:[%s1 + $0x124] sm:$0xf]
  %v109 = vld [vmem:[%s1 + $0x128] sm:$0xf]
  %v110 = vld [vmem:[%s1 + $0x12c] sm:$0xf]
  %v111 = vld [vmem:[%s1 + $0x130] sm:$0xf]
  %v112 = vld [vmem:[%s1 + $0x134] sm:$0xf]
  %v113 = vld [vmem:[%s1 + $0x138] sm:$0xf]
  %v114 = vld [vmem:[%s1 + $0x13c] sm:$0xf]
  %v115 = vld [vmem:[%s1 + $0x140] sm:$0xf]
  %v116 = vld [vmem:[%s1 + $0x144] sm:$0xf]
  %v117 = vld [vmem:[%s1 + $0x148] sm:$0xf]
  %v118 = vld [vmem:[%s1 + $0x14c] sm:$0xf]
  %v119 = vld [vmem:[%s1 + $0x150] sm:$0xf]
  %v120 = vld [vmem:[%s1 + $0x154] sm:$0xf]
  %v121 = vld [vmem:[%s1 + $0x158] sm:$0xf]
  %v122 = vld [vmem:[%s1 + $0x15c] sm:$0xf]
  %v123 = vld [vmem:[%s1 + $0x160] sm:$0xf]
  %v124 = vld [vmem:[%s1 + $0x164] sm:$0xf]
  %v125 = vld [vmem:[%s1 + $0x168] sm:$0xf]
  %v126 = vld [vmem:[%s1 + $0x16c] sm:$0xf]
  %v127 = vld [vmem:[%s1 + $0x170] sm:$0xf]
  %v128 = vld [vmem:[%s1 + $0x174] sm:$0xf]
  %v129 = vld [vmem:[%s1 + $0x178] sm:$0xf]
  %v130 = vld [vmem:[%s1 + $0x17c] sm:$0xf]
  %v131 = vld [vmem:[%s1 + $0x180] sm:$0xf]
  %v132 = vld [vmem:[%s1 + $0x184] sm:$0xf]
  %v133 = vld [vmem:[%s1 + $0x188] sm:$0xf]
  %v134 = vld [vmem:[%s1 + $0x18c] sm:$0xf]
  %v135 = vld [vmem:[%s1 + $0x190] sm:$0xf]
  %v136 = vld [vmem:[%s1 + $0x194] sm:$0xf]
  %v137 = vld [vmem:[%s1 + $0x198] sm:$0xf]
  %v138 = vld [vmem:[%s1 + $0x19c] sm:$0xf]
  %v139 = vld [vmem:[%s1 + $0x1a0] sm:$0xf]
  %v140 = vld [vmem:[%s1 + $0x1a4] sm:$0xf]
  %v141 = vld [vmem:[%s1 + $0x1a8] sm:$0xf]
  %v142 = vld [vmem:[%s1 + $0x1ac] sm:$0xf]
  %v143 = vld [vmem:[%s1 + $0x1b0] sm:$0xf]
  %v144 = vld [vmem:[%s1 + $0x1b4] sm:$0xf]
  %v145 = vld [vmem:[%s1 + $0x1b8] sm:$0xf]
  %v146 = vld [vmem:[%s1 + $0x1bc] sm:$0xf]
  %v167 = vunpack.c.l.b16 %v15
  %v168 = vunpack.c.h.b16 %v15
  %v169 = vunpack.c.l.b16 %v16
  %v170 = vunpack.c.h.b16 %v16
  %v171 = vunpack.c.l.b16 %v17
  %v172 = vunpack.c.h.b16 %v17
  %v173 = vunpack.c.l.b16 %v18
  %v174 = vunpack.c.l.b16 %v19
  %v175 = vunpack.c.h.b16 %v19
  %v176 = vunpack.c.l.b16 %v20
  %v177 = vunpack.c.h.b16 %v20
  %v178 = vunpack.c.l.b16 %v21
  %v179 = vunpack.c.h.b16 %v21
  %v180 = vunpack.c.l.b16 %v22
  %v181 = vunpack.c.l.b16 %v23
  %v182 = vunpack.c.h.b16 %v23
  %v183 = vunpack.c.l.b16 %v24
  %v184 = vunpack.c.h.b16 %v24
  %v185 = vunpack.c.l.b16 %v25
  %v186 = vunpack.c.h.b16 %v25
  %v187 = vunpack.c.l.b16 %v26
  %v188 = vunpack.c.l.b16 %v27
  %v189 = vunpack.c.h.b16 %v27
  %v190 = vunpack.c.l.b16 %v28
  %v191 = vunpack.c.h.b16 %v28
  %v192 = vunpack.c.l.b16 %v29
  %v193 = vunpack.c.h.b16 %v29
  %v194 = vunpack.c.l.b16 %v30
  %v195 = vunpack.c.l.b16 %v31
  %v196 = vunpack.c.h.b16 %v31
  %v197 = vunpack.c.l.b16 %v32
  %v198 = vunpack.c.h.b16 %v32
  %v199 = vunpack.c.l.b16 %v33
  %v200 = vunpack.c.h.b16 %v33
  %v201 = vunpack.c.l.b16 %v34
  %v202 = vpack.c.b16 %v174, %v167
  %v203 = vpack.c.b16 %v175, %v168
  %v204 = vpack.c.b16 %v176, %v169
  %v205 = vpack.c.b16 %v177, %v170
  %v206 = vpack.c.b16 %v178, %v171
  %v207 = vpack.c.b16 %v179, %v172
  %v208 = vpack.c.b16 %v180, %v173
  %v209 = vpack.c.b16 %v188, %v181
  %v210 = vpack.c.b16 %v189, %v182
  %v211 = vpack.c.b16 %v190, %v183
  %v212 = vpack.c.b16 %v191, %v184
  %v213 = vpack.c.b16 %v192, %v185
  %v214 = vpack.c.b16 %v193, %v186
  %v215 = vpack.c.b16 %v194, %v187
  %v216 = vpack.c.b16 %v195, %v195
  %v217 = vpack.c.b16 %v196, %v196
  %v218 = vpack.c.b16 %v197, %v197
  %v219 = vpack.c.b16 %v198, %v198
  %v220 = vpack.c.b16 %v199, %v199
  %v221 = vpack.c.b16 %v200, %v200
  %v222 = vpack.c.b16 %v201, %v201
  %v356 = vunpack.c.l.b16 %v35
  %v357 = vunpack.c.l.b16 %v36
  %v358 = vunpack.c.l.b16 %v37
  %v359 = vunpack.c.l.b16 %v38
  %v360 = vunpack.c.l.b16 %v39
  %v361 = vunpack.c.l.b16 %v40
  %v362 = vunpack.c.l.b16 %v41
  %v363 = vunpack.c.l.b16 %v42
  %v364 = vunpack.c.l.b16 %v43
  %v365 = vunpack.c.l.b16 %v44
  %v366 = vunpack.c.l.b16 %v45
  %v367 = vunpack.c.l.b16 %v46
  %v368 = vunpack.c.l.b16 %v47
  %v369 = vunpack.c.l.b16 %v48
  %v370 = vunpack.c.l.b16 %v49
  %v371 = vunpack.c.l.b16 %v50
  %v372 = vunpack.c.l.b16 %v51
  %v373 = vunpack.c.l.b16 %v52
  %v374 = vunpack.c.l.b16 %v53
  %v375 = vunpack.c.l.b16 %v54
  %v376 = vunpack.c.l.b16 %v55
  %v377 = vunpack.c.l.b16 %v56
  %v378 = vunpack.c.l.b16 %v57
  %v379 = vunpack.c.l.b16 %v58
  %v380 = vunpack.c.l.b16 %v59
  %v381 = vunpack.c.l.b16 %v60
  %v382 = vunpack.c.l.b16 %v61
  %v383 = vunpack.c.l.b16 %v62
  %v384 = vunpack.c.l.b16 %v63
  %v385 = vunpack.c.l.b16 %v64
  %v386 = vunpack.c.l.b16 %v65
  %v387 = vunpack.c.l.b16 %v66
  %v388 = vunpack.c.l.b16 %v67
  %v389 = vunpack.c.l.b16 %v68
  %v390 = vunpack.c.l.b16 %v69
  %v391 = vunpack.c.l.b16 %v70
  %v392 = vunpack.c.l.b16 %v71
  %v393 = vunpack.c.l.b16 %v72
  %v394 = vunpack.c.l.b16 %v73
  %v395 = vunpack.c.l.b16 %v74
  %v396 = vunpack.c.l.b16 %v75
  %v397 = vunpack.c.l.b16 %v76
  %v398 = vunpack.c.l.b16 %v77
  %v399 = vunpack.c.l.b16 %v78
  %v400 = vunpack.c.l.b16 %v79
  %v401 = vunpack.c.l.b16 %v80
  %v402 = vunpack.c.l.b16 %v81
  %v403 = vunpack.c.l.b16 %v82
  %v404 = vunpack.c.l.b16 %v83
  %v405 = vunpack.c.l.b16 %v84
  %v406 = vunpack.c.l.b16 %v85
  %v407 = vunpack.c.l.b16 %v86
  %v408 = vunpack.c.l.b16 %v87
  %v409 = vunpack.c.l.b16 %v88
  %v410 = vunpack.c.l.b16 %v89
  %v411 = vunpack.c.l.b16 %v90
  %v412 = vunpack.c.l.b16 %v91
  %v413 = vunpack.c.l.b16 %v92
  %v414 = vunpack.c.l.b16 %v93
  %v415 = vunpack.c.l.b16 %v94
  %v416 = vunpack.c.l.b16 %v95
  %v417 = vunpack.c.l.b16 %v96
  %v418 = vunpack.c.l.b16 %v97
  %v419 = vunpack.c.l.b16 %v98
  %v420 = vunpack.c.l.b16 %v99
  %v421 = vunpack.c.l.b16 %v100
  %v422 = vunpack.c.l.b16 %v101
  %v423 = vunpack.c.l.b16 %v102
  %v424 = vunpack.c.l.b16 %v103
  %v425 = vunpack.c.l.b16 %v104
  %v426 = vunpack.c.l.b16 %v105
  %v427 = vunpack.c.l.b16 %v106
  %v428 = vunpack.c.l.b16 %v107
  %v429 = vunpack.c.l.b16 %v108
  %v430 = vunpack.c.l.b16 %v109
  %v431 = vunpack.c.l.b16 %v110
  %v432 = vunpack.c.l.b16 %v111
  %v433 = vunpack.c.l.b16 %v112
  %v434 = vunpack.c.l.b16 %v113
  %v435 = vunpack.c.l.b16 %v114
  %v436 = vunpack.c.l.b16 %v115
  %v437 = vunpack.c.l.b16 %v116
  %v438 = vunpack.c.l.b16 %v117
  %v439 = vunpack.c.l.b16 %v118
  %v440 = vunpack.c.l.b16 %v119
  %v441 = vunpack.c.l.b16 %v120
  %v442 = vunpack.c.l.b16 %v121
  %v443 = vunpack.c.l.b16 %v122
  %v444 = vunpack.c.l.b16 %v123
  %v445 = vunpack.c.l.b16 %v124
  %v446 = vunpack.c.l.b16 %v125
  %v447 = vunpack.c.l.b16 %v126
  %v448 = vunpack.c.l.b16 %v127
  %v449 = vunpack.c.l.b16 %v128
  %v450 = vunpack.c.l.b16 %v129
  %v451 = vunpack.c.l.b16 %v130
  %v452 = vunpack.c.l.b16 %v131
  %v453 = vunpack.c.l.b16 %v132
  %v454 = vunpack.c.l.b16 %v133
  %v455 = vunpack.c.l.b16 %v134
  %v456 = vunpack.c.l.b16 %v135
  %v457 = vunpack.c.l.b16 %v136
  %v458 = vunpack.c.l.b16 %v137
  %v459 = vunpack.c.l.b16 %v138
  %v460 = vunpack.c.l.b16 %v139
  %v461 = vunpack.c.l.b16 %v140
  %v462 = vunpack.c.l.b16 %v141
  %v463 = vunpack.c.l.b16 %v142
  %v464 = vunpack.c.l.b16 %v143
  %v465 = vunpack.c.l.b16 %v144
  %v466 = vunpack.c.l.b16 %v145
  %v467 = vunpack.c.l.b16 %v146
  %v468 = vpack.c.b16 %v357, %v356
  %v469 = vpack.c.b16 %v359, %v358
  %v470 = vpack.c.b16 %v361, %v360
  %v471 = vpack.c.b16 %v363, %v362
  %v472 = vpack.c.b16 %v365, %v364
  %v473 = vpack.c.b16 %v367, %v366
  %v474 = vpack.c.b16 %v369, %v368
  %v475 = vpack.c.b16 %v371, %v370
  %v476 = vpack.c.b16 %v373, %v372
  %v477 = vpack.c.b16 %v375, %v374
  %v478 = vpack.c.b16 %v377, %v376
  %v479 = vpack.c.b16 %v379, %v378
  %v480 = vpack.c.b16 %v381, %v380
  %v481 = vpack.c.b16 %v383, %v382
  %v482 = vpack.c.b16 %v385, %v384
  %v483 = vpack.c.b16 %v387, %v386
  %v484 = vpack.c.b16 %v389, %v388
  %v485 = vpack.c.b16 %v391, %v390
  %v486 = vpack.c.b16 %v393, %v392
  %v487 = vpack.c.b16 %v395, %v394
  %v488 = vpack.c.b16 %v397, %v396
  %v489 = vpack.c.b16 %v399, %v398
  %v490 = vpack.c.b16 %v401, %v400
  %v491 = vpack.c.b16 %v403, %v402
  %v492 = vpack.c.b16 %v405, %v404
  %v493 = vpack.c.b16 %v407, %v406
  %v494 = vpack.c.b16 %v409, %v408
  %v495 = vpack.c.b16 %v411, %v410
  %v496 = vpack.c.b16 %v413, %v412
  %v497 = vpack.c.b16 %v415, %v414
  %v498 = vpack.c.b16 %v417, %v416
  %v499 = vpack.c.b16 %v419, %v418
  %v500 = vpack.c.b16 %v421, %v420
  %v501 = vpack.c.b16 %v423, %v422
  %v502 = vpack.c.b16 %v425, %v424
  %v503 = vpack.c.b16 %v427, %v426
  %v504 = vpack.c.b16 %v429, %v428
  %v505 = vpack.c.b16 %v431, %v430
  %v506 = vpack.c.b16 %v433, %v432
  %v507 = vpack.c.b16 %v435, %v434
  %v508 = vpack.c.b16 %v437, %v436
  %v509 = vpack.c.b16 %v439, %v438
  %v510 = vpack.c.b16 %v441, %v440
  %v511 = vpack.c.b16 %v443, %v442
  %v512 = vpack.c.b16 %v445, %v444
  %v513 = vpack.c.b16 %v447, %v446
  %v514 = vpack.c.b16 %v449, %v448
  %v515 = vpack.c.b16 %v451, %v450
  %v516 = vpack.c.b16 %v453, %v452
  %v517 = vpack.c.b16 %v455, %v454
  %v518 = vpack.c.b16 %v457, %v456
  %v519 = vpack.c.b16 %v459, %v458
  %v520 = vpack.c.b16 %v461, %v460
  %v521 = vpack.c.b16 %v463, %v462
  %v522 = vpack.c.b16 %v465, %v464
  %v523 = vpack.c.b16 %v467, %v466
  %580 = vmatprep.subr.bf16.mxu0 0
  %581 = vmatpush1.bf16.msra.mxu0 %v475
  %582 = vmatprep.subr.bf16.mxu0 0
  %583 = vmatpush1.bf16.msra.mxu0 %v474
  %584 = vmatprep.subr.bf16.mxu0 0
  %585 = vmatpush1.bf16.msra.mxu0 %v473
  %586 = vmatprep.subr.bf16.mxu0 0
  %587 = vmatpush1.bf16.msra.mxu0 %v472
  %588 = vmatprep.subr.bf16.mxu0 0
  %589 = vmatpush1.bf16.msra.mxu0 %v471
  %590 = vmatprep.subr.bf16.mxu0 0
  %591 = vmatpush1.bf16.msra.mxu0 %v470
  %592 = vmatprep.subr.bf16.mxu0 0
  %593 = vmatpush1.bf16.msra.mxu0 %v469
  %594 = vmatprep.subr.bf16.mxu0 0
  %595 = vmatpush1.bf16.msra.mxu0 %v468
  %596 = vmatprep.subr.bf16.mxu0 0
  %597 = vmatpush2.bf16.msra.mxu0 %v483
  %598 = vmatprep.subr.bf16.mxu0 0
  %599 = vmatpush2.bf16.msra.mxu0 %v482
  %600 = vmatprep.subr.bf16.mxu0 0
  %601 = vmatpush2.bf16.msra.mxu0 %v481
  %602 = vmatprep.subr.bf16.mxu0 0
  %603 = vmatpush2.bf16.msra.mxu0 %v480
  %604 = vmatprep.subr.bf16.mxu0 0
  %605 = vmatpush2.bf16.msra.mxu0 %v479
  %606 = vmatprep.subr.bf16.mxu0 0
  %607 = vmatpush2.bf16.msra.mxu0 %v478
  %608 = vmatprep.subr.bf16.mxu0 0
  %609 = vmatpush2.bf16.msra.mxu0 %v477
  %610 = vmatprep.subr.bf16.mxu0 0
  %611 = vmatpush2.bf16.msra.mxu0 %v476
  %612 = vmatprep.mubr.bf16.mxu0 %v203
  %613 = vmatmul.mubr.bf16.gmra.mxu0 %v202
  %v614 = vpop.f32.mrf.mxu0
  %v615 = vadd.f32 0.0, %v614
  %v616 = vpop.f32.mrf.mxu0
  %v617 = vpop.f32.mrf.mxu0
  %v618 = vadd.f32 0.0, %v617
  %v619 = vpop.f32.mrf.mxu0
  %620 = vmatprep.mubr.bf16.mxu0 %v210
  %621 = vmatmul.mubr.bf16.gmra.mxu0 %v209
  %v622 = vpop.f32.mrf.mxu0
  %v623 = vadd.f32 0.0, %v622
  %v624 = vpop.f32.mrf.mxu0
  %v625 = vpop.f32.mrf.mxu0
  %v626 = vadd.f32 0.0, %v625
  %v627 = vpop.f32.mrf.mxu0
  %628 = vmatprep.mubr.bf16.mxu0 %v217
  %629 = vmatmul.mubr.bf16.gmra.mxu0 %v216
  %v630 = vpop.f32.mrf.mxu0
  %v631 = vadd.f32 0.0, %v630
  %v632 = vpop.f32.mrf.mxu0
  %v633 = vpop.f32.mrf.mxu0
  %v634 = vpop.f32.mrf.mxu0
  %635 = vdwg.mxu0
  %636 = vmatprep.subr.bf16.mxu0 0
  %637 = vmatpush1.bf16.msra.mxu0 %v491
  %638 = vmatprep.subr.bf16.mxu0 0
  %639 = vmatpush1.bf16.msra.mxu0 %v490
  %640 = vmatprep.subr.bf16.mxu0 0
  %641 = vmatpush1.bf16.msra.mxu0 %v489
  %642 = vmatprep.subr.bf16.mxu0 0
  %643 = vmatpush1.bf16.msra.mxu0 %v488
  %644 = vmatprep.subr.bf16.mxu0 0
  %645 = vmatpush1.bf16.msra.mxu0 %v487
  %646 = vmatprep.subr.bf16.mxu0 0
  %647 = vmatpush1.bf16.msra.mxu0 %v486
  %648 = vmatprep.subr.bf16.mxu0 0
  %649 = vmatpush1.bf16.msra.mxu0 %v485
  %650 = vmatprep.subr.bf16.mxu0 0
  %651 = vmatpush1.bf16.msra.mxu0 %v484
  %652 = vmatprep.subr.bf16.mxu0 0
  %653 = vmatpush2.bf16.msra.mxu0 %v499
  %654 = vmatprep.subr.bf16.mxu0 0
  %655 = vmatpush2.bf16.msra.mxu0 %v498
  %656 = vmatprep.subr.bf16.mxu0 0
  %657 = vmatpush2.bf16.msra.mxu0 %v497
  %658 = vmatprep.subr.bf16.mxu0 0
  %659 = vmatpush2.bf16.msra.mxu0 %v496
  %660 = vmatprep.subr.bf16.mxu0 0
  %661 = vmatpush2.bf16.msra.mxu0 %v495
  %662 = vmatprep.subr.bf16.mxu0 0
  %663 = vmatpush2.bf16.msra.mxu0 %v494
  %664 = vmatprep.subr.bf16.mxu0 0
  %665 = vmatpush2.bf16.msra.mxu0 %v493
  %666 = vmatprep.subr.bf16.mxu0 0
  %667 = vmatpush2.bf16.msra.mxu0 %v492
  %668 = vmatprep.mubr.bf16.mxu0 %v205
  %669 = vmatmul.mubr.bf16.gmra.mxu0 %v204
  %v670 = vpop.f32.mrf.mxu0
  %v671 = vadd.f32 %v615, %v670
  %v672 = vpop.f32.mrf.mxu0
  %v673 = vpop.f32.mrf.mxu0
  %v674 = vadd.f32 %v618, %v673
  %v675 = vpop.f32.mrf.mxu0
  %676 = vmatprep.mubr.bf16.mxu0 %v212
  %677 = vmatmul.mubr.bf16.gmra.mxu0 %v211
  %v678 = vpop.f32.mrf.mxu0
  %v679 = vadd.f32 %v623, %v678
  %v680 = vpop.f32.mrf.mxu0
  %v681 = vpop.f32.mrf.mxu0
  %v682 = vadd.f32 %v626, %v681
  %v683 = vpop.f32.mrf.mxu0
  %684 = vmatprep.mubr.bf16.mxu0 %v219
  %685 = vmatmul.mubr.bf16.gmra.mxu0 %v218
  %v686 = vpop.f32.mrf.mxu0
  %v687 = vadd.f32 %v631, %v686
  %v688 = vpop.f32.mrf.mxu0
  %v689 = vpop.f32.mrf.mxu0
  %v690 = vpop.f32.mrf.mxu0
  %691 = vdwg.mxu0
  %692 = vmatprep.subr.bf16.mxu0 0
  %693 = vmatpush1.bf16.msra.mxu0 %v507
  %694 = vmatprep.subr.bf16.mxu0 0
  %695 = vmatpush1.bf16.msra.mxu0 %v506
  %696 = vmatprep.subr.bf16.mxu0 0
  %697 = vmatpush1.bf16.msra.mxu0 %v505
  %698 = vmatprep.subr.bf16.mxu0 0
  %699 = vmatpush1.bf16.msra.mxu0 %v504
  %700 = vmatprep.subr.bf16.mxu0 0
  %701 = vmatpush1.bf16.msra.mxu0 %v503
  %702 = vmatprep.subr.bf16.mxu0 0
  %703 = vmatpush1.bf16.msra.mxu0 %v502
  %704 = vmatprep.subr.bf16.mxu0 0
  %705 = vmatpush1.bf16.msra.mxu0 %v501
  %706 = vmatprep.subr.bf16.mxu0 0
  %707 = vmatpush1.bf16.msra.mxu0 %v500
  %708 = vmatprep.subr.bf16.mxu0 0
  %709 = vmatpush2.bf16.msra.mxu0 %v515
  %710 = vmatprep.subr.bf16.mxu0 0
  %711 = vmatpush2.bf16.msra.mxu0 %v514
  %712 = vmatprep.subr.bf16.mxu0 0
  %713 = vmatpush2.bf16.msra.mxu0 %v513
  %714 = vmatprep.subr.bf16.mxu0 0
  %715 = vmatpush2.bf16.msra.mxu0 %v512
  %716 = vmatprep.subr.bf16.mxu0 0
  %717 = vmatpush2.bf16.msra.mxu0 %v511
  %718 = vmatprep.subr.bf16.mxu0 0
  %719 = vmatpush2.bf16.msra.mxu0 %v510
  %720 = vmatprep.subr.bf16.mxu0 0
  %721 = vmatpush2.bf16.msra.mxu0 %v509
  %722 = vmatprep.subr.bf16.mxu0 0
  %723 = vmatpush2.bf16.msra.mxu0 %v508
  %724 = vmatprep.mubr.bf16.mxu0 %v207
  %725 = vmatmul.mubr.bf16.gmra.mxu0 %v206
  %v726 = vpop.f32.mrf.mxu0
  %v727 = vadd.f32 %v671, %v726
  %v728 = vpop.f32.mrf.mxu0
  %v729 = vpop.f32.mrf.mxu0
  %v730 = vadd.f32 %v674, %v729
  %v731 = vpop.f32.mrf.mxu0
  %732 = vmatprep.mubr.bf16.mxu0 %v214
  %733 = vmatmul.mubr.bf16.gmra.mxu0 %v213
  %v734 = vpop.f32.mrf.mxu0
  %v735 = vadd.f32 %v679, %v734
  %v736 = vpop.f32.mrf.mxu0
  %v737 = vpop.f32.mrf.mxu0
  %v738 = vadd.f32 %v682, %v737
  %v739 = vpop.f32.mrf.mxu0
  %740 = vmatprep.mubr.bf16.mxu0 %v221
  %741 = vmatmul.mubr.bf16.gmra.mxu0 %v220
  %v742 = vpop.f32.mrf.mxu0
  %v743 = vadd.f32 %v687, %v742
  %v744 = vpop.f32.mrf.mxu0
  %v745 = vpop.f32.mrf.mxu0
  %v746 = vpop.f32.mrf.mxu0
  %747 = vdwg.mxu0
  %748 = vmatprep.subr.bf16.mxu0 0
  %749 = vmatpush1.bf16.msra.mxu0 %v523
  %750 = vmatprep.subr.bf16.mxu0 0
  %751 = vmatpush1.bf16.msra.mxu0 %v522
  %752 = vmatprep.subr.bf16.mxu0 0
  %753 = vmatpush1.bf16.msra.mxu0 %v521
  %754 = vmatprep.subr.bf16.mxu0 0
  %755 = vmatpush1.bf16.msra.mxu0 %v520
  %756 = vmatprep.subr.bf16.mxu0 0
  %757 = vmatpush1.bf16.msra.mxu0 %v519
  %758 = vmatprep.subr.bf16.mxu0 0
  %759 = vmatpush1.bf16.msra.mxu0 %v518
  %760 = vmatprep.subr.bf16.mxu0 0
  %761 = vmatpush1.bf16.msra.mxu0 %v517
  %762 = vmatprep.subr.bf16.mxu0 0
  %763 = vmatpush1.bf16.msra.mxu0 %v516
  %764 = vmatprep.subr.bf16.mxu0 0
  %765 = vmatpush2.bf16.msra.mxu0 0
  %766 = vmatprep.subr.bf16.mxu0 0
  %767 = vmatpush2.bf16.msra.mxu0 0
  %768 = vmatprep.subr.bf16.mxu0 0
  %769 = vmatpush2.bf16.msra.mxu0 0
  %770 = vmatprep.subr.bf16.mxu0 0
  %771 = vmatpush2.bf16.msra.mxu0 0
  %772 = vmatprep.subr.bf16.mxu0 0
  %773 = vmatpush2.bf16.msra.mxu0 0
  %774 = vmatprep.subr.bf16.mxu0 0
  %775 = vmatpush2.bf16.msra.mxu0 0
  %776 = vmatprep.subr.bf16.mxu0 0
  %777 = vmatpush2.bf16.msra.mxu0 0
  %778 = vmatprep.subr.bf16.mxu0 0
  %779 = vmatpush2.bf16.msra.mxu0 0
  %780 = vmatprep.mubr.bf16.mxu0 0
  %781 = vmatmul.mubr.bf16.gmra.mxu0 %v208
  %v782 = vpop.f32.mrf.mxu0
  %v783 = vadd.f32 %v727, %v782
  %v784 = vpop.f32.mrf.mxu0
  %v785 = vpop.f32.mrf.mxu0
  %v786 = vadd.f32 %v730, %v785
  %v787 = vpop.f32.mrf.mxu0
  %788 = vmatprep.mubr.bf16.mxu0 0
  %789 = vmatmul.mubr.bf16.gmra.mxu0 %v215
  %v790 = vpop.f32.mrf.mxu0
  %v791 = vadd.f32 %v735, %v790
  %v792 = vpop.f32.mrf.mxu0
  %v793 = vpop.f32.mrf.mxu0
  %v794 = vadd.f32 %v738, %v793
  %v795 = vpop.f32.mrf.mxu0
  %796 = vmatprep.mubr.bf16.mxu0 0
  %797 = vmatmul.mubr.bf16.gmra.mxu0 %v222
  %v798 = vpop.f32.mrf.mxu0
  %v799 = vadd.f32 %v743, %v798
  %v800 = vpop.f32.mrf.mxu0
  %v801 = vpop.f32.mrf.mxu0
  %v802 = vpop.f32.mrf.mxu0
  %803 = vdwg.mxu0
  %804 = vst [vmem:[%s2] sm:$0xff] %v783
  %805 = vst [vmem:[%s2 + $0x8] sm:$0xff] %v786
  %806 = vst [vmem:[%s2 + $0x10] sm:$0xff] %v791
  %807 = vst [vmem:[%s2 + $0x18] sm:$0xff] %v794
  %808 = vst [vmem:[%s2 + $0x20] sm:$0xff] %v799
  %v809 = vadd.f32 %v783, %v786
  %v810 = vadd.f32 %v809, %v791
  %v811 = vadd.f32 %v810, %v794
  %v812 = vadd.f32 %v811, %v799
  %v813 = vrot.slane %v812, 4
  %v814 = vadd.f32 %v812, %v813
  %v815 = vrot.slane %v814, 2
  %v816 = vadd.f32 %v814, %v815
  %v817 = vrot.slane %v816, 1
  %v818 = vadd.f32 %v816, %v817
  %v819 = vmul.f32 %v783, %v783
  %v820 = vmul.f32 %v786, %v786
  %v821 = vmul.f32 %v791, %v791
  %v822 = vmul.f32 %v794, %v794
  %v823 = vmul.f32 %v799, %v799
  %v824 = vadd.f32 %v819, %v820
  %v825 = vadd.f32 %v824, %v821
  %v826 = vadd.f32 %v825, %v822
  %v827 = vadd.f32 %v826, %v823
  %v828 = vrot.slane %v827, 4
  %v829 = vadd.f32 %v827, %v828
  %v830 = vrot.slane %v829, 2
  %v831 = vadd.f32 %v829, %v830
  %v832 = vrot.slane %v831, 1
  %v833 = vadd.f32 %v831, %v832
  %834 = vst [vmem:[%s3] sm:$0xff] %v818
  %835 = vst [vmem:[%s4] sm:$0xff] %v833
  // Predicated region
  $region10: #{linking_forward.10} parent=0 // pred_check
    _
  $region11: #{linking_forward.10} parent=0 // pred_check_branch
    %837 = sbr.rel (0) target = $region13
  $region12: #{linking_forward.10} parent=0 // pred_region
    _
  $region13: #{linking_forward.10} parent=0 // pred_fallthru
    _
  // Predicated region
  $region14: #{linking_forward.10} parent=0 // pred_check
    _
  $region15: #{linking_forward.10} parent=0 // pred_check_branch
    %839 = sbr.rel (0) target = $region17
  $region16: #{linking_forward.10} parent=0 // pred_region
    _
  $region17: #{linking_forward.10} parent=0 // pred_fallthru
    _
  // Predicated region
  $region18: #{linking_forward.10} parent=0 // pred_check
    _
  $region19: #{linking_forward.10} parent=0 // pred_check_branch
    %841 = sbr.rel (0) target = $region21
  $region20: #{linking_forward.10} parent=0 // pred_region
    _
  $region21: #{linking_forward.10} parent=0 // pred_fallthru
    _
  // Predicated region
  $region22: #{linking_forward.10} parent=0 // pred_check
    _
  $region23: #{linking_forward.10} parent=0 // pred_check_branch
    %843 = sbr.rel (0) target = $region25
  $region24: #{linking_forward.10} parent=0 // pred_region
    _
  $region25: #{linking_forward.10} parent=0 // pred_fallthru
    _
  // Predicated region
  $region26: #{linking_forward.10} parent=0 // pred_check
    _
  $region27: #{linking_forward.10} parent=0 // pred_check_branch
    %845 = sbr.rel (0) target = $region29
  $region28: #{linking_forward.10} parent=0 // pred_region
    _
  $region29: #{linking_forward.10} parent=0 // pred_fallthru
    _
  // Predicated region
  $region30: #{linking_forward.10} parent=0 // pred_check
    _
  $region31: #{linking_forward.10} parent=0 // pred_check_branch
    %847 = sbr.rel (0) target = $region33
  $region32: #{linking_forward.10} parent=0 // pred_region
    _
  $region33: #{linking_forward.10} parent=0 // pred_fallthru
    _

// kernel: linking_forward.13
$region0: #{linking_forward.13}
  #allocation0 [shape = 'u32[]', space=smem, size = 0x4, offset = 0x4, fixed_abs, tag = 'smem constant byte address 0x4 - core index']
  #allocation1 [shape = 'u32[144,128]{1,0:T(1,128)}', space=vmem, size = 0x12000, scoped, tag = 'internal scratch']
  %s0 = inlined_call_operand.vmem [shape: f32[384,128], index: 0, kind: input, shape index: {}]
  %s1 = inlined_call_operand.vmem [shape: f32[1,128], index: 1, kind: input, shape index: {}]
  %s2 = inlined_call_operand.vmem [shape: f32[1,128], index: 2, kind: input, shape index: {}]
  %s3 = inlined_call_operand.hbm [shape: f32[384,128], index: 3, kind: output, shape index: {}]
  %s4 = sld [smem:[#allocation0]]
  $region22: #{linking_forward.13} parent=0
    _
  %s6 = ssub.s32 1, %s4
  %s7 = scalar_select 0, %s6, %s4
  $region1: #{linking_forward.13} parent=0
    #allocation2 [shape = 'u8[196608]{0}', space=vmem, size = 0x30000, scoped, tag = 'output window, operand 0, single buffered']
    #allocation3 [shape = 's32[1]{0}', space=sflag, size = 0x4, scoped, tag = 'scoped memory for linking_forward.13']
    %8 = vsyncpa [#allocation3], 0
    // Predicated region
    $region2: #{linking_forward.13} parent=1 // pred_check
      _
    $region3: #{linking_forward.13} parent=1 // pred_check_branch
      %10 = sbr.rel (0) target = $region5
    $region4: #{linking_forward.13} parent=1 // pred_region
      _
    $region5: #{linking_forward.13} parent=1 // pred_fallthru
      _
    // Predicated region
    $region6: #{linking_forward.13} parent=1 // pred_check
      _
    $region7: #{linking_forward.13} parent=1 // pred_check_branch
      %12 = sbr.rel (0) target = $region9
    $region8: #{linking_forward.13} parent=1 // pred_region
      _
    $region9: #{linking_forward.13} parent=1 // pred_fallthru
      _
    // Predicated region
    $region10: #{linking_forward.13} parent=1 // pred_check
      _
    $region11: #{linking_forward.13} parent=1 // pred_check_branch
      %14 = sbr.rel (0) target = $region13
    $region12: #{linking_forward.13} parent=1 // pred_region
      _
    $region13: #{linking_forward.13} parent=1 // pred_fallthru
      _
    %v15 = vld [vmem:[%s0] sm:$0xff]
    %v16 = vld [vmem:[%s0 + $0x8] sm:$0xff]
    %v17 = vld [vmem:[%s0 + $0x10] sm:$0xff]
    %v18 = vld [vmem:[%s0 + $0x18] sm:$0xff]
    %v19 = vld [vmem:[%s0 + $0x20] sm:$0xff]
    %v20 = vld [vmem:[%s0 + $0x28] sm:$0xff]
    %v21 = vld [vmem:[%s0 + $0x30] sm:$0xff]
    %v22 = vld [vmem:[%s0 + $0x38] sm:$0xff]
    %v23 = vld [vmem:[%s0 + $0x40] sm:$0xff]
    %v24 = vld [vmem:[%s0 + $0x48] sm:$0xff]
    %v25 = vld [vmem:[%s0 + $0x50] sm:$0xff]
    %v26 = vld [vmem:[%s0 + $0x58] sm:$0xff]
    %v27 = vld [vmem:[%s0 + $0x60] sm:$0xff]
    %v28 = vld [vmem:[%s0 + $0x68] sm:$0xff]
    %v29 = vld [vmem:[%s0 + $0x70] sm:$0xff]
    %v30 = vld [vmem:[%s0 + $0x78] sm:$0xff]
    %v31 = vld [vmem:[%s0 + $0x80] sm:$0xff]
    %v32 = vld [vmem:[%s0 + $0x88] sm:$0xff]
    %v33 = vld [vmem:[%s0 + $0x90] sm:$0xff]
    %v34 = vld [vmem:[%s0 + $0x98] sm:$0xff]
    %v35 = vld [vmem:[%s0 + $0xa0] sm:$0xff]
    %v36 = vld [vmem:[%s0 + $0xa8] sm:$0xff]
    %v37 = vld [vmem:[%s0 + $0xb0] sm:$0xff]
    %v38 = vld [vmem:[%s0 + $0xb8] sm:$0xff]
    %v39 = vld [vmem:[%s0 + $0xc0] sm:$0xff]
    %v40 = vld [vmem:[%s0 + $0xc8] sm:$0xff]
    %v41 = vld [vmem:[%s0 + $0xd0] sm:$0xff]
    %v42 = vld [vmem:[%s0 + $0xd8] sm:$0xff]
    %v43 = vld [vmem:[%s0 + $0xe0] sm:$0xff]
    %v44 = vld [vmem:[%s0 + $0xe8] sm:$0xff]
    %v45 = vld [vmem:[%s0 + $0xf0] sm:$0xff]
    %v46 = vld [vmem:[%s0 + $0xf8] sm:$0xff]
    %v47 = vld [vmem:[%s0 + $0x100] sm:$0xff]
    %v48 = vld [vmem:[%s0 + $0x108] sm:$0xff]
    %v49 = vld [vmem:[%s0 + $0x110] sm:$0xff]
    %v50 = vld [vmem:[%s0 + $0x118] sm:$0xff]
    %v51 = vld [vmem:[%s0 + $0x120] sm:$0xff]
    %v52 = vld [vmem:[%s0 + $0x128] sm:$0xff]
    %v53 = vld [vmem:[%s0 + $0x130] sm:$0xff]
    %v54 = vld [vmem:[%s0 + $0x138] sm:$0xff]
    %v55 = vld [vmem:[%s0 + $0x140] sm:$0xff]
    %v56 = vld [vmem:[%s0 + $0x148] sm:$0xff]
    %v57 = vld [vmem:[%s0 + $0x150] sm:$0xff]
    %v58 = vld [vmem:[%s0 + $0x158] sm:$0xff]
    %v59 = vld [vmem:[%s0 + $0x160] sm:$0xff]
    %v60 = vld [vmem:[%s0 + $0x168] sm:$0xff]
    %v61 = vld [vmem:[%s0 + $0x170] sm:$0xff]
    %v62 = vld [vmem:[%s0 + $0x178] sm:$0xff]
    %v63 = vld [vmem:[%s1] sm:$0x1]
    %v65 = vlaneseq
    %v66 = vshrl.u32 %v65, 7
    %v67 = vsub.s32 0, %v66
    %v68 = vrot.slane %v63, %v67
    %v70 = vmul.f32 %v15, %v68
    %v71 = vmul.f32 %v16, %v68
    %v72 = vmul.f32 %v17, %v68
    %v73 = vmul.f32 %v18, %v68
    %v74 = vmul.f32 %v19, %v68
    %v75 = vmul.f32 %v20, %v68
    %v76 = vmul.f32 %v21, %v68
    %v77 = vmul.f32 %v22, %v68
    %v78 = vmul.f32 %v23, %v68
    %v79 = vmul.f32 %v24, %v68
    %v80 = vmul.f32 %v25, %v68
    %v81 = vmul.f32 %v26, %v68
    %v82 = vmul.f32 %v27, %v68
    %v83 = vmul.f32 %v28, %v68
    %v84 = vmul.f32 %v29, %v68
    %v85 = vmul.f32 %v30, %v68
    %v86 = vmul.f32 %v31, %v68
    %v87 = vmul.f32 %v32, %v68
    %v88 = vmul.f32 %v33, %v68
    %v89 = vmul.f32 %v34, %v68
    %v90 = vmul.f32 %v35, %v68
    %v91 = vmul.f32 %v36, %v68
    %v92 = vmul.f32 %v37, %v68
    %v93 = vmul.f32 %v38, %v68
    %v94 = vmul.f32 %v39, %v68
    %v95 = vmul.f32 %v40, %v68
    %v96 = vmul.f32 %v41, %v68
    %v97 = vmul.f32 %v42, %v68
    %v98 = vmul.f32 %v43, %v68
    %v99 = vmul.f32 %v44, %v68
    %v100 = vmul.f32 %v45, %v68
    %v101 = vmul.f32 %v46, %v68
    %v102 = vmul.f32 %v47, %v68
    %v103 = vmul.f32 %v48, %v68
    %v104 = vmul.f32 %v49, %v68
    %v105 = vmul.f32 %v50, %v68
    %v106 = vmul.f32 %v51, %v68
    %v107 = vmul.f32 %v52, %v68
    %v108 = vmul.f32 %v53, %v68
    %v109 = vmul.f32 %v54, %v68
    %v110 = vmul.f32 %v55, %v68
    %v111 = vmul.f32 %v56, %v68
    %v112 = vmul.f32 %v57, %v68
    %v113 = vmul.f32 %v58, %v68
    %v114 = vmul.f32 %v59, %v68
    %v115 = vmul.f32 %v60, %v68
    %v116 = vmul.f32 %v61, %v68
    %v117 = vmul.f32 %v62, %v68
    %v118 = vld [vmem:[%s2] sm:$0x1]
    %v120 = vlaneseq
    %v121 = vshrl.u32 %v120, 7
    %v122 = vsub.s32 0, %v121
    %v123 = vrot.slane %v118, %v122
    %v125 = vadd.f32 %v70, %v123
    %v126 = vadd.f32 %v71, %v123
    %v127 = vadd.f32 %v72, %v123
    %v128 = vadd.f32 %v73, %v123
    %v129 = vadd.f32 %v74, %v123
    %v130 = vadd.f32 %v75, %v123
    %v131 = vadd.f32 %v76, %v123
    %v132 = vadd.f32 %v77, %v123
    %v133 = vadd.f32 %v78, %v123
    %v134 = vadd.f32 %v79, %v123
    %v135 = vadd.f32 %v80, %v123
    %v136 = vadd.f32 %v81, %v123
    %v137 = vadd.f32 %v82, %v123
    %v138 = vadd.f32 %v83, %v123
    %v139 = vadd.f32 %v84, %v123
    %v140 = vadd.f32 %v85, %v123
    %v141 = vadd.f32 %v86, %v123
    %v142 = vadd.f32 %v87, %v123
    %v143 = vadd.f32 %v88, %v123
    %v144 = vadd.f32 %v89, %v123
    %v145 = vadd.f32 %v90, %v123
    %v146 = vadd.f32 %v91, %v123
    %v147 = vadd.f32 %v92, %v123
    %v148 = vadd.f32 %v93, %v123
    %v149 = vadd.f32 %v94, %v123
    %v150 = vadd.f32 %v95, %v123
    %v151 = vadd.f32 %v96, %v123
    %v152 = vadd.f32 %v97, %v123
    %v153 = vadd.f32 %v98, %v123
    %v154 = vadd.f32 %v99, %v123
    %v155 = vadd.f32 %v100, %v123
    %v156 = vadd.f32 %v101, %v123
    %v157 = vadd.f32 %v102, %v123
    %v158 = vadd.f32 %v103, %v123
    %v159 = vadd.f32 %v104, %v123
    %v160 = vadd.f32 %v105, %v123
    %v161 = vadd.f32 %v106, %v123
    %v162 = vadd.f32 %v107, %v123
    %v163 = vadd.f32 %v108, %v123
    %v164 = vadd.f32 %v109, %v123
    %v165 = vadd.f32 %v110, %v123
    %v166 = vadd.f32 %v111, %v123
    %v167 = vadd.f32 %v112, %v123
    %v168 = vadd.f32 %v113, %v123
    %v169 = vadd.f32 %v114, %v123
    %v170 = vadd.f32 %v115, %v123
    %v171 = vadd.f32 %v116, %v123
    %v172 = vadd.f32 %v117, %v123
    %v173 = vmax.f32 %v125, 0.0
    %v174 = vmax.f32 %v126, 0.0
    %v175 = vmax.f32 %v127, 0.0
    %v176 = vmax.f32 %v128, 0.0
    %v177 = vmax.f32 %v129, 0.0
    %v178 = vmax.f32 %v130, 0.0
    %v179 = vmax.f32 %v131, 0.0
    %v180 = vmax.f32 %v132, 0.0
    %v181 = vmax.f32 %v133, 0.0
    %v182 = vmax.f32 %v134, 0.0
    %v183 = vmax.f32 %v135, 0.0
    %v184 = vmax.f32 %v136, 0.0
    %v185 = vmax.f32 %v137, 0.0
    %v186 = vmax.f32 %v138, 0.0
    %v187 = vmax.f32 %v139, 0.0
    %v188 = vmax.f32 %v140, 0.0
    %v189 = vmax.f32 %v141, 0.0
    %v190 = vmax.f32 %v142, 0.0
    %v191 = vmax.f32 %v143, 0.0
    %v192 = vmax.f32 %v144, 0.0
    %v193 = vmax.f32 %v145, 0.0
    %v194 = vmax.f32 %v146, 0.0
    %v195 = vmax.f32 %v147, 0.0
    %v196 = vmax.f32 %v148, 0.0
    %v197 = vmax.f32 %v149, 0.0
    %v198 = vmax.f32 %v150, 0.0
    %v199 = vmax.f32 %v151, 0.0
    %v200 = vmax.f32 %v152, 0.0
    %v201 = vmax.f32 %v153, 0.0
    %v202 = vmax.f32 %v154, 0.0
    %v203 = vmax.f32 %v155, 0.0
    %v204 = vmax.f32 %v156, 0.0
    %v205 = vmax.f32 %v157, 0.0
    %v206 = vmax.f32 %v158, 0.0
    %v207 = vmax.f32 %v159, 0.0
    %v208 = vmax.f32 %v160, 0.0
    %v209 = vmax.f32 %v161, 0.0
    %v210 = vmax.f32 %v162, 0.0
    %v211 = vmax.f32 %v163, 0.0
    %v212 = vmax.f32 %v164, 0.0
    %v213 = vmax.f32 %v165, 0.0
    %v214 = vmax.f32 %v166, 0.0
    %v215 = vmax.f32 %v167, 0.0
    %v216 = vmax.f32 %v168, 0.0
    %v217 = vmax.f32 %v169, 0.0
    %v218 = vmax.f32 %v170, 0.0
    %v219 = vmax.f32 %v171, 0.0
    %v220 = vmax.f32 %v172, 0.0
    %221 = vst [vmem:[#allocation2] sm:$0xff] %v173
    %222 = vst [vmem:[#allocation2 + $0x8] sm:$0xff] %v174
    %223 = vst [vmem:[#allocation2 + $0x10] sm:$0xff] %v175
    %224 = vst [vmem:[#allocation2 + $0x18] sm:$0xff] %v176
    %225 = vst [vmem:[#allocation2 + $0x20] sm:$0xff] %v177
    %226 = vst [vmem:[#allocation2 + $0x28] sm:$0xff] %v178
    %227 = vst [vmem:[#allocation2 + $0x30] sm:$0xff] %v179
    %228 = vst [vmem:[#allocation2 + $0x38] sm:$0xff] %v180
    %229 = vst [vmem:[#allocation2 + $0x40] sm:$0xff] %v181
    %230 = vst [vmem:[#allocation2 + $0x48] sm:$0xff] %v182
    %231 = vst [vmem:[#allocation2 + $0x50] sm:$0xff] %v183
    %232 = vst [vmem:[#allocation2 + $0x58] sm:$0xff] %v184
    %233 = vst [vmem:[#allocation2 + $0x60] sm:$0xff] %v185
    %234 = vst [vmem:[#allocation2 + $0x68] sm:$0xff] %v186
    %235 = vst [vmem:[#allocation2 + $0x70] sm:$0xff] %v187
    %236 = vst [vmem:[#allocation2 + $0x78] sm:$0xff] %v188
    %237 = vst [vmem:[#allocation2 + $0x80] sm:$0xff] %v189
    %238 = vst [vmem:[#allocation2 + $0x88] sm:$0xff] %v190
    %239 = vst [vmem:[#allocation2 + $0x90] sm:$0xff] %v191
    %240 = vst [vmem:[#allocation2 + $0x98] sm:$0xff] %v192
    %241 = vst [vmem:[#allocation2 + $0xa0] sm:$0xff] %v193
    %242 = vst [vmem:[#allocation2 + $0xa8] sm:$0xff] %v194
    %243 = vst [vmem:[#allocation2 + $0xb0] sm:$0xff] %v195
    %244 = vst [vmem:[#allocation2 + $0xb8] sm:$0xff] %v196
    %245 = vst [vmem:[#allocation2 + $0xc0] sm:$0xff] %v197
    %246 = vst [vmem:[#allocation2 + $0xc8] sm:$0xff] %v198
    %247 = vst [vmem:[#allocation2 + $0xd0] sm:$0xff] %v199
    %248 = vst [vmem:[#allocation2 + $0xd8] sm:$0xff] %v200
    %249 = vst [vmem:[#allocation2 + $0xe0] sm:$0xff] %v201
    %250 = vst [vmem:[#allocation2 + $0xe8] sm:$0xff] %v202
    %251 = vst [vmem:[#allocation2 + $0xf0] sm:$0xff] %v203
    %252 = vst [vmem:[#allocation2 + $0xf8] sm:$0xff] %v204
    %253 = vst [vmem:[#allocation2 + $0x100] sm:$0xff] %v205
    %254 = vst [vmem:[#allocation2 + $0x108] sm:$0xff] %v206
    %255 = vst [vmem:[#allocation2 + $0x110] sm:$0xff] %v207
    %256 = vst [vmem:[#allocation2 + $0x118] sm:$0xff] %v208
    %257 = vst [vmem:[#allocation2 + $0x120] sm:$0xff] %v209
    %258 = vst [vmem:[#allocation2 + $0x128] sm:$0xff] %v210
    %259 = vst [vmem:[#allocation2 + $0x130] sm:$0xff] %v211
    %260 = vst [vmem:[#allocation2 + $0x138] sm:$0xff] %v212
    %261 = vst [vmem:[#allocation2 + $0x140] sm:$0xff] %v213
    %262 = vst [vmem:[#allocation2 + $0x148] sm:$0xff] %v214
    %263 = vst [vmem:[#allocation2 + $0x150] sm:$0xff] %v215
    %264 = vst [vmem:[#allocation2 + $0x158] sm:$0xff] %v216
    %265 = vst [vmem:[#allocation2 + $0x160] sm:$0xff] %v217
    %266 = vst [vmem:[#allocation2 + $0x168] sm:$0xff] %v218
    %267 = vst [vmem:[#allocation2 + $0x170] sm:$0xff] %v219
    %268 = vst [vmem:[#allocation2 + $0x178] sm:$0xff] %v220
    // Predicated region
    $region14: #{linking_forward.13} parent=1 // pred_check
      _
    $region15: #{linking_forward.13} parent=1 // pred_check_branch
      %270 = sbr.rel (0) target = $region17
    $region16: #{linking_forward.13} parent=1 // pred_region
      %s272 = ssub.s32 6144, 6144
      %273 = vsyncadd [#allocation3], %s272
      %s274 = sshll.u32 [#allocation2], 4
      %s275 = int_to_ptr.vmem [resolvable:$true] %s274
      %280 = dma.vmem_to_hbm [thread:$0]  %s275, 6144, %s3, [#allocation3], 128, 128, 8
    $region17: #{linking_forward.13} parent=1 // pred_fallthru
      _
    // Predicated region
    $region18: #{linking_forward.13} parent=1 // pred_check
      _
    $region19: #{linking_forward.13} parent=1 // pred_check_branch
      %282 = sbr.rel (0) target = $region21
    $region20: #{linking_forward.13} parent=1 // pred_region
      %283 = dma.done [#allocation3], 6144
    $region21: #{linking_forward.13} parent=1 // pred_fallthru
      _
    %284 = vsyncpa [#allocation3], 1

// kernel: linking_forward.12
$region0: #{linking_forward.12}
  #allocation0 [shape = 'u32[]', space=smem, size = 0x4, offset = 0x4, fixed_abs, tag = 'smem constant byte address 0x4 - core index']
  #allocation1 [shape = 'u32[144,128]{1,0:T(1,128)}', space=vmem, size = 0x12000, scoped, tag = 'internal scratch']
  %s0 = inlined_call_operand.vmem [shape: bf16[384,384], index: 0, kind: input, shape index: {}]
  %s1 = inlined_call_operand.vmem [shape: bf16[384,128], index: 1, kind: input, shape index: {}]
  %s2 = inlined_call_operand.vmem [shape: f32[384,128], index: 2, kind: output, shape index: {0}]
  %s3 = inlined_call_operand.vmem [shape: f32[1,8,128], index: 3, kind: output, shape index: {1}]
  %s4 = inlined_call_operand.vmem [shape: f32[1,8,128], index: 4, kind: output, shape index: {2}]
  %5 = xla_tuple %s2, %s3, %s4
  %s6 = sld [smem:[#allocation0]]
  $region34: #{linking_forward.12} parent=0
    _
  %s8 = ssub.s32 1, %s6
  %s9 = scalar_select 0, %s8, %s6
  // Predicated region
  $region2: #{linking_forward.12} parent=0 // pred_check
    _
  $region3: #{linking_forward.12} parent=0 // pred_check_branch
    %11 = sbr.rel (0) target = $region5
  $region4: #{linking_forward.12} parent=0 // pred_region
    _
  $region5: #{linking_forward.12} parent=0 // pred_fallthru
    _
  // Predicated region
  $region6: #{linking_forward.12} parent=0 // pred_check
    _
  $region7: #{linking_forward.12} parent=0 // pred_check_branch
    %13 = sbr.rel (0) target = $region9
  $region8: #{linking_forward.12} parent=0 // pred_region
    _
  $region9: #{linking_forward.12} parent=0 // pred_fallthru
    _
  %v15 = vld [vmem:[%s0] sm:$0xff]
  %v16 = vld [vmem:[%s0 + $0x8] sm:$0xf]
  %v17 = vld [vmem:[%s0 + $0xc] sm:$0xff]
  %v18 = vld [vmem:[%s0 + $0x14] sm:$0xf]
  %v19 = vld [vmem:[%s0 + $0x18] sm:$0xff]
  %v20 = vld [vmem:[%s0 + $0x20] sm:$0xf]
  %v21 = vld [vmem:[%s0 + $0x24] sm:$0xff]
  %v22 = vld [vmem:[%s0 + $0x2c] sm:$0xf]
  %v23 = vld [vmem:[%s0 + $0x30] sm:$0xff]
  %v24 = vld [vmem:[%s0 + $0x38] sm:$0xf]
  %v25 = vld [vmem:[%s0 + $0x3c] sm:$0xff]
  %v26 = vld [vmem:[%s0 + $0x44] sm:$0xf]
  %v27 = vld [vmem:[%s0 + $0x48] sm:$0xff]
  %v28 = vld [vmem:[%s0 + $0x50] sm:$0xf]
  %v29 = vld [vmem:[%s0 + $0x54] sm:$0xff]
  %v30 = vld [vmem:[%s0 + $0x5c] sm:$0xf]
  %v31 = vld [vmem:[%s0 + $0x60] sm:$0xff]
  %v32 = vld [vmem:[%s0 + $0x68] sm:$0xf]
  %v33 = vld [vmem:[%s0 + $0x6c] sm:$0xff]
  %v34 = vld [vmem:[%s0 + $0x74] sm:$0xf]
  %v35 = vld [vmem:[%s0 + $0x78] sm:$0xff]
  %v36 = vld [vmem:[%s0 + $0x80] sm:$0xf]
  %v37 = vld [vmem:[%s0 + $0x84] sm:$0xff]
  %v38 = vld [vmem:[%s0 + $0x8c] sm:$0xf]
  %v39 = vld [vmem:[%s0 + $0x90] sm:$0xff]
  %v40 = vld [vmem:[%s0 + $0x98] sm:$0xf]
  %v41 = vld [vmem:[%s0 + $0x9c] sm:$0xff]
  %v42 = vld [vmem:[%s0 + $0xa4] sm:$0xf]
  %v43 = vld [vmem:[%s0 + $0xa8] sm:$0xff]
  %v44 = vld [vmem:[%s0 + $0xb0] sm:$0xf]
  %v45 = vld [vmem:[%s0 + $0xb4] sm:$0xff]
  %v46 = vld [vmem:[%s0 + $0xbc] sm:$0xf]
  %v47 = vld [vmem:[%s0 + $0xc0] sm:$0xff]
  %v48 = vld [vmem:[%s0 + $0xc8] sm:$0xf]
  %v49 = vld [vmem:[%s0 + $0xcc] sm:$0xff]
  %v50 = vld [vmem:[%s0 + $0xd4] sm:$0xf]
  %v51 = vld [vmem:[%s0 + $0xd8] sm:$0xff]
  %v52 = vld [vmem:[%s0 + $0xe0] sm:$0xf]
  %v53 = vld [vmem:[%s0 + $0xe4] sm:$0xff]
  %v54 = vld [vmem:[%s0 + $0xec] sm:$0xf]
  %v55 = vld [vmem:[%s0 + $0xf0] sm:$0xff]
  %v56 = vld [vmem:[%s0 + $0xf8] sm:$0xf]
  %v57 = vld [vmem:[%s0 + $0xfc] sm:$0xff]
  %v58 = vld [vmem:[%s0 + $0x104] sm:$0xf]
  %v59 = vld [vmem:[%s0 + $0x108] sm:$0xff]
  %v60 = vld [vmem:[%s0 + $0x110] sm:$0xf]
  %v61 = vld [vmem:[%s0 + $0x114] sm:$0xff]
  %v62 = vld [vmem:[%s0 + $0x11c] sm:$0xf]
  %v63 = vld [vmem:[%s0 + $0x120] sm:$0xff]
  %v64 = vld [vmem:[%s0 + $0x128] sm:$0xf]
  %v65 = vld [vmem:[%s0 + $0x12c] sm:$0xff]
  %v66 = vld [vmem:[%s0 + $0x134] sm:$0xf]
  %v67 = vld [vmem:[%s0 + $0x138] sm:$0xff]
  %v68 = vld [vmem:[%s0 + $0x140] sm:$0xf]
  %v69 = vld [vmem:[%s0 + $0x144] sm:$0xff]
  %v70 = vld [vmem:[%s0 + $0x14c] sm:$0xf]
  %v71 = vld [vmem:[%s0 + $0x150] sm:$0xff]
  %v72 = vld [vmem:[%s0 + $0x158] sm:$0xf]
  %v73 = vld [vmem:[%s0 + $0x15c] sm:$0xff]
  %v74 = vld [vmem:[%s0 + $0x164] sm:$0xf]
  %v75 = vld [vmem:[%s0 + $0x168] sm:$0xff]
  %v76 = vld [vmem:[%s0 + $0x170] sm:$0xf]
  %v77 = vld [vmem:[%s0 + $0x174] sm:$0xff]
  %v78 = vld [vmem:[%s0 + $0x17c] sm:$0xf]
  %v79 = vld [vmem:[%s0 + $0x180] sm:$0xff]
  %v80 = vld [vmem:[%s0 + $0x188] sm:$0xf]
  %v81 = vld [vmem:[%s0 + $0x18c] sm:$0xff]
  %v82 = vld [vmem:[%s0 + $0x194] sm:$0xf]
  %v83 = vld [vmem:[%s0 + $0x198] sm:$0xff]
  %v84 = vld [vmem:[%s0 + $0x1a0] sm:$0xf]
  %v85 = vld [vmem:[%s0 + $0x1a4] sm:$0xff]
  %v86 = vld [vmem:[%s0 + $0x1ac] sm:$0xf]
  %v87 = vld [vmem:[%s0 + $0x1b0] sm:$0xff]
  %v88 = vld [vmem:[%s0 + $0x1b8] sm:$0xf]
  %v89 = vld [vmem:[%s0 + $0x1bc] sm:$0xff]
  %v90 = vld [vmem:[%s0 + $0x1c4] sm:$0xf]
  %v91 = vld [vmem:[%s0 + $0x1c8] sm:$0xff]
  %v92 = vld [vmem:[%s0 + $0x1d0] sm:$0xf]
  %v93 = vld [vmem:[%s0 + $0x1d4] sm:$0xff]
  %v94 = vld [vmem:[%s0 + $0x1dc] sm:$0xf]
  %v95 = vld [vmem:[%s0 + $0x1e0] sm:$0xff]
  %v96 = vld [vmem:[%s0 + $0x1e8] sm:$0xf]
  %v97 = vld [vmem:[%s0 + $0x1ec] sm:$0xff]
  %v98 = vld [vmem:[%s0 + $0x1f4] sm:$0xf]
  %v99 = vld [vmem:[%s0 + $0x1f8] sm:$0xff]
  %v100 = vld [vmem:[%s0 + $0x200] sm:$0xf]
  %v101 = vld [vmem:[%s0 + $0x204] sm:$0xff]
  %v102 = vld [vmem:[%s0 + $0x20c] sm:$0xf]
  %v103 = vld [vmem:[%s0 + $0x210] sm:$0xff]
  %v104 = vld [vmem:[%s0 + $0x218] sm:$0xf]
  %v105 = vld [vmem:[%s0 + $0x21c] sm:$0xff]
  %v106 = vld [vmem:[%s0 + $0x224] sm:$0xf]
  %v107 = vld [vmem:[%s0 + $0x228] sm:$0xff]
  %v108 = vld [vmem:[%s0 + $0x230] sm:$0xf]
  %v109 = vld [vmem:[%s0 + $0x234] sm:$0xff]
  %v110 = vld [vmem:[%s0 + $0x23c] sm:$0xf]
  %v111 = vld [vmem:[%s1] sm:$0xf]
  %v112 = vld [vmem:[%s1 + $0x4] sm:$0xf]
  %v113 = vld [vmem:[%s1 + $0x8] sm:$0xf]
  %v114 = vld [vmem:[%s1 + $0xc] sm:$0xf]
  %v115 = vld [vmem:[%s1 + $0x10] sm:$0xf]
  %v116 = vld [vmem:[%s1 + $0x14] sm:$0xf]
  %v117 = vld [vmem:[%s1 + $0x18] sm:$0xf]
  %v118 = vld [vmem:[%s1 + $0x1c] sm:$0xf]
  %v119 = vld [vmem:[%s1 + $0x20] sm:$0xf]
  %v120 = vld [vmem:[%s1 + $0x24] sm:$0xf]
  %v121 = vld [vmem:[%s1 + $0x28] sm:$0xf]
  %v122 = vld [vmem:[%s1 + $0x2c] sm:$0xf]
  %v123 = vld [vmem:[%s1 + $0x30] sm:$0xf]
  %v124 = vld [vmem:[%s1 + $0x34] sm:$0xf]
  %v125 = vld [vmem:[%s1 + $0x38] sm:$0xf]
  %v126 = vld [vmem:[%s1 + $0x3c] sm:$0xf]
  %v127 = vld [vmem:[%s1 + $0x40] sm:$0xf]
  %v128 = vld [vmem:[%s1 + $0x44] sm:$0xf]
  %v129 = vld [vmem:[%s1 + $0x48] sm:$0xf]
  %v130 = vld [vmem:[%s1 + $0x4c] sm:$0xf]
  %v131 = vld [vmem:[%s1 + $0x50] sm:$0xf]
  %v132 = vld [vmem:[%s1 + $0x54] sm:$0xf]
  %v133 = vld [vmem:[%s1 + $0x58] sm:$0xf]
  %v134 = vld [vmem:[%s1 + $0x5c] sm:$0xf]
  %v135 = vld [vmem:[%s1 + $0x60] sm:$0xf]
  %v136 = vld [vmem:[%s1 + $0x64] sm:$0xf]
  %v137 = vld [vmem:[%s1 + $0x68] sm:$0xf]
  %v138 = vld [vmem:[%s1 + $0x6c] sm:$0xf]
  %v139 = vld [vmem:[%s1 + $0x70] sm:$0xf]
  %v140 = vld [vmem:[%s1 + $0x74] sm:$0xf]
  %v141 = vld [vmem:[%s1 + $0x78] sm:$0xf]
  %v142 = vld [vmem:[%s1 + $0x7c] sm:$0xf]
  %v143 = vld [vmem:[%s1 + $0x80] sm:$0xf]
  %v144 = vld [vmem:[%s1 + $0x84] sm:$0xf]
  %v145 = vld [vmem:[%s1 + $0x88] sm:$0xf]
  %v146 = vld [vmem:[%s1 + $0x8c] sm:$0xf]
  %v147 = vld [vmem:[%s1 + $0x90] sm:$0xf]
  %v148 = vld [vmem:[%s1 + $0x94] sm:$0xf]
  %v149 = vld [vmem:[%s1 + $0x98] sm:$0xf]
  %v150 = vld [vmem:[%s1 + $0x9c] sm:$0xf]
  %v151 = vld [vmem:[%s1 + $0xa0] sm:$0xf]
  %v152 = vld [vmem:[%s1 + $0xa4] sm:$0xf]
  %v153 = vld [vmem:[%s1 + $0xa8] sm:$0xf]
  %v154 = vld [vmem:[%s1 + $0xac] sm:$0xf]
  %v155 = vld [vmem:[%s1 + $0xb0] sm:$0xf]
  %v156 = vld [vmem:[%s1 + $0xb4] sm:$0xf]
  %v157 = vld [vmem:[%s1 + $0xb8] sm:$0xf]
  %v158 = vld [vmem:[%s1 + $0xbc] sm:$0xf]
  %v255 = vunpack.c.l.b16 %v15
  %v256 = vunpack.c.h.b16 %v15
  %v257 = vunpack.c.l.b16 %v16
  %v258 = vunpack.c.l.b16 %v17
  %v259 = vunpack.c.h.b16 %v17
  %v260 = vunpack.c.l.b16 %v18
  %v261 = vunpack.c.l.b16 %v19
  %v262 = vunpack.c.h.b16 %v19
  %v263 = vunpack.c.l.b16 %v20
  %v264 = vunpack.c.l.b16 %v21
  %v265 = vunpack.c.h.b16 %v21
  %v266 = vunpack.c.l.b16 %v22
  %v267 = vunpack.c.l.b16 %v23
  %v268 = vunpack.c.h.b16 %v23
  %v269 = vunpack.c.l.b16 %v24
  %v270 = vunpack.c.l.b16 %v25
  %v271 = vunpack.c.h.b16 %v25
  %v272 = vunpack.c.l.b16 %v26
  %v273 = vunpack.c.l.b16 %v27
  %v274 = vunpack.c.h.b16 %v27
  %v275 = vunpack.c.l.b16 %v28
  %v276 = vunpack.c.l.b16 %v29
  %v277 = vunpack.c.h.b16 %v29
  %v278 = vunpack.c.l.b16 %v30
  %v279 = vunpack.c.l.b16 %v31
  %v280 = vunpack.c.h.b16 %v31
  %v281 = vunpack.c.l.b16 %v32
  %v282 = vunpack.c.l.b16 %v33
  %v283 = vunpack.c.h.b16 %v33
  %v284 = vunpack.c.l.b16 %v34
  %v285 = vunpack.c.l.b16 %v35
  %v286 = vunpack.c.h.b16 %v35
  %v287 = vunpack.c.l.b16 %v36
  %v288 = vunpack.c.l.b16 %v37
  %v289 = vunpack.c.h.b16 %v37
  %v290 = vunpack.c.l.b16 %v38
  %v291 = vunpack.c.l.b16 %v39
  %v292 = vunpack.c.h.b16 %v39
  %v293 = vunpack.c.l.b16 %v40
  %v294 = vunpack.c.l.b16 %v41
  %v295 = vunpack.c.h.b16 %v41
  %v296 = vunpack.c.l.b16 %v42
  %v297 = vunpack.c.l.b16 %v43
  %v298 = vunpack.c.h.b16 %v43
  %v299 = vunpack.c.l.b16 %v44
  %v300 = vunpack.c.l.b16 %v45
  %v301 = vunpack.c.h.b16 %v45
  %v302 = vunpack.c.l.b16 %v46
  %v303 = vunpack.c.l.b16 %v47
  %v304 = vunpack.c.h.b16 %v47
  %v305 = vunpack.c.l.b16 %v48
  %v306 = vunpack.c.l.b16 %v49
  %v307 = vunpack.c.h.b16 %v49
  %v308 = vunpack.c.l.b16 %v50
  %v309 = vunpack.c.l.b16 %v51
  %v310 = vunpack.c.h.b16 %v51
  %v311 = vunpack.c.l.b16 %v52
  %v312 = vunpack.c.l.b16 %v53
  %v313 = vunpack.c.h.b16 %v53
  %v314 = vunpack.c.l.b16 %v54
  %v315 = vunpack.c.l.b16 %v55
  %v316 = vunpack.c.h.b16 %v55
  %v317 = vunpack.c.l.b16 %v56
  %v318 = vunpack.c.l.b16 %v57
  %v319 = vunpack.c.h.b16 %v57
  %v320 = vunpack.c.l.b16 %v58
  %v321 = vunpack.c.l.b16 %v59
  %v322 = vunpack.c.h.b16 %v59
  %v323 = vunpack.c.l.b16 %v60
  %v324 = vunpack.c.l.b16 %v61
  %v325 = vunpack.c.h.b16 %v61
  %v326 = vunpack.c.l.b16 %v62
  %v327 = vunpack.c.l.b16 %v63
  %v328 = vunpack.c.h.b16 %v63
  %v329 = vunpack.c.l.b16 %v64
  %v330 = vunpack.c.l.b16 %v65
  %v331 = vunpack.c.h.b16 %v65
  %v332 = vunpack.c.l.b16 %v66
  %v333 = vunpack.c.l.b16 %v67
  %v334 = vunpack.c.h.b16 %v67
  %v335 = vunpack.c.l.b16 %v68
  %v336 = vunpack.c.l.b16 %v69
  %v337 = vunpack.c.h.b16 %v69
  %v338 = vunpack.c.l.b16 %v70
  %v339 = vunpack.c.l.b16 %v71
  %v340 = vunpack.c.h.b16 %v71
  %v341 = vunpack.c.l.b16 %v72
  %v342 = vunpack.c.l.b16 %v73
  %v343 = vunpack.c.h.b16 %v73
  %v344 = vunpack.c.l.b16 %v74
  %v345 = vunpack.c.l.b16 %v75
  %v346 = vunpack.c.h.b16 %v75
  %v347 = vunpack.c.l.b16 %v76
  %v348 = vunpack.c.l.b16 %v77
  %v349 = vunpack.c.h.b16 %v77
  %v350 = vunpack.c.l.b16 %v78
  %v351 = vunpack.c.l.b16 %v79
  %v352 = vunpack.c.h.b16 %v79
  %v353 = vunpack.c.l.b16 %v80
  %v354 = vunpack.c.l.b16 %v81
  %v355 = vunpack.c.h.b16 %v81
  %v356 = vunpack.c.l.b16 %v82
  %v357 = vunpack.c.l.b16 %v83
  %v358 = vunpack.c.h.b16 %v83
  %v359 = vunpack.c.l.b16 %v84
  %v360 = vunpack.c.l.b16 %v85
  %v361 = vunpack.c.h.b16 %v85
  %v362 = vunpack.c.l.b16 %v86
  %v363 = vunpack.c.l.b16 %v87
  %v364 = vunpack.c.h.b16 %v87
  %v365 = vunpack.c.l.b16 %v88
  %v366 = vunpack.c.l.b16 %v89
  %v367 = vunpack.c.h.b16 %v89
  %v368 = vunpack.c.l.b16 %v90
  %v369 = vunpack.c.l.b16 %v91
  %v370 = vunpack.c.h.b16 %v91
  %v371 = vunpack.c.l.b16 %v92
  %v372 = vunpack.c.l.b16 %v93
  %v373 = vunpack.c.h.b16 %v93
  %v374 = vunpack.c.l.b16 %v94
  %v375 = vunpack.c.l.b16 %v95
  %v376 = vunpack.c.h.b16 %v95
  %v377 = vunpack.c.l.b16 %v96
  %v378 = vunpack.c.l.b16 %v97
  %v379 = vunpack.c.h.b16 %v97
  %v380 = vunpack.c.l.b16 %v98
  %v381 = vunpack.c.l.b16 %v99
  %v382 = vunpack.c.h.b16 %v99
  %v383 = vunpack.c.l.b16 %v100
  %v384 = vunpack.c.l.b16 %v101
  %v385 = vunpack.c.h.b16 %v101
  %v386 = vunpack.c.l.b16 %v102
  %v387 = vunpack.c.l.b16 %v103
  %v388 = vunpack.c.h.b16 %v103
  %v389 = vunpack.c.l.b16 %v104
  %v390 = vunpack.c.l.b16 %v105
  %v391 = vunpack.c.h.b16 %v105
  %v392 = vunpack.c.l.b16 %v106
  %v393 = vunpack.c.l.b16 %v107
  %v394 = vunpack.c.h.b16 %v107
  %v395 = vunpack.c.l.b16 %v108
  %v396 = vunpack.c.l.b16 %v109
  %v397 = vunpack.c.h.b16 %v109
  %v398 = vunpack.c.l.b16 %v110
  %v399 = vpack.c.b16 %v258, %v255
  %v400 = vpack.c.b16 %v259, %v256
  %v401 = vpack.c.b16 %v260, %v257
  %v402 = vpack.c.b16 %v264, %v261
  %v403 = vpack.c.b16 %v265, %v262
  %v404 = vpack.c.b16 %v266, %v263
  %v405 = vpack.c.b16 %v270, %v267
  %v406 = vpack.c.b16 %v271, %v268
  %v407 = vpack.c.b16 %v272, %v269
  %v408 = vpack.c.b16 %v276, %v273
  %v409 = vpack.c.b16 %v277, %v274
  %v410 = vpack.c.b16 %v278, %v275
  %v411 = vpack.c.b16 %v282, %v279
  %v412 = vpack.c.b16 %v283, %v280
  %v413 = vpack.c.b16 %v284, %v281
  %v414 = vpack.c.b16 %v288, %v285
  %v415 = vpack.c.b16 %v289, %v286
  %v416 = vpack.c.b16 %v290, %v287
  %v417 = vpack.c.b16 %v294, %v291
  %v418 = vpack.c.b16 %v295, %v292
  %v419 = vpack.c.b16 %v296, %v293
  %v420 = vpack.c.b16 %v300, %v297
  %v421 = vpack.c.b16 %v301, %v298
  %v422 = vpack.c.b16 %v302, %v299
  %v423 = vpack.c.b16 %v306, %v303
  %v424 = vpack.c.b16 %v307, %v304
  %v425 = vpack.c.b16 %v308, %v305
  %v426 = vpack.c.b16 %v312, %v309
  %v427 = vpack.c.b16 %v313, %v310
  %v428 = vpack.c.b16 %v314, %v311
  %v429 = vpack.c.b16 %v318, %v315
  %v430 = vpack.c.b16 %v319, %v316
  %v431 = vpack.c.b16 %v320, %v317
  %v432 = vpack.c.b16 %v324, %v321
  %v433 = vpack.c.b16 %v325, %v322
  %v434 = vpack.c.b16 %v326, %v323
  %v435 = vpack.c.b16 %v330, %v327
  %v436 = vpack.c.b16 %v331, %v328
  %v437 = vpack.c.b16 %v332, %v329
  %v438 = vpack.c.b16 %v336, %v333
  %v439 = vpack.c.b16 %v337, %v334
  %v440 = vpack.c.b16 %v338, %v335
  %v441 = vpack.c.b16 %v342, %v339
  %v442 = vpack.c.b16 %v343, %v340
  %v443 = vpack.c.b16 %v344, %v341
  %v444 = vpack.c.b16 %v348, %v345
  %v445 = vpack.c.b16 %v349, %v346
  %v446 = vpack.c.b16 %v350, %v347
  %v447 = vpack.c.b16 %v354, %v351
  %v448 = vpack.c.b16 %v355, %v352
  %v449 = vpack.c.b16 %v356, %v353
  %v450 = vpack.c.b16 %v360, %v357
  %v451 = vpack.c.b16 %v361, %v358
  %v452 = vpack.c.b16 %v362, %v359
  %v453 = vpack.c.b16 %v366, %v363
  %v454 = vpack.c.b16 %v367, %v364
  %v455 = vpack.c.b16 %v368, %v365
  %v456 = vpack.c.b16 %v372, %v369
  %v457 = vpack.c.b16 %v373, %v370
  %v458 = vpack.c.b16 %v374, %v371
  %v459 = vpack.c.b16 %v378, %v375
  %v460 = vpack.c.b16 %v379, %v376
  %v461 = vpack.c.b16 %v380, %v377
  %v462 = vpack.c.b16 %v384, %v381
  %v463 = vpack.c.b16 %v385, %v382
  %v464 = vpack.c.b16 %v386, %v383
  %v465 = vpack.c.b16 %v390, %v387
  %v466 = vpack.c.b16 %v391, %v388
  %v467 = vpack.c.b16 %v392, %v389
  %v468 = vpack.c.b16 %v396, %v393
  %v469 = vpack.c.b16 %v397, %v394
  %v470 = vpack.c.b16 %v398, %v395
  %v591 = vunpack.c.l.b16 %v111
  %v592 = vunpack.c.l.b16 %v112
  %v593 = vunpack.c.l.b16 %v113
  %v594 = vunpack.c.l.b16 %v114
  %v595 = vunpack.c.l.b16 %v115
  %v596 = vunpack.c.l.b16 %v116
  %v597 = vunpack.c.l.b16 %v117
  %v598 = vunpack.c.l.b16 %v118
  %v599 = vunpack.c.l.b16 %v119
  %v600 = vunpack.c.l.b16 %v120
  %v601 = vunpack.c.l.b16 %v121
  %v602 = vunpack.c.l.b16 %v122
  %v603 = vunpack.c.l.b16 %v123
  %v604 = vunpack.c.l.b16 %v124
  %v605 = vunpack.c.l.b16 %v125
  %v606 = vunpack.c.l.b16 %v126
  %v607 = vunpack.c.l.b16 %v127
  %v608 = vunpack.c.l.b16 %v128
  %v609 = vunpack.c.l.b16 %v129
  %v610 = vunpack.c.l.b16 %v130
  %v611 = vunpack.c.l.b16 %v131
  %v612 = vunpack.c.l.b16 %v132
  %v613 = vunpack.c.l.b16 %v133
  %v614 = vunpack.c.l.b16 %v134
  %v615 = vunpack.c.l.b16 %v135
  %v616 = vunpack.c.l.b16 %v136
  %v617 = vunpack.c.l.b16 %v137
  %v618 = vunpack.c.l.b16 %v138
  %v619 = vunpack.c.l.b16 %v139
  %v620 = vunpack.c.l.b16 %v140
  %v621 = vunpack.c.l.b16 %v141
  %v622 = vunpack.c.l.b16 %v142
  %v623 = vunpack.c.l.b16 %v143
  %v624 = vunpack.c.l.b16 %v144
  %v625 = vunpack.c.l.b16 %v145
  %v626 = vunpack.c.l.b16 %v146
  %v627 = vunpack.c.l.b16 %v147
  %v628 = vunpack.c.l.b16 %v148
  %v629 = vunpack.c.l.b16 %v149
  %v630 = vunpack.c.l.b16 %v150
  %v631 = vunpack.c.l.b16 %v151
  %v632 = vunpack.c.l.b16 %v152
  %v633 = vunpack.c.l.b16 %v153
  %v634 = vunpack.c.l.b16 %v154
  %v635 = vunpack.c.l.b16 %v155
  %v636 = vunpack.c.l.b16 %v156
  %v637 = vunpack.c.l.b16 %v157
  %v638 = vunpack.c.l.b16 %v158
  %v639 = vpack.c.b16 %v592, %v591
  %v640 = vpack.c.b16 %v594, %v593
  %v641 = vpack.c.b16 %v596, %v595
  %v642 = vpack.c.b16 %v598, %v597
  %v643 = vpack.c.b16 %v600, %v599
  %v644 = vpack.c.b16 %v602, %v601
  %v645 = vpack.c.b16 %v604, %v603
  %v646 = vpack.c.b16 %v606, %v605
  %v647 = vpack.c.b16 %v608, %v607
  %v648 = vpack.c.b16 %v610, %v609
  %v649 = vpack.c.b16 %v612, %v611
  %v650 = vpack.c.b16 %v614, %v613
  %v651 = vpack.c.b16 %v616, %v615
  %v652 = vpack.c.b16 %v618, %v617
  %v653 = vpack.c.b16 %v620, %v619
  %v654 = vpack.c.b16 %v622, %v621
  %v655 = vpack.c.b16 %v624, %v623
  %v656 = vpack.c.b16 %v626, %v625
  %v657 = vpack.c.b16 %v628, %v627
  %v658 = vpack.c.b16 %v630, %v629
  %v659 = vpack.c.b16 %v632, %v631
  %v660 = vpack.c.b16 %v634, %v633
  %v661 = vpack.c.b16 %v636, %v635
  %v662 = vpack.c.b16 %v638, %v637
  %687 = vmatprep.subr.bf16.mxu0 0
  %688 = vmatpush1.bf16.msra.mxu0 %v646
  %689 = vmatprep.subr.bf16.mxu0 0
  %690 = vmatpush1.bf16.msra.mxu0 %v645
  %691 = vmatprep.subr.bf16.mxu0 0
  %692 = vmatpush1.bf16.msra.mxu0 %v644
  %693 = vmatprep.subr.bf16.mxu0 0
  %694 = vmatpush1.bf16.msra.mxu0 %v643
  %695 = vmatprep.subr.bf16.mxu0 0
  %696 = vmatpush1.bf16.msra.mxu0 %v642
  %697 = vmatprep.subr.bf16.mxu0 0
  %698 = vmatpush1.bf16.msra.mxu0 %v641
  %699 = vmatprep.subr.bf16.mxu0 0
  %700 = vmatpush1.bf16.msra.mxu0 %v640
  %701 = vmatprep.subr.bf16.mxu0 0
  %702 = vmatpush1.bf16.msra.mxu0 %v639
  %703 = vmatprep.subr.bf16.mxu0 0
  %704 = vmatpush2.bf16.msra.mxu0 %v654
  %705 = vmatprep.subr.bf16.mxu0 0
  %706 = vmatpush2.bf16.msra.mxu0 %v653
  %707 = vmatprep.subr.bf16.mxu0 0
  %708 = vmatpush2.bf16.msra.mxu0 %v652
  %709 = vmatprep.subr.bf16.mxu0 0
  %710 = vmatpush2.bf16.msra.mxu0 %v651
  %711 = vmatprep.subr.bf16.mxu0 0
  %712 = vmatpush2.bf16.msra.mxu0 %v650
  %713 = vmatprep.subr.bf16.mxu0 0
  %714 = vmatpush2.bf16.msra.mxu0 %v649
  %715 = vmatprep.subr.bf16.mxu0 0
  %716 = vmatpush2.bf16.msra.mxu0 %v648
  %717 = vmatprep.subr.bf16.mxu0 0
  %718 = vmatpush2.bf16.msra.mxu0 %v647
  %719 = vmatprep.mubr.bf16.mxu0 %v400
  %720 = vmatmul.mubr.bf16.gmra.mxu0 %v399
  %v721 = vpop.f32.mrf.mxu0
  %v722 = vadd.f32 0.0, %v721
  %v723 = vpop.f32.mrf.mxu0
  %v724 = vpop.f32.mrf.mxu0
  %v725 = vadd.f32 0.0, %v724
  %v726 = vpop.f32.mrf.mxu0
  %727 = vmatprep.mubr.bf16.mxu0 %v403
  %728 = vmatmul.mubr.bf16.gmra.mxu0 %v402
  %v729 = vpop.f32.mrf.mxu0
  %v730 = vadd.f32 0.0, %v729
  %v731 = vpop.f32.mrf.mxu0
  %v732 = vpop.f32.mrf.mxu0
  %v733 = vadd.f32 0.0, %v732
  %v734 = vpop.f32.mrf.mxu0
  %735 = vmatprep.mubr.bf16.mxu0 %v406
  %736 = vmatmul.mubr.bf16.gmra.mxu0 %v405
  %v737 = vpop.f32.mrf.mxu0
  %v738 = vadd.f32 0.0, %v737
  %v739 = vpop.f32.mrf.mxu0
  %v740 = vpop.f32.mrf.mxu0
  %v741 = vadd.f32 0.0, %v740
  %v742 = vpop.f32.mrf.mxu0
  %743 = vmatprep.mubr.bf16.mxu0 %v409
  %744 = vmatmul.mubr.bf16.gmra.mxu0 %v408
  %v745 = vpop.f32.mrf.mxu0
  %v746 = vadd.f32 0.0, %v745
  %v747 = vpop.f32.mrf.mxu0
  %v748 = vpop.f32.mrf.mxu0
  %v749 = vadd.f32 0.0, %v748
  %v750 = vpop.f32.mrf.mxu0
  %751 = vmatprep.mubr.bf16.mxu0 %v412
  %752 = vmatmul.mubr.bf16.gmra.mxu0 %v411
  %v753 = vpop.f32.mrf.mxu0
  %v754 = vadd.f32 0.0, %v753
  %v755 = vpop.f32.mrf.mxu0
  %v756 = vpop.f32.mrf.mxu0
  %v757 = vadd.f32 0.0, %v756
  %v758 = vpop.f32.mrf.mxu0
  %759 = vmatprep.mubr.bf16.mxu0 %v415
  %760 = vmatmul.mubr.bf16.gmra.mxu0 %v414
  %v761 = vpop.f32.mrf.mxu0
  %v762 = vadd.f32 0.0, %v761
  %v763 = vpop.f32.mrf.mxu0
  %v764 = vpop.f32.mrf.mxu0
  %v765 = vadd.f32 0.0, %v764
  %v766 = vpop.f32.mrf.mxu0
  %767 = vmatprep.mubr.bf16.mxu0 %v418
  %768 = vmatmul.mubr.bf16.gmra.mxu0 %v417
  %v769 = vpop.f32.mrf.mxu0
  %v770 = vadd.f32 0.0, %v769
  %v771 = vpop.f32.mrf.mxu0
  %v772 = vpop.f32.mrf.mxu0
  %v773 = vadd.f32 0.0, %v772
  %v774 = vpop.f32.mrf.mxu0
  %775 = vmatprep.mubr.bf16.mxu0 %v421
  %776 = vmatmul.mubr.bf16.gmra.mxu0 %v420
  %v777 = vpop.f32.mrf.mxu0
  %v778 = vadd.f32 0.0, %v777
  %v779 = vpop.f32.mrf.mxu0
  %v780 = vpop.f32.mrf.mxu0
  %v781 = vadd.f32 0.0, %v780
  %v782 = vpop.f32.mrf.mxu0
  %783 = vmatprep.mubr.bf16.mxu0 %v424
  %784 = vmatmul.mubr.bf16.gmra.mxu0 %v423
  %v785 = vpop.f32.mrf.mxu0
  %v786 = vadd.f32 0.0, %v785
  %v787 = vpop.f32.mrf.mxu0
  %v788 = vpop.f32.mrf.mxu0
  %v789 = vadd.f32 0.0, %v788
  %v790 = vpop.f32.mrf.mxu0
  %791 = vmatprep.mubr.bf16.mxu0 %v427
  %792 = vmatmul.mubr.bf16.gmra.mxu0 %v426
  %v793 = vpop.f32.mrf.mxu0
  %v794 = vadd.f32 0.0, %v793
  %v795 = vpop.f32.mrf.mxu0
  %v796 = vpop.f32.mrf.mxu0
  %v797 = vadd.f32 0.0, %v796
  %v798 = vpop.f32.mrf.mxu0
  %799 = vmatprep.mubr.bf16.mxu0 %v430
  %800 = vmatmul.mubr.bf16.gmra.mxu0 %v429
  %v801 = vpop.f32.mrf.mxu0
  %v802 = vadd.f32 0.0, %v801
  %v803 = vpop.f32.mrf.mxu0
  %v804 = vpop.f32.mrf.mxu0
  %v805 = vadd.f32 0.0, %v804
  %v806 = vpop.f32.mrf.mxu0
  %807 = vmatprep.mubr.bf16.mxu0 %v433
  %808 = vmatmul.mubr.bf16.gmra.mxu0 %v432
  %v809 = vpop.f32.mrf.mxu0
  %v810 = vadd.f32 0.0, %v809
  %v811 = vpop.f32.mrf.mxu0
  %v812 = vpop.f32.mrf.mxu0
  %v813 = vadd.f32 0.0, %v812
  %v814 = vpop.f32.mrf.mxu0
  %815 = vmatprep.mubr.bf16.mxu0 %v436
  %816 = vmatmul.mubr.bf16.gmra.mxu0 %v435
  %v817 = vpop.f32.mrf.mxu0
  %v818 = vadd.f32 0.0, %v817
  %v819 = vpop.f32.mrf.mxu0
  %v820 = vpop.f32.mrf.mxu0
  %v821 = vadd.f32 0.0, %v820
  %v822 = vpop.f32.mrf.mxu0
  %823 = vmatprep.mubr.bf16.mxu0 %v439
  %824 = vmatmul.mubr.bf16.gmra.mxu0 %v438
  %v825 = vpop.f32.mrf.mxu0
  %v826 = vadd.f32 0.0, %v825
  %v827 = vpop.f32.mrf.mxu0
  %v828 = vpop.f32.mrf.mxu0
  %v829 = vadd.f32 0.0, %v828
  %v830 = vpop.f32.mrf.mxu0
  %831 = vmatprep.mubr.bf16.mxu0 %v442
  %832 = vmatmul.mubr.bf16.gmra.mxu0 %v441
  %v833 = vpop.f32.mrf.mxu0
  %v834 = vadd.f32 0.0, %v833
  %v835 = vpop.f32.mrf.mxu0
  %v836 = vpop.f32.mrf.mxu0
  %v837 = vadd.f32 0.0, %v836
  %v838 = vpop.f32.mrf.mxu0
  %839 = vmatprep.mubr.bf16.mxu0 %v445
  %840 = vmatmul.mubr.bf16.gmra.mxu0 %v444
  %v841 = vpop.f32.mrf.mxu0
  %v842 = vadd.f32 0.0, %v841
  %v843 = vpop.f32.mrf.mxu0
  %v844 = vpop.f32.mrf.mxu0
  %v845 = vadd.f32 0.0, %v844
  %v846 = vpop.f32.mrf.mxu0
  %847 = vmatprep.mubr.bf16.mxu0 %v448
  %848 = vmatmul.mubr.bf16.gmra.mxu0 %v447
  %v849 = vpop.f32.mrf.mxu0
  %v850 = vadd.f32 0.0, %v849
  %v851 = vpop.f32.mrf.mxu0
  %v852 = vpop.f32.mrf.mxu0
  %v853 = vadd.f32 0.0, %v852
  %v854 = vpop.f32.mrf.mxu0
  %855 = vmatprep.mubr.bf16.mxu0 %v451
  %856 = vmatmul.mubr.bf16.gmra.mxu0 %v450
  %v857 = vpop.f32.mrf.mxu0
  %v858 = vadd.f32 0.0, %v857
  %v859 = vpop.f32.mrf.mxu0
  %v860 = vpop.f32.mrf.mxu0
  %v861 = vadd.f32 0.0, %v860
  %v862 = vpop.f32.mrf.mxu0
  %863 = vmatprep.mubr.bf16.mxu0 %v454
  %864 = vmatmul.mubr.bf16.gmra.mxu0 %v453
  %v865 = vpop.f32.mrf.mxu0
  %v866 = vadd.f32 0.0, %v865
  %v867 = vpop.f32.mrf.mxu0
  %v868 = vpop.f32.mrf.mxu0
  %v869 = vadd.f32 0.0, %v868
  %v870 = vpop.f32.mrf.mxu0
  %871 = vmatprep.mubr.bf16.mxu0 %v457
  %872 = vmatmul.mubr.bf16.gmra.mxu0 %v456
  %v873 = vpop.f32.mrf.mxu0
  %v874 = vadd.f32 0.0, %v873
  %v875 = vpop.f32.mrf.mxu0
  %v876 = vpop.f32.mrf.mxu0
  %v877 = vadd.f32 0.0, %v876
  %v878 = vpop.f32.mrf.mxu0
  %879 = vmatprep.mubr.bf16.mxu0 %v460
  %880 = vmatmul.mubr.bf16.gmra.mxu0 %v459
  %v881 = vpop.f32.mrf.mxu0
  %v882 = vadd.f32 0.0, %v881
  %v883 = vpop.f32.mrf.mxu0
  %v884 = vpop.f32.mrf.mxu0
  %v885 = vadd.f32 0.0, %v884
  %v886 = vpop.f32.mrf.mxu0
  %887 = vmatprep.mubr.bf16.mxu0 %v463
  %888 = vmatmul.mubr.bf16.gmra.mxu0 %v462
  %v889 = vpop.f32.mrf.mxu0
  %v890 = vadd.f32 0.0, %v889
  %v891 = vpop.f32.mrf.mxu0
  %v892 = vpop.f32.mrf.mxu0
  %v893 = vadd.f32 0.0, %v892
  %v894 = vpop.f32.mrf.mxu0
  %895 = vmatprep.mubr.bf16.mxu0 %v466
  %896 = vmatmul.mubr.bf16.gmra.mxu0 %v465
  %v897 = vpop.f32.mrf.mxu0
  %v898 = vadd.f32 0.0, %v897
  %v899 = vpop.f32.mrf.mxu0
  %v900 = vpop.f32.mrf.mxu0
  %v901 = vadd.f32 0.0, %v900
  %v902 = vpop.f32.mrf.mxu0
  %903 = vmatprep.mubr.bf16.mxu0 %v469
  %904 = vmatmul.mubr.bf16.gmra.mxu0 %v468
  %v905 = vpop.f32.mrf.mxu0
  %v906 = vadd.f32 0.0, %v905
  %v907 = vpop.f32.mrf.mxu0
  %v908 = vpop.f32.mrf.mxu0
  %v909 = vadd.f32 0.0, %v908
  %v910 = vpop.f32.mrf.mxu0
  %911 = vdwg.mxu0
  %912 = vmatprep.subr.bf16.mxu0 0
  %913 = vmatpush1.bf16.msra.mxu0 %v662
  %914 = vmatprep.subr.bf16.mxu0 0
  %915 = vmatpush1.bf16.msra.mxu0 %v661
  %916 = vmatprep.subr.bf16.mxu0 0
  %917 = vmatpush1.bf16.msra.mxu0 %v660
  %918 = vmatprep.subr.bf16.mxu0 0
  %919 = vmatpush1.bf16.msra.mxu0 %v659
  %920 = vmatprep.subr.bf16.mxu0 0
  %921 = vmatpush1.bf16.msra.mxu0 %v658
  %922 = vmatprep.subr.bf16.mxu0 0
  %923 = vmatpush1.bf16.msra.mxu0 %v657
  %924 = vmatprep.subr.bf16.mxu0 0
  %925 = vmatpush1.bf16.msra.mxu0 %v656
  %926 = vmatprep.subr.bf16.mxu0 0
  %927 = vmatpush1.bf16.msra.mxu0 %v655
  %928 = vmatprep.subr.bf16.mxu0 0
  %929 = vmatpush2.bf16.msra.mxu0 0
  %930 = vmatprep.subr.bf16.mxu0 0
  %931 = vmatpush2.bf16.msra.mxu0 0
  %932 = vmatprep.subr.bf16.mxu0 0
  %933 = vmatpush2.bf16.msra.mxu0 0
  %934 = vmatprep.subr.bf16.mxu0 0
  %935 = vmatpush2.bf16.msra.mxu0 0
  %936 = vmatprep.subr.bf16.mxu0 0
  %937 = vmatpush2.bf16.msra.mxu0 0
  %938 = vmatprep.subr.bf16.mxu0 0
  %939 = vmatpush2.bf16.msra.mxu0 0
  %940 = vmatprep.subr.bf16.mxu0 0
  %941 = vmatpush2.bf16.msra.mxu0 0
  %942 = vmatprep.subr.bf16.mxu0 0
  %943 = vmatpush2.bf16.msra.mxu0 0
  %944 = vmatprep.mubr.bf16.mxu0 0
  %945 = vmatmul.mubr.bf16.gmra.mxu0 %v401
  %v946 = vpop.f32.mrf.mxu0
  %v947 = vadd.f32 %v722, %v946
  %v948 = vpop.f32.mrf.mxu0
  %v949 = vpop.f32.mrf.mxu0
  %v950 = vadd.f32 %v725, %v949
  %v951 = vpop.f32.mrf.mxu0
  %952 = vmatprep.mubr.bf16.mxu0 0
  %953 = vmatmul.mubr.bf16.gmra.mxu0 %v404
  %v954 = vpop.f32.mrf.mxu0
  %v955 = vadd.f32 %v730, %v954
  %v956 = vpop.f32.mrf.mxu0
  %v957 = vpop.f32.mrf.mxu0
  %v958 = vadd.f32 %v733, %v957
  %v959 = vpop.f32.mrf.mxu0
  %960 = vmatprep.mubr.bf16.mxu0 0
  %961 = vmatmul.mubr.bf16.gmra.mxu0 %v407
  %v962 = vpop.f32.mrf.mxu0
  %v963 = vadd.f32 %v738, %v962
  %v964 = vpop.f32.mrf.mxu0
  %v965 = vpop.f32.mrf.mxu0
  %v966 = vadd.f32 %v741, %v965
  %v967 = vpop.f32.mrf.mxu0
  %968 = vmatprep.mubr.bf16.mxu0 0
  %969 = vmatmul.mubr.bf16.gmra.mxu0 %v410
  %v970 = vpop.f32.mrf.mxu0
  %v971 = vadd.f32 %v746, %v970
  %v972 = vpop.f32.mrf.mxu0
  %v973 = vpop.f32.mrf.mxu0
  %v974 = vadd.f32 %v749, %v973
  %v975 = vpop.f32.mrf.mxu0
  %976 = vmatprep.mubr.bf16.mxu0 0
  %977 = vmatmul.mubr.bf16.gmra.mxu0 %v413
  %v978 = vpop.f32.mrf.mxu0
  %v979 = vadd.f32 %v754, %v978
  %v980 = vpop.f32.mrf.mxu0
  %v981 = vpop.f32.mrf.mxu0
  %v982 = vadd.f32 %v757, %v981
  %v983 = vpop.f32.mrf.mxu0
  %984 = vmatprep.mubr.bf16.mxu0 0
  %985 = vmatmul.mubr.bf16.gmra.mxu0 %v416
  %v986 = vpop.f32.mrf.mxu0
  %v987 = vadd.f32 %v762, %v986
  %v988 = vpop.f32.mrf.mxu0
  %v989 = vpop.f32.mrf.mxu0
  %v990 = vadd.f32 %v765, %v989
  %v991 = vpop.f32.mrf.mxu0
  %992 = vmatprep.mubr.bf16.mxu0 0
  %993 = vmatmul.mubr.bf16.gmra.mxu0 %v419
  %v994 = vpop.f32.mrf.mxu0
  %v995 = vadd.f32 %v770, %v994
  %v996 = vpop.f32.mrf.mxu0
  %v997 = vpop.f32.mrf.mxu0
  %v998 = vadd.f32 %v773, %v997
  %v999 = vpop.f32.mrf.mxu0
  %1000 = vmatprep.mubr.bf16.mxu0 0
  %1001 = vmatmul.mubr.bf16.gmra.mxu0 %v422
  %v1002 = vpop.f32.mrf.mxu0
  %v1003 = vadd.f32 %v778, %v1002
  %v1004 = vpop.f32.mrf.mxu0
  %v1005 = vpop.f32.mrf.mxu0
  %v1006 = vadd.f32 %v781, %v1005
  %v1007 = vpop.f32.mrf.mxu0
  %1008 = vmatprep.mubr.bf16.mxu0 0
  %1009 = vmatmul.mubr.bf16.gmra.mxu0 %v425
  %v1010 = vpop.f32.mrf.mxu0
  %v1011 = vadd.f32 %v786, %v1010
  %v1012 = vpop.f32.mrf.mxu0
  %v1013 = vpop.f32.mrf.mxu0
  %v1014 = vadd.f32 %v789, %v1013
  %v1015 = vpop.f32.mrf.mxu0
  %1016 = vmatprep.mubr.bf16.mxu0 0
  %1017 = vmatmul.mubr.bf16.gmra.mxu0 %v428
  %v1018 = vpop.f32.mrf.mxu0
  %v1019 = vadd.f32 %v794, %v1018
  %v1020 = vpop.f32.mrf.mxu0
  %v1021 = vpop.f32.mrf.mxu0
  %v1022 = vadd.f32 %v797, %v1021
  %v1023 = vpop.f32.mrf.mxu0
  %1024 = vmatprep.mubr.bf16.mxu0 0
  %1025 = vmatmul.mubr.bf16.gmra.mxu0 %v431
  %v1026 = vpop.f32.mrf.mxu0
  %v1027 = vadd.f32 %v802, %v1026
  %v1028 = vpop.f32.mrf.mxu0
  %v1029 = vpop.f32.mrf.mxu0
  %v1030 = vadd.f32 %v805, %v1029
  %v1031 = vpop.f32.mrf.mxu0
  %1032 = vmatprep.mubr.bf16.mxu0 0
  %1033 = vmatmul.mubr.bf16.gmra.mxu0 %v434
  %v1034 = vpop.f32.mrf.mxu0
  %v1035 = vadd.f32 %v810, %v1034
  %v1036 = vpop.f32.mrf.mxu0
  %v1037 = vpop.f32.mrf.mxu0
  %v1038 = vadd.f32 %v813, %v1037
  %v1039 = vpop.f32.mrf.mxu0
  %1040 = vmatprep.mubr.bf16.mxu0 0
  %1041 = vmatmul.mubr.bf16.gmra.mxu0 %v437
  %v1042 = vpop.f32.mrf.mxu0
  %v1043 = vadd.f32 %v818, %v1042
  %v1044 = vpop.f32.mrf.mxu0
  %v1045 = vpop.f32.mrf.mxu0
  %v1046 = vadd.f32 %v821, %v1045
  %v1047 = vpop.f32.mrf.mxu0
  %1048 = vmatprep.mubr.bf16.mxu0 0
  %1049 = vmatmul.mubr.bf16.gmra.mxu0 %v440
  %v1050 = vpop.f32.mrf.mxu0
  %v1051 = vadd.f32 %v826, %v1050
  %v1052 = vpop.f32.mrf.mxu0
  %v1053 = vpop.f32.mrf.mxu0
  %v1054 = vadd.f32 %v829, %v1053
  %v1055 = vpop.f32.mrf.mxu0
  %1056 = vmatprep.mubr.bf16.mxu0 0
  %1057 = vmatmul.mubr.bf16.gmra.mxu0 %v443
  %v1058 = vpop.f32.mrf.mxu0
  %v1059 = vadd.f32 %v834, %v1058
  %v1060 = vpop.f32.mrf.mxu0
  %v1061 = vpop.f32.mrf.mxu0
  %v1062 = vadd.f32 %v837, %v1061
  %v1063 = vpop.f32.mrf.mxu0
  %1064 = vmatprep.mubr.bf16.mxu0 0
  %1065 = vmatmul.mubr.bf16.gmra.mxu0 %v446
  %v1066 = vpop.f32.mrf.mxu0
  %v1067 = vadd.f32 %v842, %v1066
  %v1068 = vpop.f32.mrf.mxu0
  %v1069 = vpop.f32.mrf.mxu0
  %v1070 = vadd.f32 %v845, %v1069
  %v1071 = vpop.f32.mrf.mxu0
  %1072 = vmatprep.mubr.bf16.mxu0 0
  %1073 = vmatmul.mubr.bf16.gmra.mxu0 %v449
  %v1074 = vpop.f32.mrf.mxu0
  %v1075 = vadd.f32 %v850, %v1074
  %v1076 = vpop.f32.mrf.mxu0
  %v1077 = vpop.f32.mrf.mxu0
  %v1078 = vadd.f32 %v853, %v1077
  %v1079 = vpop.f32.mrf.mxu0
  %1080 = vmatprep.mubr.bf16.mxu0 0
  %1081 = vmatmul.mubr.bf16.gmra.mxu0 %v452
  %v1082 = vpop.f32.mrf.mxu0
  %v1083 = vadd.f32 %v858, %v1082
  %v1084 = vpop.f32.mrf.mxu0
  %v1085 = vpop.f32.mrf.mxu0
  %v1086 = vadd.f32 %v861, %v1085
  %v1087 = vpop.f32.mrf.mxu0
  %1088 = vmatprep.mubr.bf16.mxu0 0
  %1089 = vmatmul.mubr.bf16.gmra.mxu0 %v455
  %v1090 = vpop.f32.mrf.mxu0
  %v1091 = vadd.f32 %v866, %v1090
  %v1092 = vpop.f32.mrf.mxu0
  %v1093 = vpop.f32.mrf.mxu0
  %v1094 = vadd.f32 %v869, %v1093
  %v1095 = vpop.f32.mrf.mxu0
  %1096 = vmatprep.mubr.bf16.mxu0 0
  %1097 = vmatmul.mubr.bf16.gmra.mxu0 %v458
  %v1098 = vpop.f32.mrf.mxu0
  %v1099 = vadd.f32 %v874, %v1098
  %v1100 = vpop.f32.mrf.mxu0
  %v1101 = vpop.f32.mrf.mxu0
  %v1102 = vadd.f32 %v877, %v1101
  %v1103 = vpop.f32.mrf.mxu0
  %1104 = vmatprep.mubr.bf16.mxu0 0
  %1105 = vmatmul.mubr.bf16.gmra.mxu0 %v461
  %v1106 = vpop.f32.mrf.mxu0
  %v1107 = vadd.f32 %v882, %v1106
  %v1108 = vpop.f32.mrf.mxu0
  %v1109 = vpop.f32.mrf.mxu0
  %v1110 = vadd.f32 %v885, %v1109
  %v1111 = vpop.f32.mrf.mxu0
  %1112 = vmatprep.mubr.bf16.mxu0 0
  %1113 = vmatmul.mubr.bf16.gmra.mxu0 %v464
  %v1114 = vpop.f32.mrf.mxu0
  %v1115 = vadd.f32 %v890, %v1114
  %v1116 = vpop.f32.mrf.mxu0
  %v1117 = vpop.f32.mrf.mxu0
  %v1118 = vadd.f32 %v893, %v1117
  %v1119 = vpop.f32.mrf.mxu0
  %1120 = vmatprep.mubr.bf16.mxu0 0
  %1121 = vmatmul.mubr.bf16.gmra.mxu0 %v467
  %v1122 = vpop.f32.mrf.mxu0
  %v1123 = vadd.f32 %v898, %v1122
  %v1124 = vpop.f32.mrf.mxu0
  %v1125 = vpop.f32.mrf.mxu0
  %v1126 = vadd.f32 %v901, %v1125
  %v1127 = vpop.f32.mrf.mxu0
  %1128 = vmatprep.mubr.bf16.mxu0 0
  %1129 = vmatmul.mubr.bf16.gmra.mxu0 %v470
  %v1130 = vpop.f32.mrf.mxu0
  %v1131 = vadd.f32 %v906, %v1130
  %v1132 = vpop.f32.mrf.mxu0
  %v1133 = vpop.f32.mrf.mxu0
  %v1134 = vadd.f32 %v909, %v1133
  %v1135 = vpop.f32.mrf.mxu0
  %1136 = vdwg.mxu0
  %1137 = vst [vmem:[%s2] sm:$0xff] %v947
  %1138 = vst [vmem:[%s2 + $0x8] sm:$0xff] %v950
  %1139 = vst [vmem:[%s2 + $0x10] sm:$0xff] %v955
  %1140 = vst [vmem:[%s2 + $0x18] sm:$0xff] %v958
  %1141 = vst [vmem:[%s2 + $0x20] sm:$0xff] %v963
  %1142 = vst [vmem:[%s2 + $0x28] sm:$0xff] %v966
  %1143 = vst [vmem:[%s2 + $0x30] sm:$0xff] %v971
  %1144 = vst [vmem:[%s2 + $0x38] sm:$0xff] %v974
  %1145 = vst [vmem:[%s2 + $0x40] sm:$0xff] %v979
  %1146 = vst [vmem:[%s2 + $0x48] sm:$0xff] %v982
  %1147 = vst [vmem:[%s2 + $0x50] sm:$0xff] %v987
  %1148 = vst [vmem:[%s2 + $0x58] sm:$0xff] %v990
  %1149 = vst [vmem:[%s2 + $0x60] sm:$0xff] %v995
  %1150 = vst [vmem:[%s2 + $0x68] sm:$0xff] %v998
  %1151 = vst [vmem:[%s2 + $0x70] sm:$0xff] %v1003
  %1152 = vst [vmem:[%s2 + $0x78] sm:$0xff] %v1006
  %1153 = vst [vmem:[%s2 + $0x80] sm:$0xff] %v1011
  %1154 = vst [vmem:[%s2 + $0x88] sm:$0xff] %v1014
  %1155 = vst [vmem:[%s2 + $0x90] sm:$0xff] %v1019
  %1156 = vst [vmem:[%s2 + $0x98] sm:$0xff] %v1022
  %1157 = vst [vmem:[%s2 + $0xa0] sm:$0xff] %v1027
  %1158 = vst [vmem:[%s2 + $0xa8] sm:$0xff] %v1030
  %1159 = vst [vmem:[%s2 + $0xb0] sm:$0xff] %v1035
  %1160 = vst [vmem:[%s2 + $0xb8] sm:$0xff] %v1038
  %1161 = vst [vmem:[%s2 + $0xc0] sm:$0xff] %v1043
  %1162 = vst [vmem:[%s2 + $0xc8] sm:$0xff] %v1046
  %1163 = vst [vmem:[%s2 + $0xd0] sm:$0xff] %v1051
  %1164 = vst [vmem:[%s2 + $0xd8] sm:$0xff] %v1054
  %1165 = vst [vmem:[%s2 + $0xe0] sm:$0xff] %v1059
  %1166 = vst [vmem:[%s2 + $0xe8] sm:$0xff] %v1062
  %1167 = vst [vmem:[%s2 + $0xf0] sm:$0xff] %v1067
  %1168 = vst [vmem:[%s2 + $0xf8] sm:$0xff] %v1070
  %1169 = vst [vmem:[%s2 + $0x100] sm:$0xff] %v1075
  %1170 = vst [vmem:[%s2 + $0x108] sm:$0xff] %v1078
  %1171 = vst [vmem:[%s2 + $0x110] sm:$0xff] %v1083
  %1172 = vst [vmem:[%s2 + $0x118] sm:$0xff] %v1086
  %1173 = vst [vmem:[%s2 + $0x120] sm:$0xff] %v1091
  %1174 = vst [vmem:[%s2 + $0x128] sm:$0xff] %v1094
  %1175 = vst [vmem:[%s2 + $0x130] sm:$0xff] %v1099
  %1176 = vst [vmem:[%s2 + $0x138] sm:$0xff] %v1102
  %1177 = vst [vmem:[%s2 + $0x140] sm:$0xff] %v1107
  %1178 = vst [vmem:[%s2 + $0x148] sm:$0xff] %v1110
  %1179 = vst [vmem:[%s2 + $0x150] sm:$0xff] %v1115
  %1180 = vst [vmem:[%s2 + $0x158] sm:$0xff] %v1118
  %1181 = vst [vmem:[%s2 + $0x160] sm:$0xff] %v1123
  %1182 = vst [vmem:[%s2 + $0x168] sm:$0xff] %v1126
  %1183 = vst [vmem:[%s2 + $0x170] sm:$0xff] %v1131
  %1184 = vst [vmem:[%s2 + $0x178] sm:$0xff] %v1134
  %v1185 = vadd.f32 %v947, %v950
  %v1186 = vadd.f32 %v1185, %v955
  %v1187 = vadd.f32 %v1186, %v958
  %v1188 = vadd.f32 %v1187, %v963
  %v1189 = vadd.f32 %v1188, %v966
  %v1190 = vadd.f32 %v1189, %v971
  %v1191 = vadd.f32 %v1190, %v974
  %v1192 = vadd.f32 %v1191, %v979
  %v1193 = vadd.f32 %v1192, %v982
  %v1194 = vadd.f32 %v1193, %v987
  %v1195 = vadd.f32 %v1194, %v990
  %v1196 = vadd.f32 %v1195, %v995
  %v1197 = vadd.f32 %v1196, %v998
  %v1198 = vadd.f32 %v1197, %v1003
  %v1199 = vadd.f32 %v1198, %v1006
  %v1200 = vadd.f32 %v1199, %v1011
  %v1201 = vadd.f32 %v1200, %v1014
  %v1202 = vadd.f32 %v1201, %v1019
  %v1203 = vadd.f32 %v1202, %v1022
  %v1204 = vadd.f32 %v1203, %v1027
  %v1205 = vadd.f32 %v1204, %v1030
  %v1206 = vadd.f32 %v1205, %v1035
  %v1207 = vadd.f32 %v1206, %v1038
  %v1208 = vadd.f32 %v1207, %v1043
  %v1209 = vadd.f32 %v1208, %v1046
  %v1210 = vadd.f32 %v1209, %v1051
  %v1211 = vadd.f32 %v1210, %v1054
  %v1212 = vadd.f32 %v1211, %v1059
  %v1213 = vadd.f32 %v1212, %v1062
  %v1214 = vadd.f32 %v1213, %v1067
  %v1215 = vadd.f32 %v1214, %v1070
  %v1216 = vadd.f32 %v1215, %v1075
  %v1217 = vadd.f32 %v1216, %v1078
  %v1218 = vadd.f32 %v1217, %v1083
  %v1219 = vadd.f32 %v1218, %v1086
  %v1220 = vadd.f32 %v1219, %v1091
  %v1221 = vadd.f32 %v1220, %v1094
  %v1222 = vadd.f32 %v1221, %v1099
  %v1223 = vadd.f32 %v1222, %v1102
  %v1224 = vadd.f32 %v1223, %v1107
  %v1225 = vadd.f32 %v1224, %v1110
  %v1226 = vadd.f32 %v1225, %v1115
  %v1227 = vadd.f32 %v1226, %v1118
  %v1228 = vadd.f32 %v1227, %v1123
  %v1229 = vadd.f32 %v1228, %v1126
  %v1230 = vadd.f32 %v1229, %v1131
  %v1231 = vadd.f32 %v1230, %v1134
  %v1232 = vrot.slane %v1231, 4
  %v1233 = vadd.f32 %v1231, %v1232
  %v1234 = vrot.slane %v1233, 2
  %v1235 = vadd.f32 %v1233, %v1234
  %v1236 = vrot.slane %v1235, 1
  %v1237 = vadd.f32 %v1235, %v1236
  %v1238 = vmul.f32 %v947, %v947
  %v1239 = vmul.f32 %v950, %v950
  %v1240 = vmul.f32 %v955, %v955
  %v1241 = vmul.f32 %v958, %v958
  %v1242 = vmul.f32 %v963, %v963
  %v1243 = vmul.f32 %v966, %v966
  %v1244 = vmul.f32 %v971, %v971
  %v1245 = vmul.f32 %v974, %v974
  %v1246 = vmul.f32 %v979, %v979
  %v1247 = vmul.f32 %v982, %v982
  %v1248 = vmul.f32 %v987, %v987
  %v1249 = vmul.f32 %v990, %v990
  %v1250 = vmul.f32 %v995, %v995
  %v1251 = vmul.f32 %v998, %v998
  %v1252 = vmul.f32 %v1003, %v1003
  %v1253 = vmul.f32 %v1006, %v1006
  %v1254 = vmul.f32 %v1011, %v1011
  %v1255 = vmul.f32 %v1014, %v1014
  %v1256 = vmul.f32 %v1019, %v1019
  %v1257 = vmul.f32 %v1022, %v1022
  %v1258 = vmul.f32 %v1027, %v1027
  %v1259 = vmul.f32 %v1030, %v1030
  %v1260 = vmul.f32 %v1035, %v1035
  %v1261 = vmul.f32 %v1038, %v1038
  %v1262 = vmul.f32 %v1043, %v1043
  %v1263 = vmul.f32 %v1046, %v1046
  %v1264 = vmul.f32 %v1051, %v1051
  %v1265 = vmul.f32 %v1054, %v1054
  %v1266 = vmul.f32 %v1059, %v1059
  %v1267 = vmul.f32 %v1062, %v1062
  %v1268 = vmul.f32 %v1067, %v1067
  %v1269 = vmul.f32 %v1070, %v1070
  %v1270 = vmul.f32 %v1075, %v1075
  %v1271 = vmul.f32 %v1078, %v1078
  %v1272 = vmul.f32 %v1083, %v1083
  %v1273 = vmul.f32 %v1086, %v1086
  %v1274 = vmul.f32 %v1091, %v1091
  %v1275 = vmul.f32 %v1094, %v1094
  %v1276 = vmul.f32 %v1099, %v1099
  %v1277 = vmul.f32 %v1102, %v1102
  %v1278 = vmul.f32 %v1107, %v1107
  %v1279 = vmul.f32 %v1110, %v1110
  %v1280 = vmul.f32 %v1115, %v1115
  %v1281 = vmul.f32 %v1118, %v1118
  %v1282 = vmul.f32 %v1123, %v1123
  %v1283 = vmul.f32 %v1126, %v1126
  %v1284 = vmul.f32 %v1131, %v1131
  %v1285 = vmul.f32 %v1134, %v1134
  %v1286 = vadd.f32 %v1238, %v1239
  %v1287 = vadd.f32 %v1286, %v1240
  %v1288 = vadd.f32 %v1287, %v1241
  %v1289 = vadd.f32 %v1288, %v1242
  %v1290 = vadd.f32 %v1289, %v1243
  %v1291 = vadd.f32 %v1290, %v1244
  %v1292 = vadd.f32 %v1291, %v1245
  %v1293 = vadd.f32 %v1292, %v1246
  %v1294 = vadd.f32 %v1293, %v1247
  %v1295 = vadd.f32 %v1294, %v1248
  %v1296 = vadd.f32 %v1295, %v1249
  %v1297 = vadd.f32 %v1296, %v1250
  %v1298 = vadd.f32 %v1297, %v1251
  %v1299 = vadd.f32 %v1298, %v1252
  %v1300 = vadd.f32 %v1299, %v1253
  %v1301 = vadd.f32 %v1300, %v1254
  %v1302 = vadd.f32 %v1301, %v1255
  %v1303 = vadd.f32 %v1302, %v1256
  %v1304 = vadd.f32 %v1303, %v1257
  %v1305 = vadd.f32 %v1304, %v1258
  %v1306 = vadd.f32 %v1305, %v1259
  %v1307 = vadd.f32 %v1306, %v1260
  %v1308 = vadd.f32 %v1307, %v1261
  %v1309 = vadd.f32 %v1308, %v1262
  %v1310 = vadd.f32 %v1309, %v1263
  %v1311 = vadd.f32 %v1310, %v1264
  %v1312 = vadd.f32 %v1311, %v1265
  %v1313 = vadd.f32 %v1312, %v1266
  %v1314 = vadd.f32 %v1313, %v1267
  %v1315 = vadd.f32 %v1314, %v1268
  %v1316 = vadd.f32 %v1315, %v1269
  %v1317 = vadd.f32 %v1316, %v1270
  %v1318 = vadd.f32 %v1317, %v1271
  %v1319 = vadd.f32 %v1318, %v1272
  %v1320 = vadd.f32 %v1319, %v1273
  %v1321 = vadd.f32 %v1320, %v1274
  %v1322 = vadd.f32 %v1321, %v1275
  %v1323 = vadd.f32 %v1322, %v1276
  %v1324 = vadd.f32 %v1323, %v1277
  %v1325 = vadd.f32 %v1324, %v1278
  %v1326 = vadd.f32 %v1325, %v1279
  %v1327 = vadd.f32 %v1326, %v1280
  %v1328 = vadd.f32 %v1327, %v1281
  %v1329 = vadd.f32 %v1328, %v1282
  %v1330 = vadd.f32 %v1329, %v1283
  %v1331 = vadd.f32 %v1330, %v1284
  %v1332 = vadd.f32 %v1331, %v1285
  %v1333 = vrot.slane %v1332, 4
  %v1334 = vadd.f32 %v1332, %v1333
  %v1335 = vrot.slane %v1334, 2
  %v1336 = vadd.f32 %v1334, %v1335
  %v1337 = vrot.slane %v1336, 1
  %v1338 = vadd.f32 %v1336, %v1337
  %1339 = vst [vmem:[%s3] sm:$0xff] %v1237
  %1340 = vst [vmem:[%s4] sm:$0xff] %v1338
  // Predicated region
  $region10: #{linking_forward.12} parent=0 // pred_check
    _
  $region11: #{linking_forward.12} parent=0 // pred_check_branch
    %1342 = sbr.rel (0) target = $region13
  $region12: #{linking_forward.12} parent=0 // pred_region
    _
  $region13: #{linking_forward.12} parent=0 // pred_fallthru
    _
  // Predicated region
  $region14: #{linking_forward.12} parent=0 // pred_check
    _
  $region15: #{linking_forward.12} parent=0 // pred_check_branch
    %1344 = sbr.rel (0) target = $region17
  $region16: #{linking_forward.12} parent=0 // pred_region
    _
  $region17: #{linking_forward.12} parent=0 // pred_fallthru
    _
  // Predicated region
  $region18: #{linking_forward.12} parent=0 // pred_check
    _
  $region19: #{linking_forward.12} parent=0 // pred_check_branch
    %1346 = sbr.rel (0) target = $region21
  $region20: #{linking_forward.12} parent=0 // pred_region
    _
  $region21: #{linking_forward.12} parent=0 // pred_fallthru
    _
  // Predicated region
  $region22: #{linking_forward.12} parent=0 // pred_check
    _
  $region23: #{linking_forward.12} parent=0 // pred_check_branch
    %1348 = sbr.rel (0) target = $region25
  $region24: #{linking_forward.12} parent=0 // pred_region
    _
  $region25: #{linking_forward.12} parent=0 // pred_fallthru
    _
  // Predicated region
  $region26: #{linking_forward.12} parent=0 // pred_check
    _
  $region27: #{linking_forward.12} parent=0 // pred_check_branch
    %1350 = sbr.rel (0) target = $region29
  $region28: #{linking_forward.12} parent=0 // pred_region
    _
  $region29: #{linking_forward.12} parent=0 // pred_fallthru
    _
  // Predicated region
  $region30: #{linking_forward.12} parent=0 // pred_check
    _
  $region31: #{linking_forward.12} parent=0 // pred_check_branch
    %1352 = sbr.rel (0) target = $region33
  $region32: #{linking_forward.12} parent=0 // pred_region
    _
  $region33: #{linking_forward.12} parent=0 // pred_fallthru
    _

</llo_original>
